<compile_context>
chip_gen: v7x
topology: tpu7x:2x2x1
jax: 0.10.0
libtpu: 0.0.40
codegen_flags: <defaults>
</compile_context>

<pallas_src>
import functools

import jax
import jax.numpy as jnp
from jax import lax
from jax.experimental import pallas as pl
from jax.experimental.pallas import tpu as pltpu

# ---------------- model dimensions (fixed by the module definition) ----------
TEXT_HIDDEN = 768      # bert-base hidden size
IMAGE_HIDDEN = 2048    # resnet50 pooled feature size
FUSION_DIM = 384
CLS_H1 = 192
CLS_H2 = 96
NUM_CLASSES = 4        # Config.NUM_CLASSES (not given) -> pick 4
LN_EPS = 1e-5
BN_EPS = 1e-5

# lane-dense padded classifier dims (zero padding => numerically exact)
CLS_H1_PAD = 256
CLS_H2_PAD = 128
OUT_PAD = 128


def _round_up(x, m):
    return (x + m - 1) // m * m


@functools.lru_cache(maxsize=None)
def _tiling_config():
    """Generation-aware (max_tile_rows, vmem_limit_bytes)."""
    try:
        cap = int(getattr(pltpu.get_tpu_info(), "vmem_capacity_bytes",
                          128 * 1024 * 1024))
    except Exception:
        cap = 64 * 1024 * 1024              # conservative (v7x-sized VMEM)
    if cap >= 96 * 1024 * 1024:             # v5e / v6e: 128 MiB physical VMEM
        return 1024, 96 * 1024 * 1024
    return 512, 48 * 1024 * 1024            # v7x: 64 MiB physical VMEM


def _normalize(x):
    """LayerNorm without affine (affine folded into the following Linear).
    Single-pass statistics: var = E[x^2] - mean^2 (clamped), all f32."""
    inv_n = 1.0 / x.shape[-1]
    mu = jnp.sum(x, axis=-1, keepdims=True) * inv_n
    ex2 = jnp.sum(x * x, axis=-1, keepdims=True) * inv_n
    var = jnp.maximum(ex2 - mu * mu, 0.0)
    return (x - mu) * lax.rsqrt(var + LN_EPS)


# ------------------------------ Pallas kernel --------------------------------
def _head_kernel(
    tf_ref, if_ref,
    tp_w, tp_b, ip_w, ip_b,
    c1t_w, c1i_w, c1_b,
    c2_w, c2_b,
    c3_w, c3_b,
    out_ref,
):
    bf16 = jnp.bfloat16
    f32 = jnp.float32

    # bf16 activations streamed from HBM; upcast to f32 for LayerNorm stats.
    tf = _normalize(tf_ref[...].astype(f32))
    imf = _normalize(if_ref[...].astype(f32))

    # text / image projections: Linear -> ReLU -> LayerNorm
    # (encoder-LN affine pre-folded into tp_w/ip_w/tp_b/ip_b; projection-LN
    #  affine pre-folded forward into classifier layer 1)
    tp = jnp.dot(tf.astype(bf16), tp_w[...], preferred_element_type=f32) + tp_b[...]
    tp = _normalize(jnp.maximum(tp, 0.0))

    ip = jnp.dot(imf.astype(bf16), ip_w[...], preferred_element_type=f32) + ip_b[...]
    ip = _normalize(jnp.maximum(ip, 0.0))

    # fusion + classifier layer 1: concat([tp, ip]) @ W == tp @ W_t + ip @ W_i
    # (BatchNorm1d(192) eval + projection-LN affines pre-folded)
    h = (jnp.dot(tp.astype(bf16), c1t_w[...], preferred_element_type=f32)
         + jnp.dot(ip.astype(bf16), c1i_w[...], preferred_element_type=f32)
         + c1_b[...])
    h = jnp.maximum(h, 0.0)

    # classifier layer 2 (BN folded) + ReLU
    h = jnp.dot(h.astype(bf16), c2_w[...], preferred_element_type=f32) + c2_b[...]
    h = jnp.maximum(h, 0.0)

    # final logits (lane-dense padded output; extra columns are exact zeros)
    out_ref[...] = (
        jnp.dot(h.astype(bf16), c3_w[...], preferred_element_type=f32) + c3_b[...]
    )


# ------------------------------ wrapper ---------------------------------------
def multimodal_head(text_features, image_features, kparams):
    """Fused head. Inputs: [B, 768] and [B, 2048] f32. Returns [B, NUM_CLASSES]."""
    B = text_features.shape[0]
    max_tb, vmem_limit = _tiling_config()

    # >= 2 (even) grid steps so "parallel" can shard across v7x's two TCs;
    # bf16 inputs require row tiles that are multiples of 16 (sublane packing).
    n_tiles = max(2, pl.cdiv(B, max_tb))
    n_tiles += n_tiles % 2
    tb = _round_up(pl.cdiv(B, n_tiles), 16)
    b_pad = tb * n_tiles

    # stream activations as bf16 (halves HBM input traffic); cast fuses w/ pad
    tfe = text_features.astype(jnp.bfloat16)
    ife = image_features.astype(jnp.bfloat16)
    if b_pad != B:
        pad = b_pad - B
        tfe = jnp.pad(tfe, ((0, pad), (0, 0)))
        ife = jnp.pad(ife, ((0, pad), (0, 0)))

    weight_args = (
        kparams["tp_w"], kparams["tp_b"], kparams["ip_w"], kparams["ip_b"],
        kparams["c1t_w"], kparams["c1i_w"], kparams["c1_b"],
        kparams["c2_w"], kparams["c2_b"],
        kparams["c3_w"], kparams["c3_b"],
    )

    # weights: full-array block, constant index map -> VMEM-resident across grid
    def const_spec(a):
        return pl.BlockSpec(a.shape, lambda i: (0, 0))

    out = pl.pallas_call(
        _head_kernel,
        out_shape=jax.ShapeDtypeStruct((b_pad, OUT_PAD), jnp.float32),
        grid=(n_tiles,),
        in_specs=[
            pl.BlockSpec((tb, TEXT_HIDDEN), lambda i: (i, 0)),
            pl.BlockSpec((tb, IMAGE_HIDDEN), lambda i: (i, 0)),
        ] + [const_spec(a) for a in weight_args],
        out_specs=pl.BlockSpec((tb, OUT_PAD), lambda i: (i, 0)),
        compiler_params=pltpu.CompilerParams(
            dimension_semantics=("parallel",),
            vmem_limit_bytes=vmem_limit,
        ),
    )(tfe, ife, *weight_args)

    return out[:B, :NUM_CLASSES]


# ------------------- parameter init (deterministic, synthetic) ---------------
def init_params(key):
    """Raw parameters mirroring the PyTorch module layout (all f32)."""
    ks = jax.random.split(key, 8)

    def lin(k, fan_in, fan_out):
        scale = 1.0 / jnp.sqrt(jnp.float32(fan_in))
        w = jax.random.uniform(k, (fan_in, fan_out), jnp.float32, -scale, scale)
        b = jnp.zeros((1, fan_out), jnp.float32)
        return w, b

    tp_w, tp_b = lin(ks[0], TEXT_HIDDEN, FUSION_DIM)
    ip_w, ip_b = lin(ks[1], IMAGE_HIDDEN, FUSION_DIM)
    c1_w, c1_b = lin(ks[2], 2 * FUSION_DIM, CLS_H1)
    c2_w, c2_b = lin(ks[3], CLS_H1, CLS_H2)
    c3_w, c3_b = lin(ks[4], CLS_H2, NUM_CLASSES)

    ones = lambda d: jnp.ones((1, d), jnp.float32)
    zeros = lambda d: jnp.zeros((1, d), jnp.float32)

    return dict(
        # encoder layernorms
        lnt_g=ones(TEXT_HIDDEN), lnt_b=zeros(TEXT_HIDDEN),
        lni_g=ones(IMAGE_HIDDEN), lni_b=zeros(IMAGE_HIDDEN),
        # projections
        tp_w=tp_w, tp_b=tp_b, tp_g=ones(FUSION_DIM), tp_beta=zeros(FUSION_DIM),
        ip_w=ip_w, ip_b=ip_b, ip_g=ones(FUSION_DIM), ip_beta=zeros(FUSION_DIM),
        # classifier (+ fresh-init BatchNorm1d running stats / affine)
        c1_w=c1_w, c1_b=c1_b,
        bn1_g=ones(CLS_H1), bn1_b=zeros(CLS_H1),
        bn1_m=zeros(CLS_H1), bn1_v=ones(CLS_H1),
        c2_w=c2_w, c2_b=c2_b,
        bn2_g=ones(CLS_H2), bn2_b=zeros(CLS_H2),
        bn2_m=zeros(CLS_H2), bn2_v=ones(CLS_H2),
        c3_w=c3_w, c3_b=c3_b,
    )


def prepare_kernel_params(p):
    """Fold BN(eval) and all LayerNorm affines into the adjacent Linears,
    split c1 (drops the concat), pad classifier dims to lane-dense multiples
    of 128, and cast matmul weights to bf16."""
    def fold_bn(w, b, g, beta, m, v):
        scale = g * lax.rsqrt(v + BN_EPS)            # [1, D_out]
        return w * scale, (b - m) * scale + beta

    def fold_ln_in(g, beta, w, b):
        # (x_hat*g + beta) @ W + b == x_hat @ (diag(g) W) + (beta @ W + b)
        return w * g.reshape(-1, 1), beta @ w + b

    # encoder LayerNorm affines -> projection Linears
    tp_w, tp_b = fold_ln_in(p["lnt_g"], p["lnt_b"], p["tp_w"], p["tp_b"])
    ip_w, ip_b = fold_ln_in(p["lni_g"], p["lni_b"], p["ip_w"], p["ip_b"])

    # BatchNorm1d (eval) -> classifier Linears
    c1_w, c1_b = fold_bn(p["c1_w"], p["c1_b"],
                         p["bn1_g"], p["bn1_b"], p["bn1_m"], p["bn1_v"])
    c2_w, c2_b = fold_bn(p["c2_w"], p["c2_b"],
                         p["bn2_g"], p["bn2_b"], p["bn2_m"], p["bn2_v"])

    # split c1 (removes the concat) and fold the projection-LN affines forward
    c1t_w = c1_w[:FUSION_DIM] * p["tp_g"].reshape(-1, 1)   # [384, 192]
    c1i_w = c1_w[FUSION_DIM:] * p["ip_g"].reshape(-1, 1)   # [384, 192]
    c1_b = p["tp_beta"] @ c1_w[:FUSION_DIM] + p["ip_beta"] @ c1_w[FUSION_DIM:] + c1_b

    def pad2(a, rows, cols):
        return jnp.pad(a, ((0, rows - a.shape[0]), (0, cols - a.shape[1])))

    c1t_w = pad2(c1t_w, FUSION_DIM, CLS_H1_PAD)
    c1i_w = pad2(c1i_w, FUSION_DIM, CLS_H1_PAD)
    c1_b = pad2(c1_b, 1, CLS_H1_PAD)
    c2_w = pad2(c2_w, CLS_H1_PAD, CLS_H2_PAD)
    c2_b = pad2(c2_b, 1, CLS_H2_PAD)
    c3_w = pad2(p["c3_w"], CLS_H2_PAD, OUT_PAD)
    c3_b = pad2(p["c3_b"], 1, OUT_PAD)

    bf16 = lambda w: w.astype(jnp.bfloat16)
    return dict(
        tp_w=bf16(tp_w), tp_b=tp_b, ip_w=bf16(ip_w), ip_b=ip_b,
        c1t_w=bf16(c1t_w), c1i_w=bf16(c1i_w), c1_b=c1_b,
        c2_w=bf16(c2_w), c2_b=c2_b,
        c3_w=bf16(c3_w), c3_b=c3_b,
    )


# ------------------- pure-JAX reference (f32, unfolded) ----------------------
def reference_head(text_features, image_features, p):
    def ln(x, g, b):
        mu = x.mean(-1, keepdims=True)
        var = ((x - mu) ** 2).mean(-1, keepdims=True)
        return (x - mu) / jnp.sqrt(var + LN_EPS) * g + b

    def bn(x, g, b, m, v):
        return (x - m) / jnp.sqrt(v + BN_EPS) * g + b

    tf = ln(text_features, p["lnt_g"], p["lnt_b"])
    imf = ln(image_features, p["lni_g"], p["lni_b"])
    tp = ln(jnp.maximum(tf @ p["tp_w"] + p["tp_b"], 0.0), p["tp_g"], p["tp_beta"])
    ip = ln(jnp.maximum(imf @ p["ip_w"] + p["ip_b"], 0.0), p["ip_g"], p["ip_beta"])
    combined = jnp.concatenate([tp, ip], axis=-1)
    h = jnp.maximum(bn(combined @ p["c1_w"] + p["c1_b"],
                       p["bn1_g"], p["bn1_b"], p["bn1_m"], p["bn1_v"]), 0.0)
    h = jnp.maximum(bn(h @ p["c2_w"] + p["c2_b"],
                       p["bn2_g"], p["bn2_b"], p["bn2_m"], p["bn2_v"]), 0.0)
    return h @ p["c3_w"] + p["c3_b"]


# ---------------- stand-in backbones (plain-JAX glue, deterministic) ---------
def standin_text_encoder(input_ids, attention_mask, emb_table):
    """[B, S] int32 -> [B, 768] pooled output (stand-in for BERT pooler)."""
    # TODO(synk): real BERT backbone not translated; deterministic stand-in.
    emb = emb_table[input_ids]                                   # [B, S, 768]
    mask = attention_mask.astype(jnp.float32)[..., None]         # [B, S, 1]
    pooled = (emb * mask).sum(1) / jnp.maximum(mask.sum(1), 1.0)
    return jnp.tanh(pooled)


def standin_image_encoder(images, proj):
    """NCHW [B, 3, H, W] -> [B, 2048] (stand-in for ResNet50 avgpool feats)."""
    # TODO(synk): real ResNet50 backbone not translated; deterministic stand-in.
    B = images.shape[0]
    flat = images.reshape(B, -1)                                 # [B, 3*H*W]
    return jnp.maximum(flat @ proj, 0.0)                         # [B, 2048]


if __name__ == "__main__":
    key = jax.random.PRNGKey(0)
    k_param, k_ids, k_img, k_emb, k_proj = jax.random.split(key, 5)

    B, S, H, W = 8, 12, 16, 16
    VOCAB = 1000

    raw_params = init_params(k_param)
    kparams = prepare_kernel_params(raw_params)

    input_ids = jax.random.randint(k_ids, (B, S), 0, VOCAB, dtype=jnp.int32)
    attention_mask = jnp.ones((B, S), jnp.int32)
    images = jax.random.normal(k_img, (B, 3, H, W), jnp.float32)   # NCHW

    emb_table = jax.random.normal(k_emb, (VOCAB, TEXT_HIDDEN), jnp.float32) * 0.02
    img_proj = jax.random.normal(k_proj, (3 * H * W, IMAGE_HIDDEN), jnp.float32) * 0.05

    text_features = standin_text_encoder(input_ids, attention_mask, emb_table)
    image_features = standin_image_encoder(images, img_proj)

    logits = multimodal_head(text_features, image_features, kparams)
    jax.block_until_ready(logits)

    assert logits.shape == (B, NUM_CLASSES), logits.shape
    assert jnp.all(jnp.isfinite(logits))

    # reference check (f32 everywhere, unfolded params; loose tolerance for
    # bf16 input/weight quantization in the kernel)
    ref = reference_head(text_features, image_features, raw_params)
    assert jnp.allclose(logits, ref, atol=1e-1, rtol=1e-1), (
        float(jnp.max(jnp.abs(logits - ref))))

    print("KERNEL_OK")
</pallas_src>

<mosaic_0001>
module attributes {stable_mosaic.version = 11 : i64} {
  func.func @_head_kernel(%arg0: i32, %arg1: memref<16x768xbf16, #tpu.memory_space<vmem>>, %arg2: memref<16x2048xbf16, #tpu.memory_space<vmem>>, %arg3: memref<768x384xbf16, #tpu.memory_space<vmem>>, %arg4: memref<1x384xf32, #tpu.memory_space<vmem>>, %arg5: memref<2048x384xbf16, #tpu.memory_space<vmem>>, %arg6: memref<1x384xf32, #tpu.memory_space<vmem>>, %arg7: memref<384x256xbf16, #tpu.memory_space<vmem>>, %arg8: memref<384x256xbf16, #tpu.memory_space<vmem>>, %arg9: memref<1x256xf32, #tpu.memory_space<vmem>>, %arg10: memref<256x128xbf16, #tpu.memory_space<vmem>>, %arg11: memref<1x128xf32, #tpu.memory_space<vmem>>, %arg12: memref<128x128xbf16, #tpu.memory_space<vmem>>, %arg13: memref<1x128xf32, #tpu.memory_space<vmem>>, %arg14: memref<16x128xf32, #tpu.memory_space<vmem>>) attributes {dimension_semantics = [#tpu.dimension_semantics<parallel>], iteration_bounds = array<i64: 2>, scalar_prefetch = 0 : i64, scratch_operands = 0 : i64, tpu.core_type = #tpu.core_type<tc>, window_params = [{transform_indices = @transform_0, window_bounds = array<i64: 16, 768>}, {transform_indices = @transform_1, window_bounds = array<i64: 16, 2048>}, {pipeline_mode = #tpu.pipeline_mode<synchronous>, transform_indices = @transform_2, window_bounds = array<i64: 768, 384>}, {pipeline_mode = #tpu.pipeline_mode<synchronous>, transform_indices = @transform_3, window_bounds = array<i64: 1, 384>}, {pipeline_mode = #tpu.pipeline_mode<synchronous>, transform_indices = @transform_4, window_bounds = array<i64: 2048, 384>}, {pipeline_mode = #tpu.pipeline_mode<synchronous>, transform_indices = @transform_5, window_bounds = array<i64: 1, 384>}, {pipeline_mode = #tpu.pipeline_mode<synchronous>, transform_indices = @transform_6, window_bounds = array<i64: 384, 256>}, {pipeline_mode = #tpu.pipeline_mode<synchronous>, transform_indices = @transform_7, window_bounds = array<i64: 384, 256>}, {pipeline_mode = #tpu.pipeline_mode<synchronous>, transform_indices = @transform_8, window_bounds = array<i64: 1, 256>}, {pipeline_mode = #tpu.pipeline_mode<synchronous>, transform_indices = @transform_9, window_bounds = array<i64: 256, 128>}, {pipeline_mode = #tpu.pipeline_mode<synchronous>, transform_indices = @transform_10, window_bounds = array<i64: 1, 128>}, {pipeline_mode = #tpu.pipeline_mode<synchronous>, transform_indices = @transform_11, window_bounds = array<i64: 128, 128>}, {pipeline_mode = #tpu.pipeline_mode<synchronous>, transform_indices = @transform_12, window_bounds = array<i64: 1, 128>}, {transform_indices = @transform_13, window_bounds = array<i64: 16, 128>}]} {
    %c0 = arith.constant 0 : index
    %c0_0 = arith.constant 0 : index
    %0 = vector.load %arg1[%c0, %c0_0] : memref<16x768xbf16, #tpu.memory_space<vmem>>, vector<16x768xbf16>
    %1 = arith.extf %0 : vector<16x768xbf16> to vector<16x768xf32>
    %cst = arith.constant dense<0.000000e+00> : vector<16xf32>
    %2 = vector.multi_reduction <add>, %1, %cst [1] : vector<16x768xf32> to vector<16xf32>
    %3 = vector.shape_cast %2 : vector<16xf32> to vector<16x1xf32>
    %cst_1 = arith.constant 0.00130208337 : f32
    %4 = vector.broadcast %cst_1 : f32 to vector<16x1xf32>
    %5 = arith.mulf %3, %4 : vector<16x1xf32>
    %6 = arith.mulf %1, %1 : vector<16x768xf32>
    %cst_2 = arith.constant dense<0.000000e+00> : vector<16xf32>
    %7 = vector.multi_reduction <add>, %6, %cst_2 [1] : vector<16x768xf32> to vector<16xf32>
    %8 = vector.shape_cast %7 : vector<16xf32> to vector<16x1xf32>
    %cst_3 = arith.constant 0.00130208337 : f32
    %9 = vector.broadcast %cst_3 : f32 to vector<16x1xf32>
    %10 = arith.mulf %8, %9 : vector<16x1xf32>
    %11 = arith.mulf %5, %5 : vector<16x1xf32>
    %12 = arith.subf %10, %11 : vector<16x1xf32>
    %cst_4 = arith.constant 0.000000e+00 : f32
    %13 = vector.broadcast %cst_4 : f32 to vector<16x1xf32>
    %14 = arith.maximumf %12, %13 : vector<16x1xf32>
    %15 = vector.broadcast %5 : vector<16x1xf32> to vector<16x768xf32>
    %16 = arith.subf %1, %15 : vector<16x768xf32>
    %cst_5 = arith.constant 9.99999974E-6 : f32
    %17 = vector.broadcast %cst_5 : f32 to vector<16x1xf32>
    %18 = arith.addf %14, %17 : vector<16x1xf32>
    %19 = math.rsqrt %18 : vector<16x1xf32>
    %20 = vector.broadcast %19 : vector<16x1xf32> to vector<16x768xf32>
    %21 = arith.mulf %16, %20 : vector<16x768xf32>
    %c0_6 = arith.constant 0 : index
    %c0_7 = arith.constant 0 : index
    %22 = vector.load %arg2[%c0_6, %c0_7] : memref<16x2048xbf16, #tpu.memory_space<vmem>>, vector<16x2048xbf16>
    %23 = arith.extf %22 : vector<16x2048xbf16> to vector<16x2048xf32>
    %cst_8 = arith.constant dense<0.000000e+00> : vector<16xf32>
    %24 = vector.multi_reduction <add>, %23, %cst_8 [1] : vector<16x2048xf32> to vector<16xf32>
    %25 = vector.shape_cast %24 : vector<16xf32> to vector<16x1xf32>
    %cst_9 = arith.constant 4.8828125E-4 : f32
    %26 = vector.broadcast %cst_9 : f32 to vector<16x1xf32>
    %27 = arith.mulf %25, %26 : vector<16x1xf32>
    %28 = arith.mulf %23, %23 : vector<16x2048xf32>
    %cst_10 = arith.constant dense<0.000000e+00> : vector<16xf32>
    %29 = vector.multi_reduction <add>, %28, %cst_10 [1] : vector<16x2048xf32> to vector<16xf32>
    %30 = vector.shape_cast %29 : vector<16xf32> to vector<16x1xf32>
    %cst_11 = arith.constant 4.8828125E-4 : f32
    %31 = vector.broadcast %cst_11 : f32 to vector<16x1xf32>
    %32 = arith.mulf %30, %31 : vector<16x1xf32>
    %33 = arith.mulf %27, %27 : vector<16x1xf32>
    %34 = arith.subf %32, %33 : vector<16x1xf32>
    %cst_12 = arith.constant 0.000000e+00 : f32
    %35 = vector.broadcast %cst_12 : f32 to vector<16x1xf32>
    %36 = arith.maximumf %34, %35 : vector<16x1xf32>
    %37 = vector.broadcast %27 : vector<16x1xf32> to vector<16x2048xf32>
    %38 = arith.subf %23, %37 : vector<16x2048xf32>
    %cst_13 = arith.constant 9.99999974E-6 : f32
    %39 = vector.broadcast %cst_13 : f32 to vector<16x1xf32>
    %40 = arith.addf %36, %39 : vector<16x1xf32>
    %41 = math.rsqrt %40 : vector<16x1xf32>
    %42 = vector.broadcast %41 : vector<16x1xf32> to vector<16x2048xf32>
    %43 = arith.mulf %38, %42 : vector<16x2048xf32>
    %44 = arith.truncf %21 : vector<16x768xf32> to vector<16x768xbf16>
    %c0_14 = arith.constant 0 : index
    %c0_15 = arith.constant 0 : index
    %45 = vector.load %arg3[%c0_14, %c0_15] : memref<768x384xbf16, #tpu.memory_space<vmem>>, vector<768x384xbf16>
    %cst_16 = arith.constant dense<0.000000e+00> : vector<16x384xf32>
    %46 = tpu.matmul %44, %45, %cst_16 {dimension_numbers = #tpu.dot_dimension_numbers<[1], [0], [0], [1], [0, 0, 1, 1], [], []>} : vector<16x768xbf16>, vector<768x384xbf16>, vector<16x384xf32> -> vector<16x384xf32>
    %c0_17 = arith.constant 0 : index
    %c0_18 = arith.constant 0 : index
    %47 = vector.load %arg4[%c0_17, %c0_18] : memref<1x384xf32, #tpu.memory_space<vmem>>, vector<1x384xf32>
    %48 = vector.broadcast %47 : vector<1x384xf32> to vector<16x384xf32>
    %49 = arith.addf %46, %48 : vector<16x384xf32>
    %cst_19 = arith.constant 0.000000e+00 : f32
    %50 = vector.broadcast %cst_19 : f32 to vector<16x384xf32>
    %51 = arith.maximumf %49, %50 : vector<16x384xf32>
    %cst_20 = arith.constant dense<0.000000e+00> : vector<16xf32>
    %52 = vector.multi_reduction <add>, %51, %cst_20 [1] : vector<16x384xf32> to vector<16xf32>
    %53 = vector.shape_cast %52 : vector<16xf32> to vector<16x1xf32>
    %cst_21 = arith.constant 0.00260416674 : f32
    %54 = vector.broadcast %cst_21 : f32 to vector<16x1xf32>
    %55 = arith.mulf %53, %54 : vector<16x1xf32>
    %56 = arith.mulf %51, %51 : vector<16x384xf32>
    %cst_22 = arith.constant dense<0.000000e+00> : vector<16xf32>
    %57 = vector.multi_reduction <add>, %56, %cst_22 [1] : vector<16x384xf32> to vector<16xf32>
    %58 = vector.shape_cast %57 : vector<16xf32> to vector<16x1xf32>
    %cst_23 = arith.constant 0.00260416674 : f32
    %59 = vector.broadcast %cst_23 : f32 to vector<16x1xf32>
    %60 = arith.mulf %58, %59 : vector<16x1xf32>
    %61 = arith.mulf %55, %55 : vector<16x1xf32>
    %62 = arith.subf %60, %61 : vector<16x1xf32>
    %cst_24 = arith.constant 0.000000e+00 : f32
    %63 = vector.broadcast %cst_24 : f32 to vector<16x1xf32>
    %64 = arith.maximumf %62, %63 : vector<16x1xf32>
    %65 = vector.broadcast %55 : vector<16x1xf32> to vector<16x384xf32>
    %66 = arith.subf %51, %65 : vector<16x384xf32>
    %cst_25 = arith.constant 9.99999974E-6 : f32
    %67 = vector.broadcast %cst_25 : f32 to vector<16x1xf32>
    %68 = arith.addf %64, %67 : vector<16x1xf32>
    %69 = math.rsqrt %68 : vector<16x1xf32>
    %70 = vector.broadcast %69 : vector<16x1xf32> to vector<16x384xf32>
    %71 = arith.mulf %66, %70 : vector<16x384xf32>
    %72 = arith.truncf %43 : vector<16x2048xf32> to vector<16x2048xbf16>
    %c0_26 = arith.constant 0 : index
    %c0_27 = arith.constant 0 : index
    %73 = vector.load %arg5[%c0_26, %c0_27] : memref<2048x384xbf16, #tpu.memory_space<vmem>>, vector<2048x384xbf16>
    %cst_28 = arith.constant dense<0.000000e+00> : vector<16x384xf32>
    %74 = tpu.matmul %72, %73, %cst_28 {dimension_numbers = #tpu.dot_dimension_numbers<[1], [0], [0], [1], [0, 0, 1, 1], [], []>} : vector<16x2048xbf16>, vector<2048x384xbf16>, vector<16x384xf32> -> vector<16x384xf32>
    %c0_29 = arith.constant 0 : index
    %c0_30 = arith.constant 0 : index
    %75 = vector.load %arg6[%c0_29, %c0_30] : memref<1x384xf32, #tpu.memory_space<vmem>>, vector<1x384xf32>
    %76 = vector.broadcast %75 : vector<1x384xf32> to vector<16x384xf32>
    %77 = arith.addf %74, %76 : vector<16x384xf32>
    %cst_31 = arith.constant 0.000000e+00 : f32
    %78 = vector.broadcast %cst_31 : f32 to vector<16x384xf32>
    %79 = arith.maximumf %77, %78 : vector<16x384xf32>
    %cst_32 = arith.constant dense<0.000000e+00> : vector<16xf32>
    %80 = vector.multi_reduction <add>, %79, %cst_32 [1] : vector<16x384xf32> to vector<16xf32>
    %81 = vector.shape_cast %80 : vector<16xf32> to vector<16x1xf32>
    %cst_33 = arith.constant 0.00260416674 : f32
    %82 = vector.broadcast %cst_33 : f32 to vector<16x1xf32>
    %83 = arith.mulf %81, %82 : vector<16x1xf32>
    %84 = arith.mulf %79, %79 : vector<16x384xf32>
    %cst_34 = arith.constant dense<0.000000e+00> : vector<16xf32>
    %85 = vector.multi_reduction <add>, %84, %cst_34 [1] : vector<16x384xf32> to vector<16xf32>
    %86 = vector.shape_cast %85 : vector<16xf32> to vector<16x1xf32>
    %cst_35 = arith.constant 0.00260416674 : f32
    %87 = vector.broadcast %cst_35 : f32 to vector<16x1xf32>
    %88 = arith.mulf %86, %87 : vector<16x1xf32>
    %89 = arith.mulf %83, %83 : vector<16x1xf32>
    %90 = arith.subf %88, %89 : vector<16x1xf32>
    %cst_36 = arith.constant 0.000000e+00 : f32
    %91 = vector.broadcast %cst_36 : f32 to vector<16x1xf32>
    %92 = arith.maximumf %90, %91 : vector<16x1xf32>
    %93 = vector.broadcast %83 : vector<16x1xf32> to vector<16x384xf32>
    %94 = arith.subf %79, %93 : vector<16x384xf32>
    %cst_37 = arith.constant 9.99999974E-6 : f32
    %95 = vector.broadcast %cst_37 : f32 to vector<16x1xf32>
    %96 = arith.addf %92, %95 : vector<16x1xf32>
    %97 = math.rsqrt %96 : vector<16x1xf32>
    %98 = vector.broadcast %97 : vector<16x1xf32> to vector<16x384xf32>
    %99 = arith.mulf %94, %98 : vector<16x384xf32>
    %100 = arith.truncf %71 : vector<16x384xf32> to vector<16x384xbf16>
    %c0_38 = arith.constant 0 : index
    %c0_39 = arith.constant 0 : index
    %101 = vector.load %arg7[%c0_38, %c0_39] : memref<384x256xbf16, #tpu.memory_space<vmem>>, vector<384x256xbf16>
    %cst_40 = arith.constant dense<0.000000e+00> : vector<16x256xf32>
    %102 = tpu.matmul %100, %101, %cst_40 {dimension_numbers = #tpu.dot_dimension_numbers<[1], [0], [0], [1], [0, 0, 1, 1], [], []>} : vector<16x384xbf16>, vector<384x256xbf16>, vector<16x256xf32> -> vector<16x256xf32>
    %103 = arith.truncf %99 : vector<16x384xf32> to vector<16x384xbf16>
    %c0_41 = arith.constant 0 : index
    %c0_42 = arith.constant 0 : index
    %104 = vector.load %arg8[%c0_41, %c0_42] : memref<384x256xbf16, #tpu.memory_space<vmem>>, vector<384x256xbf16>
    %cst_43 = arith.constant dense<0.000000e+00> : vector<16x256xf32>
    %105 = tpu.matmul %103, %104, %cst_43 {dimension_numbers = #tpu.dot_dimension_numbers<[1], [0], [0], [1], [0, 0, 1, 1], [], []>} : vector<16x384xbf16>, vector<384x256xbf16>, vector<16x256xf32> -> vector<16x256xf32>
    %106 = arith.addf %102, %105 : vector<16x256xf32>
    %c0_44 = arith.constant 0 : index
    %c0_45 = arith.constant 0 : index
    %107 = vector.load %arg9[%c0_44, %c0_45] : memref<1x256xf32, #tpu.memory_space<vmem>>, vector<1x256xf32>
    %108 = vector.broadcast %107 : vector<1x256xf32> to vector<16x256xf32>
    %109 = arith.addf %106, %108 : vector<16x256xf32>
    %cst_46 = arith.constant 0.000000e+00 : f32
    %110 = vector.broadcast %cst_46 : f32 to vector<16x256xf32>
    %111 = arith.maximumf %109, %110 : vector<16x256xf32>
    %112 = arith.truncf %111 : vector<16x256xf32> to vector<16x256xbf16>
    %c0_47 = arith.constant 0 : index
    %c0_48 = arith.constant 0 : index
    %113 = vector.load %arg10[%c0_47, %c0_48] : memref<256x128xbf16, #tpu.memory_space<vmem>>, vector<256x128xbf16>
    %cst_49 = arith.constant dense<0.000000e+00> : vector<16x128xf32>
    %114 = tpu.matmul %112, %113, %cst_49 {dimension_numbers = #tpu.dot_dimension_numbers<[1], [0], [0], [1], [0, 0, 1, 1], [], []>} : vector<16x256xbf16>, vector<256x128xbf16>, vector<16x128xf32> -> vector<16x128xf32>
    %c0_50 = arith.constant 0 : index
    %c0_51 = arith.constant 0 : index
    %115 = vector.load %arg11[%c0_50, %c0_51] : memref<1x128xf32, #tpu.memory_space<vmem>>, vector<1x128xf32>
    %116 = vector.broadcast %115 : vector<1x128xf32> to vector<16x128xf32>
    %117 = arith.addf %114, %116 : vector<16x128xf32>
    %cst_52 = arith.constant 0.000000e+00 : f32
    %118 = vector.broadcast %cst_52 : f32 to vector<16x128xf32>
    %119 = arith.maximumf %117, %118 : vector<16x128xf32>
    %120 = arith.truncf %119 : vector<16x128xf32> to vector<16x128xbf16>
    %c0_53 = arith.constant 0 : index
    %c0_54 = arith.constant 0 : index
    %121 = vector.load %arg12[%c0_53, %c0_54] : memref<128x128xbf16, #tpu.memory_space<vmem>>, vector<128x128xbf16>
    %cst_55 = arith.constant dense<0.000000e+00> : vector<16x128xf32>
    %122 = tpu.matmul %120, %121, %cst_55 {dimension_numbers = #tpu.dot_dimension_numbers<[1], [0], [0], [1], [0, 0, 1, 1], [], []>} : vector<16x128xbf16>, vector<128x128xbf16>, vector<16x128xf32> -> vector<16x128xf32>
    %c0_56 = arith.constant 0 : index
    %c0_57 = arith.constant 0 : index
    %123 = vector.load %arg13[%c0_56, %c0_57] : memref<1x128xf32, #tpu.memory_space<vmem>>, vector<1x128xf32>
    %124 = vector.broadcast %123 : vector<1x128xf32> to vector<16x128xf32>
    %125 = arith.addf %122, %124 : vector<16x128xf32>
    %c0_58 = arith.constant 0 : index
    %c0_59 = arith.constant 0 : index
    %126 = vector.load %arg14[%c0_58, %c0_59] : memref<16x128xf32, #tpu.memory_space<vmem>>, vector<16x128xf32>
    tpu.vector_store %arg14[%c0_58, %c0_59], %125 {strides = array<i32>} : memref<16x128xf32, #tpu.memory_space<vmem>>, vector<16x128xf32>,
    return
  }
  func.func @transform_0(%arg0: i32) -> (i32, i32) {
    %c0_i32 = arith.constant 0 : i32
    %c0_i32_0 = arith.constant 0 : i32
    return %arg0, %c0_i32 : i32, i32
  }
  func.func @transform_1(%arg0: i32) -> (i32, i32) {
    %c0_i32 = arith.constant 0 : i32
    %c0_i32_0 = arith.constant 0 : i32
    return %arg0, %c0_i32 : i32, i32
  }
  func.func @transform_2(%arg0: i32) -> (i32, i32) {
    %c0_i32 = arith.constant 0 : i32
    %c0_i32_0 = arith.constant 0 : i32
    %c0_i32_1 = arith.constant 0 : i32
    return %c0_i32, %c0_i32_0 : i32, i32
  }
  func.func @transform_3(%arg0: i32) -> (i32, i32) {
    %c0_i32 = arith.constant 0 : i32
    %c0_i32_0 = arith.constant 0 : i32
    %c0_i32_1 = arith.constant 0 : i32
    return %c0_i32, %c0_i32_0 : i32, i32
  }
  func.func @transform_4(%arg0: i32) -> (i32, i32) {
    %c0_i32 = arith.constant 0 : i32
    %c0_i32_0 = arith.constant 0 : i32
    %c0_i32_1 = arith.constant 0 : i32
    return %c0_i32, %c0_i32_0 : i32, i32
  }
  func.func @transform_5(%arg0: i32) -> (i32, i32) {
    %c0_i32 = arith.constant 0 : i32
    %c0_i32_0 = arith.constant 0 : i32
    %c0_i32_1 = arith.constant 0 : i32
    return %c0_i32, %c0_i32_0 : i32, i32
  }
  func.func @transform_6(%arg0: i32) -> (i32, i32) {
    %c0_i32 = arith.constant 0 : i32
    %c0_i32_0 = arith.constant 0 : i32
    %c0_i32_1 = arith.constant 0 : i32
    return %c0_i32, %c0_i32_0 : i32, i32
  }
  func.func @transform_7(%arg0: i32) -> (i32, i32) {
    %c0_i32 = arith.constant 0 : i32
    %c0_i32_0 = arith.constant 0 : i32
    %c0_i32_1 = arith.constant 0 : i32
    return %c0_i32, %c0_i32_0 : i32, i32
  }
  func.func @transform_8(%arg0: i32) -> (i32, i32) {
    %c0_i32 = arith.constant 0 : i32
    %c0_i32_0 = arith.constant 0 : i32
    %c0_i32_1 = arith.constant 0 : i32
    return %c0_i32, %c0_i32_0 : i32, i32
  }
  func.func @transform_9(%arg0: i32) -> (i32, i32) {
    %c0_i32 = arith.constant 0 : i32
    %c0_i32_0 = arith.constant 0 : i32
    %c0_i32_1 = arith.constant 0 : i32
    return %c0_i32, %c0_i32_0 : i32, i32
  }
  func.func @transform_10(%arg0: i32) -> (i32, i32) {
    %c0_i32 = arith.constant 0 : i32
    %c0_i32_0 = arith.constant 0 : i32
    %c0_i32_1 = arith.constant 0 : i32
    return %c0_i32, %c0_i32_0 : i32, i32
  }
  func.func @transform_11(%arg0: i32) -> (i32, i32) {
    %c0_i32 = arith.constant 0 : i32
    %c0_i32_0 = arith.constant 0 : i32
    %c0_i32_1 = arith.constant 0 : i32
    return %c0_i32, %c0_i32_0 : i32, i32
  }
  func.func @transform_12(%arg0: i32) -> (i32, i32) {
    %c0_i32 = arith.constant 0 : i32
    %c0_i32_0 = arith.constant 0 : i32
    %c0_i32_1 = arith.constant 0 : i32
    return %c0_i32, %c0_i32_0 : i32, i32
  }
  func.func @transform_13(%arg0: i32) -> (i32, i32) {
    %c0_i32 = arith.constant 0 : i32
    %c0_i32_0 = arith.constant 0 : i32
    return %arg0, %c0_i32 : i32, i32
  }
}

</mosaic_0001>

<llo_original>
// kernel: tpu_custom_call.1
$region0: #{tpu_custom_call.1}
  #allocation0 [shape = 'u32[]', space=smem, size = 0x4, offset = 0x4, fixed_abs, tag = 'smem constant byte address 0x4 - core index']
  #allocation1 [shape = 'u32[144,128]{1,0:T(1,128)}', space=vmem, size = 0x12000, scoped, tag = 'internal scratch']
  %s0 = inlined_call_operand.hbm [shape: bf16[32,768], index: 0, kind: input, shape index: {}]
  %s1 = inlined_call_operand.hbm [shape: bf16[32,2048], index: 1, kind: input, shape index: {}]
  %s2 = inlined_call_operand.hbm [shape: bf16[768,384], index: 2, kind: input, shape index: {}]
  %s3 = inlined_call_operand.hbm [shape: f32[1,384], index: 3, kind: input, shape index: {}]
  %s4 = inlined_call_operand.hbm [shape: bf16[2048,384], index: 4, kind: input, shape index: {}]
  %s5 = inlined_call_operand.hbm [shape: f32[1,384], index: 5, kind: input, shape index: {}]
  %s6 = inlined_call_operand.hbm [shape: bf16[384,256], index: 6, kind: input, shape index: {}]
  %s7 = inlined_call_operand.hbm [shape: bf16[384,256], index: 7, kind: input, shape index: {}]
  %s8 = inlined_call_operand.hbm [shape: f32[1,256], index: 8, kind: input, shape index: {}]
  %s9 = inlined_call_operand.hbm [shape: bf16[256,128], index: 9, kind: input, shape index: {}]
  %s10 = inlined_call_operand.hbm [shape: f32[1,128], index: 10, kind: input, shape index: {}]
  %s11 = inlined_call_operand.hbm [shape: bf16[128,128], index: 11, kind: input, shape index: {}]
  %s12 = inlined_call_operand.hbm [shape: f32[1,128], index: 12, kind: input, shape index: {}]
  %s13 = inlined_call_operand.hbm [shape: f32[32,128], index: 13, kind: output, shape index: {}]
  %s14 = sld [smem:[#allocation0]]
  $region137: #{tpu_custom_call.1} parent=0
    _
  %s16 = ssub.s32 1, %s14
  %s17 = scalar_select 0, %s16, %s14
  $region1: #{tpu_custom_call.1} parent=0
    #allocation2 [shape = 'u8[49152]{0}', space=vmem, size = 0xc000, scoped, tag = 'input window, operand 0']
    #allocation3 [shape = 's32[2]{0}', space=sflag, size = 0x8, scoped, tag = 'scoped memory for tpu_custom_call.1']
    #allocation4 [shape = 's32[2]{0}', space=sflag, size = 0x8, scoped, tag = 'scoped memory for tpu_custom_call.1']
    #allocation5 [shape = 'u8[131072]{0}', space=vmem, size = 0x20000, scoped, tag = 'input window, operand 1']
    #allocation6 [shape = 's32[2]{0}', space=sflag, size = 0x8, scoped, tag = 'scoped memory for tpu_custom_call.1']
    #allocation7 [shape = 'u8[589824]{0}', space=vmem, size = 0x90000, scoped, tag = 'input window, operand 2, single buffered']
    #allocation8 [shape = 'u8[1536]{0}', space=vmem, size = 0x800, scoped, tag = 'input window, operand 3, single buffered']
    #allocation9 [shape = 's32[1]{0}', space=sflag, size = 0x4, scoped, tag = 'scoped memory for tpu_custom_call.1']
    #allocation10 [shape = 'u8[1572864]{0}', space=vmem, size = 0x180000, scoped, tag = 'input window, operand 4, single buffered']
    #allocation11 [shape = 'u8[1536]{0}', space=vmem, size = 0x800, scoped, tag = 'input window, operand 5, single buffered']
    #allocation12 [shape = 's32[1]{0}', space=sflag, size = 0x4, scoped, tag = 'scoped memory for tpu_custom_call.1']
    #allocation13 [shape = 'u8[196608]{0}', space=vmem, size = 0x30000, scoped, tag = 'input window, operand 6, single buffered']
    #allocation14 [shape = 'u8[196608]{0}', space=vmem, size = 0x30000, scoped, tag = 'input window, operand 7, single buffered']
    #allocation15 [shape = 's32[1]{0}', space=sflag, size = 0x4, scoped, tag = 'scoped memory for tpu_custom_call.1']
    #allocation16 [shape = 'u8[1024]{0}', space=vmem, size = 0x400, scoped, tag = 'input window, operand 8, single buffered']
    #allocation17 [shape = 'u8[65536]{0}', space=vmem, size = 0x10000, scoped, tag = 'input window, operand 9, single buffered']
    #allocation18 [shape = 's32[1]{0}', space=sflag, size = 0x4, scoped, tag = 'scoped memory for tpu_custom_call.1']
    #allocation19 [shape = 'u8[512]{0}', space=vmem, size = 0x400, scoped, tag = 'input window, operand 10, single buffered']
    #allocation20 [shape = 'u8[32768]{0}', space=vmem, size = 0x8000, scoped, tag = 'input window, operand 11, single buffered']
    #allocation21 [shape = 's32[1]{0}', space=sflag, size = 0x4, scoped, tag = 'scoped memory for tpu_custom_call.1']
    #allocation22 [shape = 'u8[512]{0}', space=vmem, size = 0x400, scoped, tag = 'input window, operand 12, single buffered']
    #allocation23 [shape = 'u8[16384]{0}', space=vmem, size = 0x4000, scoped, tag = 'output window, operand 0']
    %18 = vsyncpa [#allocation3], 0
    %s19 = scalar_lea.sflag [#allocation3], 1
    %20 = vsyncpa %s19, 0
    %21 = vsyncpa [#allocation6], 0
    %s22 = scalar_lea.sflag [#allocation6], 1
    %23 = vsyncpa %s22, 0
    %24 = vsyncpa [#allocation9], 0
    %25 = vsyncpa [#allocation12], 0
    %26 = vsyncpa [#allocation15], 0
    %27 = vsyncpa [#allocation18], 0
    %28 = vsyncpa [#allocation21], 0
    %29 = vsyncpa [#allocation4], 0
    %s30 = scalar_lea.sflag [#allocation4], 1
    %31 = vsyncpa %s30, 0
    loop: start=0, step=1, limit=4
    $region2: #{tpu_custom_call.1} parent=1 // loop_pre_header
      _
    $region3: #{tpu_custom_call.1} parent=1 // loop_header
      %s33 = sphi 0, %s37
      %p34 = scmp.ge.s32.totalorder %s33, 4
      %s43 = sphi 0, %s45
      %s46 = sphi 0, %s43
      %s47 = sphi 0, %s46
      %s63 = sphi 0, %s47
      %s69 = sphi 0, %s71
      %s72 = sphi 0, %s69
      %s73 = sphi 0, %s72
      %s89 = sphi 0, %s73
      %s93 = sphi 0, %s93
      %s95 = sphi 0, %s93
      %s96 = sphi 0, %s95
      %s110 = sphi 0, %s96
      %s114 = sphi 0, %s114
      %s116 = sphi 0, %s114
      %s117 = sphi 0, %s116
      %s131 = sphi 0, %s117
      %s135 = sphi 0, %s135
      %s137 = sphi 0, %s135
      %s138 = sphi 0, %s137
      %s152 = sphi 0, %s138
      %s156 = sphi 0, %s156
      %s158 = sphi 0, %s156
      %s159 = sphi 0, %s158
      %s173 = sphi 0, %s159
      %s177 = sphi 0, %s177
      %s179 = sphi 0, %s177
      %s180 = sphi 0, %s179
      %s194 = sphi 0, %s180
      %s198 = sphi 0, %s198
      %s200 = sphi 0, %s198
      %s201 = sphi 0, %s200
      %s215 = sphi 0, %s201
      %s219 = sphi 0, %s219
      %s221 = sphi 0, %s219
      %s222 = sphi 0, %s221
      %s236 = sphi 0, %s222
      %s240 = sphi 0, %s240
      %s242 = sphi 0, %s240
      %s243 = sphi 0, %s242
      %s257 = sphi 0, %s243
      %s261 = sphi 0, %s261
      %s263 = sphi 0, %s261
      %s264 = sphi 0, %s263
      %s278 = sphi 0, %s264
      %s282 = sphi 0, %s282
      %s284 = sphi 0, %s282
      %s285 = sphi 0, %s284
      %s299 = sphi 0, %s285
      %s303 = sphi 0, %s303
      %s305 = sphi 0, %s303
      %s306 = sphi 0, %s305
      %s320 = sphi 0, %s306
      %s326 = sphi 0, %s328
      %s329 = sphi 0, %s326
      %s330 = sphi 0, %s329
      %s346 = sphi 0, %s330
    $region4: #{tpu_custom_call.1} parent=1 // loop_header_branch
      %36 = sbr.rel (%p34) target = $region8
    $region5: #{tpu_custom_call.1} parent=1 // loop_body
      %s38 = ssub.s32 %s33, 1
      %s39 = ssub.s32 %s33, 2
      %s40 = sadd.s32 %s33, 1
      %s41 = ssub.s32 %s33, %s40
      %p42 = scmp.eq.s32.totalorder %s41, 0
      %s44 = sadd.s32 %s43, 1
      %s45 = scalar_select %p42, %s43, %s44
      %p48 = pneg %p42
      %p49 = scmp.eq.s32.totalorder %s33, 1
      %p50 = por %p48, %p49
      %p51 = scmp.ne.s32.totalorder %s43, %s46
      %p52 = scmp.eq.s32.totalorder %s33, 0
      %p53 = por %p51, %p52
      %p54 = scmp.ne.s32.totalorder %s43, %s46
      %p55 = scmp.eq.s32.totalorder %s38, 1
      %p56 = por %p54, %p55
      %p57 = scmp.ne.s32.totalorder %s46, %s47
      %p58 = scmp.eq.s32.totalorder %s38, 0
      %p59 = por %p57, %p58
      %p60 = scmp.ne.s32.totalorder %s46, %s47
      %p61 = scmp.eq.s32.totalorder %s39, 1
      %p62 = por %p60, %p61
      %p64 = scmp.ne.s32.totalorder %s47, %s63
      %p65 = scmp.eq.s32.totalorder %s39, 0
      %p66 = por %p64, %p65
      %s67 = ssub.s32 %s33, %s40
      %p68 = scmp.eq.s32.totalorder %s67, 0
      %s70 = sadd.s32 %s69, 1
      %s71 = scalar_select %p68, %s69, %s70
      %p74 = pneg %p68
      %p75 = scmp.eq.s32.totalorder %s33, 1
      %p76 = por %p74, %p75
      %p77 = scmp.ne.s32.totalorder %s69, %s72
      %p78 = scmp.eq.s32.totalorder %s33, 0
      %p79 = por %p77, %p78
      %p80 = scmp.ne.s32.totalorder %s69, %s72
      %p81 = scmp.eq.s32.totalorder %s38, 1
      %p82 = por %p80, %p81
      %p83 = scmp.ne.s32.totalorder %s72, %s73
      %p84 = scmp.eq.s32.totalorder %s38, 0
      %p85 = por %p83, %p84
      %p86 = scmp.ne.s32.totalorder %s72, %s73
      %p87 = scmp.eq.s32.totalorder %s39, 1
      %p88 = por %p86, %p87
      %p90 = scmp.ne.s32.totalorder %s73, %s89
      %p91 = scmp.eq.s32.totalorder %s39, 0
      %p92 = por %p90, %p91
      %s94 = sadd.s32 %s93, 1
      %p97 = scmp.eq.s32.totalorder %s33, 1
      %p98 = scmp.ne.s32.totalorder %s93, %s95
      %p99 = scmp.eq.s32.totalorder %s33, 0
      %p100 = por %p98, %p99
      %p101 = scmp.ne.s32.totalorder %s93, %s95
      %p102 = scmp.eq.s32.totalorder %s38, 1
      %p103 = por %p101, %p102
      %p104 = scmp.ne.s32.totalorder %s95, %s96
      %p105 = scmp.eq.s32.totalorder %s38, 0
      %p106 = por %p104, %p105
      %p107 = scmp.ne.s32.totalorder %s95, %s96
      %p108 = scmp.eq.s32.totalorder %s39, 1
      %p109 = por %p107, %p108
      %p111 = scmp.ne.s32.totalorder %s96, %s110
      %p112 = scmp.eq.s32.totalorder %s39, 0
      %p113 = por %p111, %p112
      %s115 = sadd.s32 %s114, 1
      %p118 = scmp.eq.s32.totalorder %s33, 1
      %p119 = scmp.ne.s32.totalorder %s114, %s116
      %p120 = scmp.eq.s32.totalorder %s33, 0
      %p121 = por %p119, %p120
      %p122 = scmp.ne.s32.totalorder %s114, %s116
      %p123 = scmp.eq.s32.totalorder %s38, 1
      %p124 = por %p122, %p123
      %p125 = scmp.ne.s32.totalorder %s116, %s117
      %p126 = scmp.eq.s32.totalorder %s38, 0
      %p127 = por %p125, %p126
      %p128 = scmp.ne.s32.totalorder %s116, %s117
      %p129 = scmp.eq.s32.totalorder %s39, 1
      %p130 = por %p128, %p129
      %p132 = scmp.ne.s32.totalorder %s117, %s131
      %p133 = scmp.eq.s32.totalorder %s39, 0
      %p134 = por %p132, %p133
      %s136 = sadd.s32 %s135, 1
      %p139 = scmp.eq.s32.totalorder %s33, 1
      %p140 = scmp.ne.s32.totalorder %s135, %s137
      %p141 = scmp.eq.s32.totalorder %s33, 0
      %p142 = por %p140, %p141
      %p143 = scmp.ne.s32.totalorder %s135, %s137
      %p144 = scmp.eq.s32.totalorder %s38, 1
      %p145 = por %p143, %p144
      %p146 = scmp.ne.s32.totalorder %s137, %s138
      %p147 = scmp.eq.s32.totalorder %s38, 0
      %p148 = por %p146, %p147
      %p149 = scmp.ne.s32.totalorder %s137, %s138
      %p150 = scmp.eq.s32.totalorder %s39, 1
      %p151 = por %p149, %p150
      %p153 = scmp.ne.s32.totalorder %s138, %s152
      %p154 = scmp.eq.s32.totalorder %s39, 0
      %p155 = por %p153, %p154
      %s157 = sadd.s32 %s156, 1
      %p160 = scmp.eq.s32.totalorder %s33, 1
      %p161 = scmp.ne.s32.totalorder %s156, %s158
      %p162 = scmp.eq.s32.totalorder %s33, 0
      %p163 = por %p161, %p162
      %p164 = scmp.ne.s32.totalorder %s156, %s158
      %p165 = scmp.eq.s32.totalorder %s38, 1
      %p166 = por %p164, %p165
      %p167 = scmp.ne.s32.totalorder %s158, %s159
      %p168 = scmp.eq.s32.totalorder %s38, 0
      %p169 = por %p167, %p168
      %p170 = scmp.ne.s32.totalorder %s158, %s159
      %p171 = scmp.eq.s32.totalorder %s39, 1
      %p172 = por %p170, %p171
      %p174 = scmp.ne.s32.totalorder %s159, %s173
      %p175 = scmp.eq.s32.totalorder %s39, 0
      %p176 = por %p174, %p175
      %s178 = sadd.s32 %s177, 1
      %p181 = scmp.eq.s32.totalorder %s33, 1
      %p182 = scmp.ne.s32.totalorder %s177, %s179
      %p183 = scmp.eq.s32.totalorder %s33, 0
      %p184 = por %p182, %p183
      %p185 = scmp.ne.s32.totalorder %s177, %s179
      %p186 = scmp.eq.s32.totalorder %s38, 1
      %p187 = por %p185, %p186
      %p188 = scmp.ne.s32.totalorder %s179, %s180
      %p189 = scmp.eq.s32.totalorder %s38, 0
      %p190 = por %p188, %p189
      %p191 = scmp.ne.s32.totalorder %s179, %s180
      %p192 = scmp.eq.s32.totalorder %s39, 1
      %p193 = por %p191, %p192
      %p195 = scmp.ne.s32.totalorder %s180, %s194
      %p196 = scmp.eq.s32.totalorder %s39, 0
      %p197 = por %p195, %p196
      %s199 = sadd.s32 %s198, 1
      %p202 = scmp.eq.s32.totalorder %s33, 1
      %p203 = scmp.ne.s32.totalorder %s198, %s200
      %p204 = scmp.eq.s32.totalorder %s33, 0
      %p205 = por %p203, %p204
      %p206 = scmp.ne.s32.totalorder %s198, %s200
      %p207 = scmp.eq.s32.totalorder %s38, 1
      %p208 = por %p206, %p207
      %p209 = scmp.ne.s32.totalorder %s200, %s201
      %p210 = scmp.eq.s32.totalorder %s38, 0
      %p211 = por %p209, %p210
      %p212 = scmp.ne.s32.totalorder %s200, %s201
      %p213 = scmp.eq.s32.totalorder %s39, 1
      %p214 = por %p212, %p213
      %p216 = scmp.ne.s32.totalorder %s201, %s215
      %p217 = scmp.eq.s32.totalorder %s39, 0
      %p218 = por %p216, %p217
      %s220 = sadd.s32 %s219, 1
      %p223 = scmp.eq.s32.totalorder %s33, 1
      %p224 = scmp.ne.s32.totalorder %s219, %s221
      %p225 = scmp.eq.s32.totalorder %s33, 0
      %p226 = por %p224, %p225
      %p227 = scmp.ne.s32.totalorder %s219, %s221
      %p228 = scmp.eq.s32.totalorder %s38, 1
      %p229 = por %p227, %p228
      %p230 = scmp.ne.s32.totalorder %s221, %s222
      %p231 = scmp.eq.s32.totalorder %s38, 0
      %p232 = por %p230, %p231
      %p233 = scmp.ne.s32.totalorder %s221, %s222
      %p234 = scmp.eq.s32.totalorder %s39, 1
      %p235 = por %p233, %p234
      %p237 = scmp.ne.s32.totalorder %s222, %s236
      %p238 = scmp.eq.s32.totalorder %s39, 0
      %p239 = por %p237, %p238
      %s241 = sadd.s32 %s240, 1
      %p244 = scmp.eq.s32.totalorder %s33, 1
      %p245 = scmp.ne.s32.totalorder %s240, %s242
      %p246 = scmp.eq.s32.totalorder %s33, 0
      %p247 = por %p245, %p246
      %p248 = scmp.ne.s32.totalorder %s240, %s242
      %p249 = scmp.eq.s32.totalorder %s38, 1
      %p250 = por %p248, %p249
      %p251 = scmp.ne.s32.totalorder %s242, %s243
      %p252 = scmp.eq.s32.totalorder %s38, 0
      %p253 = por %p251, %p252
      %p254 = scmp.ne.s32.totalorder %s242, %s243
      %p255 = scmp.eq.s32.totalorder %s39, 1
      %p256 = por %p254, %p255
      %p258 = scmp.ne.s32.totalorder %s243, %s257
      %p259 = scmp.eq.s32.totalorder %s39, 0
      %p260 = por %p258, %p259
      %s262 = sadd.s32 %s261, 1
      %p265 = scmp.eq.s32.totalorder %s33, 1
      %p266 = scmp.ne.s32.totalorder %s261, %s263
      %p267 = scmp.eq.s32.totalorder %s33, 0
      %p268 = por %p266, %p267
      %p269 = scmp.ne.s32.totalorder %s261, %s263
      %p270 = scmp.eq.s32.totalorder %s38, 1
      %p271 = por %p269, %p270
      %p272 = scmp.ne.s32.totalorder %s263, %s264
      %p273 = scmp.eq.s32.totalorder %s38, 0
      %p274 = por %p272, %p273
      %p275 = scmp.ne.s32.totalorder %s263, %s264
      %p276 = scmp.eq.s32.totalorder %s39, 1
      %p277 = por %p275, %p276
      %p279 = scmp.ne.s32.totalorder %s264, %s278
      %p280 = scmp.eq.s32.totalorder %s39, 0
      %p281 = por %p279, %p280
      %s283 = sadd.s32 %s282, 1
      %p286 = scmp.eq.s32.totalorder %s33, 1
      %p287 = scmp.ne.s32.totalorder %s282, %s284
      %p288 = scmp.eq.s32.totalorder %s33, 0
      %p289 = por %p287, %p288
      %p290 = scmp.ne.s32.totalorder %s282, %s284
      %p291 = scmp.eq.s32.totalorder %s38, 1
      %p292 = por %p290, %p291
      %p293 = scmp.ne.s32.totalorder %s284, %s285
      %p294 = scmp.eq.s32.totalorder %s38, 0
      %p295 = por %p293, %p294
      %p296 = scmp.ne.s32.totalorder %s284, %s285
      %p297 = scmp.eq.s32.totalorder %s39, 1
      %p298 = por %p296, %p297
      %p300 = scmp.ne.s32.totalorder %s285, %s299
      %p301 = scmp.eq.s32.totalorder %s39, 0
      %p302 = por %p300, %p301
      %s304 = sadd.s32 %s303, 1
      %p307 = scmp.eq.s32.totalorder %s33, 1
      %p308 = scmp.ne.s32.totalorder %s303, %s305
      %p309 = scmp.eq.s32.totalorder %s33, 0
      %p310 = por %p308, %p309
      %p311 = scmp.ne.s32.totalorder %s303, %s305
      %p312 = scmp.eq.s32.totalorder %s38, 1
      %p313 = por %p311, %p312
      %p314 = scmp.ne.s32.totalorder %s305, %s306
      %p315 = scmp.eq.s32.totalorder %s38, 0
      %p316 = por %p314, %p315
      %p317 = scmp.ne.s32.totalorder %s305, %s306
      %p318 = scmp.eq.s32.totalorder %s39, 1
      %p319 = por %p317, %p318
      %p321 = scmp.ne.s32.totalorder %s306, %s320
      %p322 = scmp.eq.s32.totalorder %s39, 0
      %p323 = por %p321, %p322
      %s324 = ssub.s32 %s33, %s40
      %p325 = scmp.eq.s32.totalorder %s324, 0
      %s327 = sadd.s32 %s326, 1
      %s328 = scalar_select %p325, %s326, %s327
      %p331 = pneg %p325
      %p332 = scmp.eq.s32.totalorder %s33, 1
      %p333 = por %p331, %p332
      %p334 = scmp.ne.s32.totalorder %s326, %s329
      %p335 = scmp.eq.s32.totalorder %s33, 0
      %p336 = por %p334, %p335
      %p337 = scmp.ne.s32.totalorder %s326, %s329
      %p338 = scmp.eq.s32.totalorder %s38, 1
      %p339 = por %p337, %p338
      %p340 = scmp.ne.s32.totalorder %s329, %s330
      %p341 = scmp.eq.s32.totalorder %s38, 0
      %p342 = por %p340, %p341
      %p343 = scmp.ne.s32.totalorder %s329, %s330
      %p344 = scmp.eq.s32.totalorder %s39, 1
      %p345 = por %p343, %p344
      %p347 = scmp.ne.s32.totalorder %s330, %s346
      %p348 = scmp.eq.s32.totalorder %s39, 0
      %p349 = por %p347, %p348
      %p350 = scmp.le.s32.totalorder 1, %s33
      %p351 = scmp.lt.s32.totalorder %s33, 3
      %p352 = pnand %p350, %p351
      %p353 = pneg %p352
      // Predicated region
      $region9: #{tpu_custom_call.1} parent=5 // pred_check
        _
      $region10: #{tpu_custom_call.1} parent=5 // pred_check_branch
        %355 = sbr.rel (%p352) target = $region12
      $region11: #{tpu_custom_call.1} parent=5 // pred_region
        %s356 = ssub.s32 %s33, 1
        // Predicated region
        $region13: #{tpu_custom_call.1} parent=11 // pred_check
          %p357 = pneg %p106
        $region14: #{tpu_custom_call.1} parent=11 // pred_check_branch
          %359 = sbr.rel (%p357) target = $region16
        $region15: #{tpu_custom_call.1} parent=11 // pred_region
          %s361 = ssub.s32 18432, 18432
          %362 = vsyncadd [#allocation6], %s361
          %s363 = sshll.u32 [#allocation7], 4
          %s364 = int_to_ptr.vmem [resolvable:$true] %s363
          %369 = dma.hbm_to_vmem [thread:$0]  %s2, 18432, %s364, [#allocation6], 192, 192, 12
        $region16: #{tpu_custom_call.1} parent=11 // pred_fallthru
          _
        // Predicated region
        $region17: #{tpu_custom_call.1} parent=11 // pred_check
          %p370 = pneg %p127
        $region18: #{tpu_custom_call.1} parent=11 // pred_check_branch
          %372 = sbr.rel (%p370) target = $region20
        $region19: #{tpu_custom_call.1} parent=11 // pred_region
          %s374 = ssub.s32 48, 48
          %375 = vsyncadd [#allocation9], %s374
          %s377 = sshll.u32 [#allocation8], 4
          %s378 = int_to_ptr.vmem [resolvable:$true] %s377
          %380 = dma.hbm_to_vmem [thread:$0]  %s3, 48, %s378, [#allocation9]
        $region20: #{tpu_custom_call.1} parent=11 // pred_fallthru
          _
        // Predicated region
        $region21: #{tpu_custom_call.1} parent=11 // pred_check
          %p381 = pneg %p148
        $region22: #{tpu_custom_call.1} parent=11 // pred_check_branch
          %383 = sbr.rel (%p381) target = $region24
        $region23: #{tpu_custom_call.1} parent=11 // pred_region
          %s385 = ssub.s32 49152, 49152
          %386 = vsyncadd [#allocation9], %s385
          %s387 = sshll.u32 [#allocation10], 4
          %s388 = int_to_ptr.vmem [resolvable:$true] %s387
          %393 = dma.hbm_to_vmem [thread:$0]  %s4, 49152, %s388, [#allocation9], 192, 192, 12
        $region24: #{tpu_custom_call.1} parent=11 // pred_fallthru
          _
        // Predicated region
        $region25: #{tpu_custom_call.1} parent=11 // pred_check
          %p394 = pneg %p169
        $region26: #{tpu_custom_call.1} parent=11 // pred_check_branch
          %396 = sbr.rel (%p394) target = $region28
        $region27: #{tpu_custom_call.1} parent=11 // pred_region
          %s398 = ssub.s32 48, 48
          %399 = vsyncadd [#allocation12], %s398
          %s401 = sshll.u32 [#allocation11], 4
          %s402 = int_to_ptr.vmem [resolvable:$true] %s401
          %404 = dma.hbm_to_vmem [thread:$0]  %s5, 48, %s402, [#allocation12]
        $region28: #{tpu_custom_call.1} parent=11 // pred_fallthru
          _
        // Predicated region
        $region29: #{tpu_custom_call.1} parent=11 // pred_check
          %p405 = pneg %p190
        $region30: #{tpu_custom_call.1} parent=11 // pred_check_branch
          %407 = sbr.rel (%p405) target = $region32
        $region31: #{tpu_custom_call.1} parent=11 // pred_region
          %s409 = ssub.s32 6144, 6144
          %410 = vsyncadd [#allocation12], %s409
          %s411 = sshll.u32 [#allocation13], 4
          %s412 = int_to_ptr.vmem [resolvable:$true] %s411
          %417 = dma.hbm_to_vmem [thread:$0]  %s6, 6144, %s412, [#allocation12], 128, 128, 8
        $region32: #{tpu_custom_call.1} parent=11 // pred_fallthru
          _
        // Predicated region
        $region33: #{tpu_custom_call.1} parent=11 // pred_check
          %p418 = pneg %p211
        $region34: #{tpu_custom_call.1} parent=11 // pred_check_branch
          %420 = sbr.rel (%p418) target = $region36
        $region35: #{tpu_custom_call.1} parent=11 // pred_region
          %s422 = ssub.s32 6144, 6144
          %423 = vsyncadd [#allocation15], %s422
          %s424 = sshll.u32 [#allocation14], 4
          %s425 = int_to_ptr.vmem [resolvable:$true] %s424
          %430 = dma.hbm_to_vmem [thread:$0]  %s7, 6144, %s425, [#allocation15], 128, 128, 8
        $region36: #{tpu_custom_call.1} parent=11 // pred_fallthru
          _
        // Predicated region
        $region37: #{tpu_custom_call.1} parent=11 // pred_check
          %p431 = pneg %p232
        $region38: #{tpu_custom_call.1} parent=11 // pred_check_branch
          %433 = sbr.rel (%p431) target = $region40
        $region39: #{tpu_custom_call.1} parent=11 // pred_region
          %s435 = ssub.s32 32, 32
          %436 = vsyncadd [#allocation15], %s435
          %s438 = sshll.u32 [#allocation16], 4
          %s439 = int_to_ptr.vmem [resolvable:$true] %s438
          %441 = dma.hbm_to_vmem [thread:$0]  %s8, 32, %s439, [#allocation15]
        $region40: #{tpu_custom_call.1} parent=11 // pred_fallthru
          _
        // Predicated region
        $region41: #{tpu_custom_call.1} parent=11 // pred_check
          %p442 = pneg %p253
        $region42: #{tpu_custom_call.1} parent=11 // pred_check_branch
          %444 = sbr.rel (%p442) target = $region44
        $region43: #{tpu_custom_call.1} parent=11 // pred_region
          %s446 = ssub.s32 2048, 2048
          %447 = vsyncadd [#allocation18], %s446
          %s448 = sshll.u32 [#allocation17], 4
          %s449 = int_to_ptr.vmem [resolvable:$true] %s448
          %454 = dma.hbm_to_vmem [thread:$0]  %s9, 2048, %s449, [#allocation18], 64, 64, 4
        $region44: #{tpu_custom_call.1} parent=11 // pred_fallthru
          _
        // Predicated region
        $region45: #{tpu_custom_call.1} parent=11 // pred_check
          %p455 = pneg %p274
        $region46: #{tpu_custom_call.1} parent=11 // pred_check_branch
          %457 = sbr.rel (%p455) target = $region48
        $region47: #{tpu_custom_call.1} parent=11 // pred_region
          %s459 = ssub.s32 16, 16
          %460 = vsyncadd [#allocation18], %s459
          %s462 = sshll.u32 [#allocation19], 4
          %s463 = int_to_ptr.vmem [resolvable:$true] %s462
          %465 = dma.hbm_to_vmem [thread:$0]  %s10, 16, %s463, [#allocation18]
        $region48: #{tpu_custom_call.1} parent=11 // pred_fallthru
          _
        // Predicated region
        $region49: #{tpu_custom_call.1} parent=11 // pred_check
          %p466 = pneg %p295
        $region50: #{tpu_custom_call.1} parent=11 // pred_check_branch
          %468 = sbr.rel (%p466) target = $region52
        $region51: #{tpu_custom_call.1} parent=11 // pred_region
          %s470 = ssub.s32 1024, 1024
          %471 = vsyncadd [#allocation21], %s470
          %s472 = sshll.u32 [#allocation20], 4
          %s473 = int_to_ptr.vmem [resolvable:$true] %s472
          %478 = dma.hbm_to_vmem [thread:$0]  %s11, 1024, %s473, [#allocation21], 64, 64, 4
        $region52: #{tpu_custom_call.1} parent=11 // pred_fallthru
          _
        // Predicated region
        $region53: #{tpu_custom_call.1} parent=11 // pred_check
          %p479 = pneg %p316
        $region54: #{tpu_custom_call.1} parent=11 // pred_check_branch
          %481 = sbr.rel (%p479) target = $region56
        $region55: #{tpu_custom_call.1} parent=11 // pred_region
          %s483 = ssub.s32 16, 16
          %484 = vsyncadd [#allocation21], %s483
          %s486 = sshll.u32 [#allocation22], 4
          %s487 = int_to_ptr.vmem [resolvable:$true] %s486
          %489 = dma.hbm_to_vmem [thread:$0]  %s12, 16, %s487, [#allocation21]
        $region56: #{tpu_custom_call.1} parent=11 // pred_fallthru
          _
      $region12: #{tpu_custom_call.1} parent=5 // pred_fallthru
        _
      %p490 = scmp.lt.s32.totalorder %s33, 2
      // Predicated region
      $region57: #{tpu_custom_call.1} parent=5 // pred_check
        %p491 = pneg %p490
      $region58: #{tpu_custom_call.1} parent=5 // pred_check_branch
        %493 = sbr.rel (%p491) target = $region60
      $region59: #{tpu_custom_call.1} parent=5 // pred_region
        // Predicated region
        $region61: #{tpu_custom_call.1} parent=59 // pred_check
          %p494 = pneg %p53
        $region62: #{tpu_custom_call.1} parent=59 // pred_check_branch
          %496 = sbr.rel (%p494) target = $region64
        $region63: #{tpu_custom_call.1} parent=59 // pred_region
          %s497 = sand.u32 %s43, 1
          %s498 = scalar_lea.sflag [#allocation3], %s497
          %s499 = sand.u32 %s43, 1
          %s500 = smul.addr %s499, 48
          %s501 = scalar_lea.vmem [#allocation2], %s500
          %s502 = smul.u32 2, %s33
          %s504 = ssub.s32 768, 768
          %505 = vsyncadd %s498, %s504
          %s506 = smul.addr %s502, 6
          %s507 = smul.addr %s506, 64
          %s508 = scalar_lea.hbm %s0, %s507
          %s509 = sshll.u32 %s501, 4
          %s510 = int_to_ptr.vmem [resolvable:$true] %s509
          %515 = dma.hbm_to_vmem [thread:$0]  %s508, 768, %s510, %s498, 384, 384, 24
        $region64: #{tpu_custom_call.1} parent=59 // pred_fallthru
          _
        // Predicated region
        $region65: #{tpu_custom_call.1} parent=59 // pred_check
          %p516 = pneg %p79
        $region66: #{tpu_custom_call.1} parent=59 // pred_check_branch
          %518 = sbr.rel (%p516) target = $region68
        $region67: #{tpu_custom_call.1} parent=59 // pred_region
          %s519 = sand.u32 %s33, 1
          %s520 = scalar_lea.sflag [#allocation6], %s519
          %s521 = sand.u32 %s69, 1
          %s522 = smul.addr %s521, 128
          %s523 = scalar_lea.vmem [#allocation5], %s522
          %s524 = smul.u32 2, %s33
          %s526 = ssub.s32 2048, 2048
          %527 = vsyncadd %s520, %s526
          %s528 = smul.addr %s524, 16
          %s529 = smul.addr %s528, 64
          %s530 = scalar_lea.hbm %s1, %s529
          %s531 = sshll.u32 %s523, 4
          %s532 = int_to_ptr.vmem [resolvable:$true] %s531
          %537 = dma.hbm_to_vmem [thread:$0]  %s530, 2048, %s532, %s520, 1024, 1024, 64
        $region68: #{tpu_custom_call.1} parent=59 // pred_fallthru
          _
      $region60: #{tpu_custom_call.1} parent=5 // pred_fallthru
        _
      %p538 = scmp.le.s32.totalorder 1, %s33
      %p539 = scmp.lt.s32.totalorder %s33, 3
      %p540 = pnand %p538, %p539
      %p541 = pneg %p540
      // Predicated region
      $region69: #{tpu_custom_call.1} parent=5 // pred_check
        _
      $region70: #{tpu_custom_call.1} parent=5 // pred_check_branch
        %543 = sbr.rel (%p540) target = $region72
      $region71: #{tpu_custom_call.1} parent=5 // pred_region
        %s544 = ssub.s32 %s33, 1
        %s545 = sand.u32 %s46, 1
        %s546 = scalar_lea.sflag [#allocation3], %s545
        %s547 = sand.u32 %s46, 1
        %s548 = smul.addr %s547, 48
        %s549 = scalar_lea.vmem [#allocation2], %s548
        // Predicated region
        $region73: #{tpu_custom_call.1} parent=71 // pred_check
          %p550 = pneg %p59
        $region74: #{tpu_custom_call.1} parent=71 // pred_check_branch
          %552 = sbr.rel (%p550) target = $region76
        $region75: #{tpu_custom_call.1} parent=71 // pred_region
          %553 = dma.done %s546, 768
        $region76: #{tpu_custom_call.1} parent=71 // pred_fallthru
          _
        %s554 = sand.u32 %s38, 1
        %s555 = scalar_lea.sflag [#allocation6], %s554
        %s556 = sand.u32 %s72, 1
        %s557 = smul.addr %s556, 128
        %s558 = scalar_lea.vmem [#allocation5], %s557
        // Predicated region
        $region77: #{tpu_custom_call.1} parent=71 // pred_check
          %p559 = pneg %p85
        $region78: #{tpu_custom_call.1} parent=71 // pred_check_branch
          %561 = sbr.rel (%p559) target = $region80
        $region79: #{tpu_custom_call.1} parent=71 // pred_region
          %562 = dma.done %s555, 2048
        $region80: #{tpu_custom_call.1} parent=71 // pred_fallthru
          _
        // Predicated region
        $region81: #{tpu_custom_call.1} parent=71 // pred_check
          %p563 = pneg %p106
        $region82: #{tpu_custom_call.1} parent=71 // pred_check_branch
          %565 = sbr.rel (%p563) target = $region84
        $region83: #{tpu_custom_call.1} parent=71 // pred_region
          %566 = dma.done [#allocation6], 18432
        $region84: #{tpu_custom_call.1} parent=71 // pred_fallthru
          _
        // Predicated region
        $region85: #{tpu_custom_call.1} parent=71 // pred_check
          %p567 = pneg %p127
        $region86: #{tpu_custom_call.1} parent=71 // pred_check_branch
          %569 = sbr.rel (%p567) target = $region88
        $region87: #{tpu_custom_call.1} parent=71 // pred_region
          %570 = dma.done [#allocation9], 48
        $region88: #{tpu_custom_call.1} parent=71 // pred_fallthru
          _
        // Predicated region
        $region89: #{tpu_custom_call.1} parent=71 // pred_check
          %p571 = pneg %p148
        $region90: #{tpu_custom_call.1} parent=71 // pred_check_branch
          %573 = sbr.rel (%p571) target = $region92
        $region91: #{tpu_custom_call.1} parent=71 // pred_region
          %574 = dma.done [#allocation9], 49152
        $region92: #{tpu_custom_call.1} parent=71 // pred_fallthru
          _
        // Predicated region
        $region93: #{tpu_custom_call.1} parent=71 // pred_check
          %p575 = pneg %p169
        $region94: #{tpu_custom_call.1} parent=71 // pred_check_branch
          %577 = sbr.rel (%p575) target = $region96
        $region95: #{tpu_custom_call.1} parent=71 // pred_region
          %578 = dma.done [#allocation12], 48
        $region96: #{tpu_custom_call.1} parent=71 // pred_fallthru
          _
        // Predicated region
        $region97: #{tpu_custom_call.1} parent=71 // pred_check
          %p579 = pneg %p190
        $region98: #{tpu_custom_call.1} parent=71 // pred_check_branch
          %581 = sbr.rel (%p579) target = $region100
        $region99: #{tpu_custom_call.1} parent=71 // pred_region
          %582 = dma.done [#allocation12], 6144
        $region100: #{tpu_custom_call.1} parent=71 // pred_fallthru
          _
        // Predicated region
        $region101: #{tpu_custom_call.1} parent=71 // pred_check
          %p583 = pneg %p211
        $region102: #{tpu_custom_call.1} parent=71 // pred_check_branch
          %585 = sbr.rel (%p583) target = $region104
        $region103: #{tpu_custom_call.1} parent=71 // pred_region
          %586 = dma.done [#allocation15], 6144
        $region104: #{tpu_custom_call.1} parent=71 // pred_fallthru
          _
        // Predicated region
        $region105: #{tpu_custom_call.1} parent=71 // pred_check
          %p587 = pneg %p232
        $region106: #{tpu_custom_call.1} parent=71 // pred_check_branch
          %589 = sbr.rel (%p587) target = $region108
        $region107: #{tpu_custom_call.1} parent=71 // pred_region
          %590 = dma.done [#allocation15], 32
        $region108: #{tpu_custom_call.1} parent=71 // pred_fallthru
          _
        // Predicated region
        $region109: #{tpu_custom_call.1} parent=71 // pred_check
          %p591 = pneg %p253
        $region110: #{tpu_custom_call.1} parent=71 // pred_check_branch
          %593 = sbr.rel (%p591) target = $region112
        $region111: #{tpu_custom_call.1} parent=71 // pred_region
          %594 = dma.done [#allocation18], 2048
        $region112: #{tpu_custom_call.1} parent=71 // pred_fallthru
          _
        // Predicated region
        $region113: #{tpu_custom_call.1} parent=71 // pred_check
          %p595 = pneg %p274
        $region114: #{tpu_custom_call.1} parent=71 // pred_check_branch
          %597 = sbr.rel (%p595) target = $region116
        $region115: #{tpu_custom_call.1} parent=71 // pred_region
          %598 = dma.done [#allocation18], 16
        $region116: #{tpu_custom_call.1} parent=71 // pred_fallthru
          _
        // Predicated region
        $region117: #{tpu_custom_call.1} parent=71 // pred_check
          %p599 = pneg %p295
        $region118: #{tpu_custom_call.1} parent=71 // pred_check_branch
          %601 = sbr.rel (%p599) target = $region120
        $region119: #{tpu_custom_call.1} parent=71 // pred_region
          %602 = dma.done [#allocation21], 1024
        $region120: #{tpu_custom_call.1} parent=71 // pred_fallthru
          _
        // Predicated region
        $region121: #{tpu_custom_call.1} parent=71 // pred_check
          %p603 = pneg %p316
        $region122: #{tpu_custom_call.1} parent=71 // pred_check_branch
          %605 = sbr.rel (%p603) target = $region124
        $region123: #{tpu_custom_call.1} parent=71 // pred_region
          %606 = dma.done [#allocation21], 16
        $region124: #{tpu_custom_call.1} parent=71 // pred_fallthru
          _
        %s607 = sand.u32 %s46, 1
        %s608 = scalar_lea.sflag [#allocation3], %s607
        %s609 = sand.u32 %s46, 1
        %s610 = smul.addr %s609, 48
        %s611 = scalar_lea.vmem [#allocation2], %s610
        %p612 = pneg %p59
        %p613 = pneg %p56
        %s614 = sand.u32 %s38, 1
        %s615 = scalar_lea.sflag [#allocation6], %s614
        %s616 = sand.u32 %s72, 1
        %s617 = smul.addr %s616, 128
        %s618 = scalar_lea.vmem [#allocation5], %s617
        %p619 = pneg %p85
        %p620 = pneg %p82
        %p621 = pneg %p106
        %p622 = pneg %p103
        %p623 = pneg %p127
        %p624 = pneg %p124
        %p625 = pneg %p148
        %p626 = pneg %p145
        %p627 = pneg %p169
        %p628 = pneg %p166
        %p629 = pneg %p190
        %p630 = pneg %p187
        %p631 = pneg %p211
        %p632 = pneg %p208
        %p633 = pneg %p232
        %p634 = pneg %p229
        %p635 = pneg %p253
        %p636 = pneg %p250
        %p637 = pneg %p274
        %p638 = pneg %p271
        %p639 = pneg %p295
        %p640 = pneg %p292
        %p641 = pneg %p316
        %p642 = pneg %p313
        %p643 = pneg %p342
        %p644 = pneg %p339
        %s645 = sand.u32 %s329, 1
        %s646 = scalar_lea.sflag [#allocation4], %s645
        %s647 = sand.u32 %s329, 1
        %s648 = smul.addr %s647, 16
        %s649 = scalar_lea.vmem [#allocation23], %s648
        %s650 = smul.u32 2, %s38
        %s651 = smul.u32 2, %s38
        %s652 = smul.u32 2, %s38
        %v654 = vld [vmem:[%s549] sm:$0xff]
        %v655 = vld [vmem:[%s549 + $0x8] sm:$0xff]
        %v656 = vld [vmem:[%s549 + $0x10] sm:$0xff]
        %v657 = vld [vmem:[%s549 + $0x18] sm:$0xff]
        %v658 = vld [vmem:[%s549 + $0x20] sm:$0xff]
        %v659 = vld [vmem:[%s549 + $0x28] sm:$0xff]
        %v660 = vunpack.c.l.bf16 %v654
        %v661 = vunpack.c.h.bf16 %v654
        %v662 = vunpack.c.l.bf16 %v655
        %v663 = vunpack.c.h.bf16 %v655
        %v664 = vunpack.c.l.bf16 %v656
        %v665 = vunpack.c.h.bf16 %v656
        %v666 = vunpack.c.l.bf16 %v657
        %v667 = vunpack.c.h.bf16 %v657
        %v668 = vunpack.c.l.bf16 %v658
        %v669 = vunpack.c.h.bf16 %v658
        %v670 = vunpack.c.l.bf16 %v659
        %v671 = vunpack.c.h.bf16 %v659
        %v672 = vadd.f32 %v660, %v661
        %v673 = vadd.f32 %v672, %v662
        %v674 = vadd.f32 %v673, %v663
        %v675 = vadd.f32 %v674, %v664
        %v676 = vadd.f32 %v675, %v665
        %677 = vadd.xlane.f32.xlu0 %v676
        %v678 = vpop.xlane.xlu0 %677
        %v679 = vadd.f32 %v666, %v667
        %v680 = vadd.f32 %v679, %v668
        %v681 = vadd.f32 %v680, %v669
        %v682 = vadd.f32 %v681, %v670
        %v683 = vadd.f32 %v682, %v671
        %684 = vadd.xlane.f32.xlu0 %v683
        %v685 = vpop.xlane.xlu0 %684
        %v686 = vmul.f32 %v678, 0.0013020834
        %v687 = vmul.f32 %v685, 0.0013020834
        %v688 = vmul.f32 %v660, %v660
        %v689 = vmul.f32 %v661, %v661
        %v690 = vmul.f32 %v662, %v662
        %v691 = vmul.f32 %v663, %v663
        %v692 = vmul.f32 %v664, %v664
        %v693 = vmul.f32 %v665, %v665
        %v694 = vmul.f32 %v666, %v666
        %v695 = vmul.f32 %v667, %v667
        %v696 = vmul.f32 %v668, %v668
        %v697 = vmul.f32 %v669, %v669
        %v698 = vmul.f32 %v670, %v670
        %v699 = vmul.f32 %v671, %v671
        %v700 = vadd.f32 %v688, %v689
        %v701 = vadd.f32 %v700, %v690
        %v702 = vadd.f32 %v701, %v691
        %v703 = vadd.f32 %v702, %v692
        %v704 = vadd.f32 %v703, %v693
        %705 = vadd.xlane.f32.xlu0 %v704
        %v706 = vpop.xlane.xlu0 %705
        %v707 = vadd.f32 %v694, %v695
        %v708 = vadd.f32 %v707, %v696
        %v709 = vadd.f32 %v708, %v697
        %v710 = vadd.f32 %v709, %v698
        %v711 = vadd.f32 %v710, %v699
        %712 = vadd.xlane.f32.xlu0 %v711
        %v713 = vpop.xlane.xlu0 %712
        %v714 = vmul.f32 %v706, 0.0013020834
        %v715 = vmul.f32 %v713, 0.0013020834
        %v716 = vmul.f32 %v686, %v686
        %v717 = vmul.f32 %v687, %v687
        %v718 = vsub.f32 %v714, %v716
        %v719 = vsub.f32 %v715, %v717
        %v720 = vmax.f32 %v718, 0.0
        %v721 = vmax.f32 %v719, 0.0
        %v722 = vsub.f32 %v660, %v686
        %v723 = vsub.f32 %v661, %v686
        %v724 = vsub.f32 %v662, %v686
        %v725 = vsub.f32 %v663, %v686
        %v726 = vsub.f32 %v664, %v686
        %v727 = vsub.f32 %v665, %v686
        %v728 = vsub.f32 %v666, %v687
        %v729 = vsub.f32 %v667, %v687
        %v730 = vsub.f32 %v668, %v687
        %v731 = vsub.f32 %v669, %v687
        %v732 = vsub.f32 %v670, %v687
        %v733 = vsub.f32 %v671, %v687
        %v734 = vadd.f32 %v720, 1e-05
        %v735 = vadd.f32 %v721, 1e-05
        %v736 = vrsqrt.pop %v734
        %v737 = vrsqrt.pop %v735
        %v738 = vmul.f32 %v722, %v736
        %v739 = vmul.f32 %v723, %v736
        %v740 = vmul.f32 %v724, %v736
        %v741 = vmul.f32 %v725, %v736
        %v742 = vmul.f32 %v726, %v736
        %v743 = vmul.f32 %v727, %v736
        %v744 = vmul.f32 %v728, %v737
        %v745 = vmul.f32 %v729, %v737
        %v746 = vmul.f32 %v730, %v737
        %v747 = vmul.f32 %v731, %v737
        %v748 = vmul.f32 %v732, %v737
        %v749 = vmul.f32 %v733, %v737
        %v750 = vld [vmem:[%s558] sm:$0xff]
        %v751 = vld [vmem:[%s558 + $0x8] sm:$0xff]
        %v752 = vld [vmem:[%s558 + $0x10] sm:$0xff]
        %v753 = vld [vmem:[%s558 + $0x18] sm:$0xff]
        %v754 = vld [vmem:[%s558 + $0x20] sm:$0xff]
        %v755 = vld [vmem:[%s558 + $0x28] sm:$0xff]
        %v756 = vld [vmem:[%s558 + $0x30] sm:$0xff]
        %v757 = vld [vmem:[%s558 + $0x38] sm:$0xff]
        %v758 = vld [vmem:[%s558 + $0x40] sm:$0xff]
        %v759 = vld [vmem:[%s558 + $0x48] sm:$0xff]
        %v760 = vld [vmem:[%s558 + $0x50] sm:$0xff]
        %v761 = vld [vmem:[%s558 + $0x58] sm:$0xff]
        %v762 = vld [vmem:[%s558 + $0x60] sm:$0xff]
        %v763 = vld [vmem:[%s558 + $0x68] sm:$0xff]
        %v764 = vld [vmem:[%s558 + $0x70] sm:$0xff]
        %v765 = vld [vmem:[%s558 + $0x78] sm:$0xff]
        %v766 = vunpack.c.l.bf16 %v750
        %v767 = vunpack.c.h.bf16 %v750
        %v768 = vunpack.c.l.bf16 %v751
        %v769 = vunpack.c.h.bf16 %v751
        %v770 = vunpack.c.l.bf16 %v752
        %v771 = vunpack.c.h.bf16 %v752
        %v772 = vunpack.c.l.bf16 %v753
        %v773 = vunpack.c.h.bf16 %v753
        %v774 = vunpack.c.l.bf16 %v754
        %v775 = vunpack.c.h.bf16 %v754
        %v776 = vunpack.c.l.bf16 %v755
        %v777 = vunpack.c.h.bf16 %v755
        %v778 = vunpack.c.l.bf16 %v756
        %v779 = vunpack.c.h.bf16 %v756
        %v780 = vunpack.c.l.bf16 %v757
        %v781 = vunpack.c.h.bf16 %v757
        %v782 = vunpack.c.l.bf16 %v758
        %v783 = vunpack.c.h.bf16 %v758
        %v784 = vunpack.c.l.bf16 %v759
        %v785 = vunpack.c.h.bf16 %v759
        %v786 = vunpack.c.l.bf16 %v760
        %v787 = vunpack.c.h.bf16 %v760
        %v788 = vunpack.c.l.bf16 %v761
        %v789 = vunpack.c.h.bf16 %v761
        %v790 = vunpack.c.l.bf16 %v762
        %v791 = vunpack.c.h.bf16 %v762
        %v792 = vunpack.c.l.bf16 %v763
        %v793 = vunpack.c.h.bf16 %v763
        %v794 = vunpack.c.l.bf16 %v764
        %v795 = vunpack.c.h.bf16 %v764
        %v796 = vunpack.c.l.bf16 %v765
        %v797 = vunpack.c.h.bf16 %v765
        %v798 = vadd.f32 %v766, %v767
        %v799 = vadd.f32 %v798, %v768
        %v800 = vadd.f32 %v799, %v769
        %v801 = vadd.f32 %v800, %v770
        %v802 = vadd.f32 %v801, %v771
        %v803 = vadd.f32 %v802, %v772
        %v804 = vadd.f32 %v803, %v773
        %v805 = vadd.f32 %v804, %v774
        %v806 = vadd.f32 %v805, %v775
        %v807 = vadd.f32 %v806, %v776
        %v808 = vadd.f32 %v807, %v777
        %v809 = vadd.f32 %v808, %v778
        %v810 = vadd.f32 %v809, %v779
        %v811 = vadd.f32 %v810, %v780
        %v812 = vadd.f32 %v811, %v781
        %813 = vadd.xlane.f32.xlu0 %v812
        %v814 = vpop.xlane.xlu0 %813
        %v815 = vadd.f32 %v782, %v783
        %v816 = vadd.f32 %v815, %v784
        %v817 = vadd.f32 %v816, %v785
        %v818 = vadd.f32 %v817, %v786
        %v819 = vadd.f32 %v818, %v787
        %v820 = vadd.f32 %v819, %v788
        %v821 = vadd.f32 %v820, %v789
        %v822 = vadd.f32 %v821, %v790
        %v823 = vadd.f32 %v822, %v791
        %v824 = vadd.f32 %v823, %v792
        %v825 = vadd.f32 %v824, %v793
        %v826 = vadd.f32 %v825, %v794
        %v827 = vadd.f32 %v826, %v795
        %v828 = vadd.f32 %v827, %v796
        %v829 = vadd.f32 %v828, %v797
        %830 = vadd.xlane.f32.xlu0 %v829
        %v831 = vpop.xlane.xlu0 %830
        %v832 = vmul.f32 %v814, 0.00048828125
        %v833 = vmul.f32 %v831, 0.00048828125
        %v834 = vmul.f32 %v766, %v766
        %v835 = vmul.f32 %v767, %v767
        %v836 = vmul.f32 %v768, %v768
        %v837 = vmul.f32 %v769, %v769
        %v838 = vmul.f32 %v770, %v770
        %v839 = vmul.f32 %v771, %v771
        %v840 = vmul.f32 %v772, %v772
        %v841 = vmul.f32 %v773, %v773
        %v842 = vmul.f32 %v774, %v774
        %v843 = vmul.f32 %v775, %v775
        %v844 = vmul.f32 %v776, %v776
        %v845 = vmul.f32 %v777, %v777
        %v846 = vmul.f32 %v778, %v778
        %v847 = vmul.f32 %v779, %v779
        %v848 = vmul.f32 %v780, %v780
        %v849 = vmul.f32 %v781, %v781
        %v850 = vmul.f32 %v782, %v782
        %v851 = vmul.f32 %v783, %v783
        %v852 = vmul.f32 %v784, %v784
        %v853 = vmul.f32 %v785, %v785
        %v854 = vmul.f32 %v786, %v786
        %v855 = vmul.f32 %v787, %v787
        %v856 = vmul.f32 %v788, %v788
        %v857 = vmul.f32 %v789, %v789
        %v858 = vmul.f32 %v790, %v790
        %v859 = vmul.f32 %v791, %v791
        %v860 = vmul.f32 %v792, %v792
        %v861 = vmul.f32 %v793, %v793
        %v862 = vmul.f32 %v794, %v794
        %v863 = vmul.f32 %v795, %v795
        %v864 = vmul.f32 %v796, %v796
        %v865 = vmul.f32 %v797, %v797
        %v866 = vadd.f32 %v834, %v835
        %v867 = vadd.f32 %v866, %v836
        %v868 = vadd.f32 %v867, %v837
        %v869 = vadd.f32 %v868, %v838
        %v870 = vadd.f32 %v869, %v839
        %v871 = vadd.f32 %v870, %v840
        %v872 = vadd.f32 %v871, %v841
        %v873 = vadd.f32 %v872, %v842
        %v874 = vadd.f32 %v873, %v843
        %v875 = vadd.f32 %v874, %v844
        %v876 = vadd.f32 %v875, %v845
        %v877 = vadd.f32 %v876, %v846
        %v878 = vadd.f32 %v877, %v847
        %v879 = vadd.f32 %v878, %v848
        %v880 = vadd.f32 %v879, %v849
        %881 = vadd.xlane.f32.xlu0 %v880
        %v882 = vpop.xlane.xlu0 %881
        %v883 = vadd.f32 %v850, %v851
        %v884 = vadd.f32 %v883, %v852
        %v885 = vadd.f32 %v884, %v853
        %v886 = vadd.f32 %v885, %v854
        %v887 = vadd.f32 %v886, %v855
        %v888 = vadd.f32 %v887, %v856
        %v889 = vadd.f32 %v888, %v857
        %v890 = vadd.f32 %v889, %v858
        %v891 = vadd.f32 %v890, %v859
        %v892 = vadd.f32 %v891, %v860
        %v893 = vadd.f32 %v892, %v861
        %v894 = vadd.f32 %v893, %v862
        %v895 = vadd.f32 %v894, %v863
        %v896 = vadd.f32 %v895, %v864
        %v897 = vadd.f32 %v896, %v865
        %898 = vadd.xlane.f32.xlu0 %v897
        %v899 = vpop.xlane.xlu0 %898
        %v900 = vmul.f32 %v882, 0.00048828125
        %v901 = vmul.f32 %v899, 0.00048828125
        %v902 = vmul.f32 %v832, %v832
        %v903 = vmul.f32 %v833, %v833
        %v904 = vsub.f32 %v900, %v902
        %v905 = vsub.f32 %v901, %v903
        %v906 = vmax.f32 %v904, 0.0
        %v907 = vmax.f32 %v905, 0.0
        %v908 = vsub.f32 %v766, %v832
        %v909 = vsub.f32 %v767, %v832
        %v910 = vsub.f32 %v768, %v832
        %v911 = vsub.f32 %v769, %v832
        %v912 = vsub.f32 %v770, %v832
        %v913 = vsub.f32 %v771, %v832
        %v914 = vsub.f32 %v772, %v832
        %v915 = vsub.f32 %v773, %v832
        %v916 = vsub.f32 %v774, %v832
        %v917 = vsub.f32 %v775, %v832
        %v918 = vsub.f32 %v776, %v832
        %v919 = vsub.f32 %v777, %v832
        %v920 = vsub.f32 %v778, %v832
        %v921 = vsub.f32 %v779, %v832
        %v922 = vsub.f32 %v780, %v832
        %v923 = vsub.f32 %v781, %v832
        %v924 = vsub.f32 %v782, %v833
        %v925 = vsub.f32 %v783, %v833
        %v926 = vsub.f32 %v784, %v833
        %v927 = vsub.f32 %v785, %v833
        %v928 = vsub.f32 %v786, %v833
        %v929 = vsub.f32 %v787, %v833
        %v930 = vsub.f32 %v788, %v833
        %v931 = vsub.f32 %v789, %v833
        %v932 = vsub.f32 %v790, %v833
        %v933 = vsub.f32 %v791, %v833
        %v934 = vsub.f32 %v792, %v833
        %v935 = vsub.f32 %v793, %v833
        %v936 = vsub.f32 %v794, %v833
        %v937 = vsub.f32 %v795, %v833
        %v938 = vsub.f32 %v796, %v833
        %v939 = vsub.f32 %v797, %v833
        %v940 = vadd.f32 %v906, 1e-05
        %v941 = vadd.f32 %v907, 1e-05
        %v942 = vrsqrt.pop %v940
        %v943 = vrsqrt.pop %v941
        %v944 = vmul.f32 %v908, %v942
        %v945 = vmul.f32 %v909, %v942
        %v946 = vmul.f32 %v910, %v942
        %v947 = vmul.f32 %v911, %v942
        %v948 = vmul.f32 %v912, %v942
        %v949 = vmul.f32 %v913, %v942
        %v950 = vmul.f32 %v914, %v942
        %v951 = vmul.f32 %v915, %v942
        %v952 = vmul.f32 %v916, %v942
        %v953 = vmul.f32 %v917, %v942
        %v954 = vmul.f32 %v918, %v942
        %v955 = vmul.f32 %v919, %v942
        %v956 = vmul.f32 %v920, %v942
        %v957 = vmul.f32 %v921, %v942
        %v958 = vmul.f32 %v922, %v942
        %v959 = vmul.f32 %v923, %v942
        %v960 = vmul.f32 %v924, %v943
        %v961 = vmul.f32 %v925, %v943
        %v962 = vmul.f32 %v926, %v943
        %v963 = vmul.f32 %v927, %v943
        %v964 = vmul.f32 %v928, %v943
        %v965 = vmul.f32 %v929, %v943
        %v966 = vmul.f32 %v930, %v943
        %v967 = vmul.f32 %v931, %v943
        %v968 = vmul.f32 %v932, %v943
        %v969 = vmul.f32 %v933, %v943
        %v970 = vmul.f32 %v934, %v943
        %v971 = vmul.f32 %v935, %v943
        %v972 = vmul.f32 %v936, %v943
        %v973 = vmul.f32 %v937, %v943
        %v974 = vmul.f32 %v938, %v943
        %v975 = vmul.f32 %v939, %v943
        %v976 = vpack.c.bf16 %v744, %v738
        %v977 = vpack.c.bf16 %v745, %v739
        %v978 = vpack.c.bf16 %v746, %v740
        %v979 = vpack.c.bf16 %v747, %v741
        %v980 = vpack.c.bf16 %v748, %v742
        %v981 = vpack.c.bf16 %v749, %v743
        %v982 = vld [vmem:[#allocation7] sm:$0xff]
        %v983 = vld [vmem:[#allocation7 + $0x8] sm:$0xf]
        %v984 = vld [vmem:[#allocation7 + $0xc] sm:$0xff]
        %v985 = vld [vmem:[#allocation7 + $0x14] sm:$0xf]
        %v986 = vld [vmem:[#allocation7 + $0x18] sm:$0xff]
        %v987 = vld [vmem:[#allocation7 + $0x20] sm:$0xf]
        %v988 = vld [vmem:[#allocation7 + $0x24] sm:$0xff]
        %v989 = vld [vmem:[#allocation7 + $0x2c] sm:$0xf]
        %v990 = vld [vmem:[#allocation7 + $0x30] sm:$0xff]
        %v991 = vld [vmem:[#allocation7 + $0x38] sm:$0xf]
        %v992 = vld [vmem:[#allocation7 + $0x3c] sm:$0xff]
        %v993 = vld [vmem:[#allocation7 + $0x44] sm:$0xf]
        %v994 = vld [vmem:[#allocation7 + $0x48] sm:$0xff]
        %v995 = vld [vmem:[#allocation7 + $0x50] sm:$0xf]
        %v996 = vld [vmem:[#allocation7 + $0x54] sm:$0xff]
        %v997 = vld [vmem:[#allocation7 + $0x5c] sm:$0xf]
        %v998 = vld [vmem:[#allocation7 + $0x60] sm:$0xff]
        %v999 = vld [vmem:[#allocation7 + $0x68] sm:$0xf]
        %v1000 = vld [vmem:[#allocation7 + $0x6c] sm:$0xff]
        %v1001 = vld [vmem:[#allocation7 + $0x74] sm:$0xf]
        %v1002 = vld [vmem:[#allocation7 + $0x78] sm:$0xff]
        %v1003 = vld [vmem:[#allocation7 + $0x80] sm:$0xf]
        %v1004 = vld [vmem:[#allocation7 + $0x84] sm:$0xff]
        %v1005 = vld [vmem:[#allocation7 + $0x8c] sm:$0xf]
        %v1006 = vld [vmem:[#allocation7 + $0x90] sm:$0xff]
        %v1007 = vld [vmem:[#allocation7 + $0x98] sm:$0xf]
        %v1008 = vld [vmem:[#allocation7 + $0x9c] sm:$0xff]
        %v1009 = vld [vmem:[#allocation7 + $0xa4] sm:$0xf]
        %v1010 = vld [vmem:[#allocation7 + $0xa8] sm:$0xff]
        %v1011 = vld [vmem:[#allocation7 + $0xb0] sm:$0xf]
        %v1012 = vld [vmem:[#allocation7 + $0xb4] sm:$0xff]
        %v1013 = vld [vmem:[#allocation7 + $0xbc] sm:$0xf]
        %v1014 = vld [vmem:[#allocation7 + $0xc0] sm:$0xff]
        %v1015 = vld [vmem:[#allocation7 + $0xc8] sm:$0xf]
        %v1016 = vld [vmem:[#allocation7 + $0xcc] sm:$0xff]
        %v1017 = vld [vmem:[#allocation7 + $0xd4] sm:$0xf]
        %v1018 = vld [vmem:[#allocation7 + $0xd8] sm:$0xff]
        %v1019 = vld [vmem:[#allocation7 + $0xe0] sm:$0xf]
        %v1020 = vld [vmem:[#allocation7 + $0xe4] sm:$0xff]
        %v1021 = vld [vmem:[#allocation7 + $0xec] sm:$0xf]
        %v1022 = vld [vmem:[#allocation7 + $0xf0] sm:$0xff]
        %v1023 = vld [vmem:[#allocation7 + $0xf8] sm:$0xf]
        %v1024 = vld [vmem:[#allocation7 + $0xfc] sm:$0xff]
        %v1025 = vld [vmem:[#allocation7 + $0x104] sm:$0xf]
        %v1026 = vld [vmem:[#allocation7 + $0x108] sm:$0xff]
        %v1027 = vld [vmem:[#allocation7 + $0x110] sm:$0xf]
        %v1028 = vld [vmem:[#allocation7 + $0x114] sm:$0xff]
        %v1029 = vld [vmem:[#allocation7 + $0x11c] sm:$0xf]
        %v1030 = vld [vmem:[#allocation7 + $0x120] sm:$0xff]
        %v1031 = vld [vmem:[#allocation7 + $0x128] sm:$0xf]
        %v1032 = vld [vmem:[#allocation7 + $0x12c] sm:$0xff]
        %v1033 = vld [vmem:[#allocation7 + $0x134] sm:$0xf]
        %v1034 = vld [vmem:[#allocation7 + $0x138] sm:$0xff]
        %v1035 = vld [vmem:[#allocation7 + $0x140] sm:$0xf]
        %v1036 = vld [vmem:[#allocation7 + $0x144] sm:$0xff]
        %v1037 = vld [vmem:[#allocation7 + $0x14c] sm:$0xf]
        %v1038 = vld [vmem:[#allocation7 + $0x150] sm:$0xff]
        %v1039 = vld [vmem:[#allocation7 + $0x158] sm:$0xf]
        %v1040 = vld [vmem:[#allocation7 + $0x15c] sm:$0xff]
        %v1041 = vld [vmem:[#allocation7 + $0x164] sm:$0xf]
        %v1042 = vld [vmem:[#allocation7 + $0x168] sm:$0xff]
        %v1043 = vld [vmem:[#allocation7 + $0x170] sm:$0xf]
        %v1044 = vld [vmem:[#allocation7 + $0x174] sm:$0xff]
        %v1045 = vld [vmem:[#allocation7 + $0x17c] sm:$0xf]
        %v1046 = vld [vmem:[#allocation7 + $0x180] sm:$0xff]
        %v1047 = vld [vmem:[#allocation7 + $0x188] sm:$0xf]
        %v1048 = vld [vmem:[#allocation7 + $0x18c] sm:$0xff]
        %v1049 = vld [vmem:[#allocation7 + $0x194] sm:$0xf]
        %v1050 = vld [vmem:[#allocation7 + $0x198] sm:$0xff]
        %v1051 = vld [vmem:[#allocation7 + $0x1a0] sm:$0xf]
        %v1052 = vld [vmem:[#allocation7 + $0x1a4] sm:$0xff]
        %v1053 = vld [vmem:[#allocation7 + $0x1ac] sm:$0xf]
        %v1054 = vld [vmem:[#allocation7 + $0x1b0] sm:$0xff]
        %v1055 = vld [vmem:[#allocation7 + $0x1b8] sm:$0xf]
        %v1056 = vld [vmem:[#allocation7 + $0x1bc] sm:$0xff]
        %v1057 = vld [vmem:[#allocation7 + $0x1c4] sm:$0xf]
        %v1058 = vld [vmem:[#allocation7 + $0x1c8] sm:$0xff]
        %v1059 = vld [vmem:[#allocation7 + $0x1d0] sm:$0xf]
        %v1060 = vld [vmem:[#allocation7 + $0x1d4] sm:$0xff]
        %v1061 = vld [vmem:[#allocation7 + $0x1dc] sm:$0xf]
        %v1062 = vld [vmem:[#allocation7 + $0x1e0] sm:$0xff]
        %v1063 = vld [vmem:[#allocation7 + $0x1e8] sm:$0xf]
        %v1064 = vld [vmem:[#allocation7 + $0x1ec] sm:$0xff]
        %v1065 = vld [vmem:[#allocation7 + $0x1f4] sm:$0xf]
        %v1066 = vld [vmem:[#allocation7 + $0x1f8] sm:$0xff]
        %v1067 = vld [vmem:[#allocation7 + $0x200] sm:$0xf]
        %v1068 = vld [vmem:[#allocation7 + $0x204] sm:$0xff]
        %v1069 = vld [vmem:[#allocation7 + $0x20c] sm:$0xf]
        %v1070 = vld [vmem:[#allocation7 + $0x210] sm:$0xff]
        %v1071 = vld [vmem:[#allocation7 + $0x218] sm:$0xf]
        %v1072 = vld [vmem:[#allocation7 + $0x21c] sm:$0xff]
        %v1073 = vld [vmem:[#allocation7 + $0x224] sm:$0xf]
        %v1074 = vld [vmem:[#allocation7 + $0x228] sm:$0xff]
        %v1075 = vld [vmem:[#allocation7 + $0x230] sm:$0xf]
        %v1076 = vld [vmem:[#allocation7 + $0x234] sm:$0xff]
        %v1077 = vld [vmem:[#allocation7 + $0x23c] sm:$0xf]
        %v1078 = vld [vmem:[#allocation7 + $0x240] sm:$0xff]
        %v1079 = vld [vmem:[#allocation7 + $0x248] sm:$0xf]
        %v1080 = vld [vmem:[#allocation7 + $0x24c] sm:$0xff]
        %v1081 = vld [vmem:[#allocation7 + $0x254] sm:$0xf]
        %v1082 = vld [vmem:[#allocation7 + $0x258] sm:$0xff]
        %v1083 = vld [vmem:[#allocation7 + $0x260] sm:$0xf]
        %v1084 = vld [vmem:[#allocation7 + $0x264] sm:$0xff]
        %v1085 = vld [vmem:[#allocation7 + $0x26c] sm:$0xf]
        %v1086 = vld [vmem:[#allocation7 + $0x270] sm:$0xff]
        %v1087 = vld [vmem:[#allocation7 + $0x278] sm:$0xf]
        %v1088 = vld [vmem:[#allocation7 + $0x27c] sm:$0xff]
        %v1089 = vld [vmem:[#allocation7 + $0x284] sm:$0xf]
        %v1090 = vld [vmem:[#allocation7 + $0x288] sm:$0xff]
        %v1091 = vld [vmem:[#allocation7 + $0x290] sm:$0xf]
        %v1092 = vld [vmem:[#allocation7 + $0x294] sm:$0xff]
        %v1093 = vld [vmem:[#allocation7 + $0x29c] sm:$0xf]
        %v1094 = vld [vmem:[#allocation7 + $0x2a0] sm:$0xff]
        %v1095 = vld [vmem:[#allocation7 + $0x2a8] sm:$0xf]
        %v1096 = vld [vmem:[#allocation7 + $0x2ac] sm:$0xff]
        %v1097 = vld [vmem:[#allocation7 + $0x2b4] sm:$0xf]
        %v1098 = vld [vmem:[#allocation7 + $0x2b8] sm:$0xff]
        %v1099 = vld [vmem:[#allocation7 + $0x2c0] sm:$0xf]
        %v1100 = vld [vmem:[#allocation7 + $0x2c4] sm:$0xff]
        %v1101 = vld [vmem:[#allocation7 + $0x2cc] sm:$0xf]
        %v1102 = vld [vmem:[#allocation7 + $0x2d0] sm:$0xff]
        %v1103 = vld [vmem:[#allocation7 + $0x2d8] sm:$0xf]
        %v1104 = vld [vmem:[#allocation7 + $0x2dc] sm:$0xff]
        %v1105 = vld [vmem:[#allocation7 + $0x2e4] sm:$0xf]
        %v1106 = vld [vmem:[#allocation7 + $0x2e8] sm:$0xff]
        %v1107 = vld [vmem:[#allocation7 + $0x2f0] sm:$0xf]
        %v1108 = vld [vmem:[#allocation7 + $0x2f4] sm:$0xff]
        %v1109 = vld [vmem:[#allocation7 + $0x2fc] sm:$0xf]
        %v1110 = vld [vmem:[#allocation7 + $0x300] sm:$0xff]
        %v1111 = vld [vmem:[#allocation7 + $0x308] sm:$0xf]
        %v1112 = vld [vmem:[#allocation7 + $0x30c] sm:$0xff]
        %v1113 = vld [vmem:[#allocation7 + $0x314] sm:$0xf]
        %v1114 = vld [vmem:[#allocation7 + $0x318] sm:$0xff]
        %v1115 = vld [vmem:[#allocation7 + $0x320] sm:$0xf]
        %v1116 = vld [vmem:[#allocation7 + $0x324] sm:$0xff]
        %v1117 = vld [vmem:[#allocation7 + $0x32c] sm:$0xf]
        %v1118 = vld [vmem:[#allocation7 + $0x330] sm:$0xff]
        %v1119 = vld [vmem:[#allocation7 + $0x338] sm:$0xf]
        %v1120 = vld [vmem:[#allocation7 + $0x33c] sm:$0xff]
        %v1121 = vld [vmem:[#allocation7 + $0x344] sm:$0xf]
        %v1122 = vld [vmem:[#allocation7 + $0x348] sm:$0xff]
        %v1123 = vld [vmem:[#allocation7 + $0x350] sm:$0xf]
        %v1124 = vld [vmem:[#allocation7 + $0x354] sm:$0xff]
        %v1125 = vld [vmem:[#allocation7 + $0x35c] sm:$0xf]
        %v1126 = vld [vmem:[#allocation7 + $0x360] sm:$0xff]
        %v1127 = vld [vmem:[#allocation7 + $0x368] sm:$0xf]
        %v1128 = vld [vmem:[#allocation7 + $0x36c] sm:$0xff]
        %v1129 = vld [vmem:[#allocation7 + $0x374] sm:$0xf]
        %v1130 = vld [vmem:[#allocation7 + $0x378] sm:$0xff]
        %v1131 = vld [vmem:[#allocation7 + $0x380] sm:$0xf]
        %v1132 = vld [vmem:[#allocation7 + $0x384] sm:$0xff]
        %v1133 = vld [vmem:[#allocation7 + $0x38c] sm:$0xf]
        %v1134 = vld [vmem:[#allocation7 + $0x390] sm:$0xff]
        %v1135 = vld [vmem:[#allocation7 + $0x398] sm:$0xf]
        %v1136 = vld [vmem:[#allocation7 + $0x39c] sm:$0xff]
        %v1137 = vld [vmem:[#allocation7 + $0x3a4] sm:$0xf]
        %v1138 = vld [vmem:[#allocation7 + $0x3a8] sm:$0xff]
        %v1139 = vld [vmem:[#allocation7 + $0x3b0] sm:$0xf]
        %v1140 = vld [vmem:[#allocation7 + $0x3b4] sm:$0xff]
        %v1141 = vld [vmem:[#allocation7 + $0x3bc] sm:$0xf]
        %v1142 = vld [vmem:[#allocation7 + $0x3c0] sm:$0xff]
        %v1143 = vld [vmem:[#allocation7 + $0x3c8] sm:$0xf]
        %v1144 = vld [vmem:[#allocation7 + $0x3cc] sm:$0xff]
        %v1145 = vld [vmem:[#allocation7 + $0x3d4] sm:$0xf]
        %v1146 = vld [vmem:[#allocation7 + $0x3d8] sm:$0xff]
        %v1147 = vld [vmem:[#allocation7 + $0x3e0] sm:$0xf]
        %v1148 = vld [vmem:[#allocation7 + $0x3e4] sm:$0xff]
        %v1149 = vld [vmem:[#allocation7 + $0x3ec] sm:$0xf]
        %v1150 = vld [vmem:[#allocation7 + $0x3f0] sm:$0xff]
        %v1151 = vld [vmem:[#allocation7 + $0x3f8] sm:$0xf]
        %v1152 = vld [vmem:[#allocation7 + $0x3fc] sm:$0xff]
        %v1153 = vld [vmem:[#allocation7 + $0x404] sm:$0xf]
        %v1154 = vld [vmem:[#allocation7 + $0x408] sm:$0xff]
        %v1155 = vld [vmem:[#allocation7 + $0x410] sm:$0xf]
        %v1156 = vld [vmem:[#allocation7 + $0x414] sm:$0xff]
        %v1157 = vld [vmem:[#allocation7 + $0x41c] sm:$0xf]
        %v1158 = vld [vmem:[#allocation7 + $0x420] sm:$0xff]
        %v1159 = vld [vmem:[#allocation7 + $0x428] sm:$0xf]
        %v1160 = vld [vmem:[#allocation7 + $0x42c] sm:$0xff]
        %v1161 = vld [vmem:[#allocation7 + $0x434] sm:$0xf]
        %v1162 = vld [vmem:[#allocation7 + $0x438] sm:$0xff]
        %v1163 = vld [vmem:[#allocation7 + $0x440] sm:$0xf]
        %v1164 = vld [vmem:[#allocation7 + $0x444] sm:$0xff]
        %v1165 = vld [vmem:[#allocation7 + $0x44c] sm:$0xf]
        %v1166 = vld [vmem:[#allocation7 + $0x450] sm:$0xff]
        %v1167 = vld [vmem:[#allocation7 + $0x458] sm:$0xf]
        %v1168 = vld [vmem:[#allocation7 + $0x45c] sm:$0xff]
        %v1169 = vld [vmem:[#allocation7 + $0x464] sm:$0xf]
        %v1170 = vld [vmem:[#allocation7 + $0x468] sm:$0xff]
        %v1171 = vld [vmem:[#allocation7 + $0x470] sm:$0xf]
        %v1172 = vld [vmem:[#allocation7 + $0x474] sm:$0xff]
        %v1173 = vld [vmem:[#allocation7 + $0x47c] sm:$0xf]
        %v1174 = vld [vmem:[#allocation8] sm:$0x7]
        %v1176 = vlaneseq
        %v1177 = vshrl.u32 %v1176, 7
        %v1178 = vsub.s32 0, %v1177
        %v1179 = vrot.slane %v1174, %v1178
        %v1180 = vlaneseq
        %v1181 = vshrl.u32 %v1180, 7
        %v1182 = vsub.s32 1, %v1181
        %v1183 = vrot.slane %v1174, %v1182
        %v1184 = vlaneseq
        %v1185 = vshrl.u32 %v1184, 7
        %v1186 = vsub.s32 2, %v1185
        %v1187 = vrot.slane %v1174, %v1186
        %v1383 = vunpack.c.l.b16 %v982
        %v1384 = vunpack.c.h.b16 %v982
        %v1385 = vunpack.c.l.b16 %v983
        %v1386 = vunpack.c.l.b16 %v984
        %v1387 = vunpack.c.h.b16 %v984
        %v1388 = vunpack.c.l.b16 %v985
        %v1389 = vunpack.c.l.b16 %v986
        %v1390 = vunpack.c.h.b16 %v986
        %v1391 = vunpack.c.l.b16 %v987
        %v1392 = vunpack.c.l.b16 %v988
        %v1393 = vunpack.c.h.b16 %v988
        %v1394 = vunpack.c.l.b16 %v989
        %v1395 = vunpack.c.l.b16 %v990
        %v1396 = vunpack.c.h.b16 %v990
        %v1397 = vunpack.c.l.b16 %v991
        %v1398 = vunpack.c.l.b16 %v992
        %v1399 = vunpack.c.h.b16 %v992
        %v1400 = vunpack.c.l.b16 %v993
        %v1401 = vunpack.c.l.b16 %v994
        %v1402 = vunpack.c.h.b16 %v994
        %v1403 = vunpack.c.l.b16 %v995
        %v1404 = vunpack.c.l.b16 %v996
        %v1405 = vunpack.c.h.b16 %v996
        %v1406 = vunpack.c.l.b16 %v997
        %v1407 = vunpack.c.l.b16 %v998
        %v1408 = vunpack.c.h.b16 %v998
        %v1409 = vunpack.c.l.b16 %v999
        %v1410 = vunpack.c.l.b16 %v1000
        %v1411 = vunpack.c.h.b16 %v1000
        %v1412 = vunpack.c.l.b16 %v1001
        %v1413 = vunpack.c.l.b16 %v1002
        %v1414 = vunpack.c.h.b16 %v1002
        %v1415 = vunpack.c.l.b16 %v1003
        %v1416 = vunpack.c.l.b16 %v1004
        %v1417 = vunpack.c.h.b16 %v1004
        %v1418 = vunpack.c.l.b16 %v1005
        %v1419 = vunpack.c.l.b16 %v1006
        %v1420 = vunpack.c.h.b16 %v1006
        %v1421 = vunpack.c.l.b16 %v1007
        %v1422 = vunpack.c.l.b16 %v1008
        %v1423 = vunpack.c.h.b16 %v1008
        %v1424 = vunpack.c.l.b16 %v1009
        %v1425 = vunpack.c.l.b16 %v1010
        %v1426 = vunpack.c.h.b16 %v1010
        %v1427 = vunpack.c.l.b16 %v1011
        %v1428 = vunpack.c.l.b16 %v1012
        %v1429 = vunpack.c.h.b16 %v1012
        %v1430 = vunpack.c.l.b16 %v1013
        %v1431 = vunpack.c.l.b16 %v1014
        %v1432 = vunpack.c.h.b16 %v1014
        %v1433 = vunpack.c.l.b16 %v1015
        %v1434 = vunpack.c.l.b16 %v1016
        %v1435 = vunpack.c.h.b16 %v1016
        %v1436 = vunpack.c.l.b16 %v1017
        %v1437 = vunpack.c.l.b16 %v1018
        %v1438 = vunpack.c.h.b16 %v1018
        %v1439 = vunpack.c.l.b16 %v1019
        %v1440 = vunpack.c.l.b16 %v1020
        %v1441 = vunpack.c.h.b16 %v1020
        %v1442 = vunpack.c.l.b16 %v1021
        %v1443 = vunpack.c.l.b16 %v1022
        %v1444 = vunpack.c.h.b16 %v1022
        %v1445 = vunpack.c.l.b16 %v1023
        %v1446 = vunpack.c.l.b16 %v1024
        %v1447 = vunpack.c.h.b16 %v1024
        %v1448 = vunpack.c.l.b16 %v1025
        %v1449 = vunpack.c.l.b16 %v1026
        %v1450 = vunpack.c.h.b16 %v1026
        %v1451 = vunpack.c.l.b16 %v1027
        %v1452 = vunpack.c.l.b16 %v1028
        %v1453 = vunpack.c.h.b16 %v1028
        %v1454 = vunpack.c.l.b16 %v1029
        %v1455 = vunpack.c.l.b16 %v1030
        %v1456 = vunpack.c.h.b16 %v1030
        %v1457 = vunpack.c.l.b16 %v1031
        %v1458 = vunpack.c.l.b16 %v1032
        %v1459 = vunpack.c.h.b16 %v1032
        %v1460 = vunpack.c.l.b16 %v1033
        %v1461 = vunpack.c.l.b16 %v1034
        %v1462 = vunpack.c.h.b16 %v1034
        %v1463 = vunpack.c.l.b16 %v1035
        %v1464 = vunpack.c.l.b16 %v1036
        %v1465 = vunpack.c.h.b16 %v1036
        %v1466 = vunpack.c.l.b16 %v1037
        %v1467 = vunpack.c.l.b16 %v1038
        %v1468 = vunpack.c.h.b16 %v1038
        %v1469 = vunpack.c.l.b16 %v1039
        %v1470 = vunpack.c.l.b16 %v1040
        %v1471 = vunpack.c.h.b16 %v1040
        %v1472 = vunpack.c.l.b16 %v1041
        %v1473 = vunpack.c.l.b16 %v1042
        %v1474 = vunpack.c.h.b16 %v1042
        %v1475 = vunpack.c.l.b16 %v1043
        %v1476 = vunpack.c.l.b16 %v1044
        %v1477 = vunpack.c.h.b16 %v1044
        %v1478 = vunpack.c.l.b16 %v1045
        %v1479 = vunpack.c.l.b16 %v1046
        %v1480 = vunpack.c.h.b16 %v1046
        %v1481 = vunpack.c.l.b16 %v1047
        %v1482 = vunpack.c.l.b16 %v1048
        %v1483 = vunpack.c.h.b16 %v1048
        %v1484 = vunpack.c.l.b16 %v1049
        %v1485 = vunpack.c.l.b16 %v1050
        %v1486 = vunpack.c.h.b16 %v1050
        %v1487 = vunpack.c.l.b16 %v1051
        %v1488 = vunpack.c.l.b16 %v1052
        %v1489 = vunpack.c.h.b16 %v1052
        %v1490 = vunpack.c.l.b16 %v1053
        %v1491 = vunpack.c.l.b16 %v1054
        %v1492 = vunpack.c.h.b16 %v1054
        %v1493 = vunpack.c.l.b16 %v1055
        %v1494 = vunpack.c.l.b16 %v1056
        %v1495 = vunpack.c.h.b16 %v1056
        %v1496 = vunpack.c.l.b16 %v1057
        %v1497 = vunpack.c.l.b16 %v1058
        %v1498 = vunpack.c.h.b16 %v1058
        %v1499 = vunpack.c.l.b16 %v1059
        %v1500 = vunpack.c.l.b16 %v1060
        %v1501 = vunpack.c.h.b16 %v1060
        %v1502 = vunpack.c.l.b16 %v1061
        %v1503 = vunpack.c.l.b16 %v1062
        %v1504 = vunpack.c.h.b16 %v1062
        %v1505 = vunpack.c.l.b16 %v1063
        %v1506 = vunpack.c.l.b16 %v1064
        %v1507 = vunpack.c.h.b16 %v1064
        %v1508 = vunpack.c.l.b16 %v1065
        %v1509 = vunpack.c.l.b16 %v1066
        %v1510 = vunpack.c.h.b16 %v1066
        %v1511 = vunpack.c.l.b16 %v1067
        %v1512 = vunpack.c.l.b16 %v1068
        %v1513 = vunpack.c.h.b16 %v1068
        %v1514 = vunpack.c.l.b16 %v1069
        %v1515 = vunpack.c.l.b16 %v1070
        %v1516 = vunpack.c.h.b16 %v1070
        %v1517 = vunpack.c.l.b16 %v1071
        %v1518 = vunpack.c.l.b16 %v1072
        %v1519 = vunpack.c.h.b16 %v1072
        %v1520 = vunpack.c.l.b16 %v1073
        %v1521 = vunpack.c.l.b16 %v1074
        %v1522 = vunpack.c.h.b16 %v1074
        %v1523 = vunpack.c.l.b16 %v1075
        %v1524 = vunpack.c.l.b16 %v1076
        %v1525 = vunpack.c.h.b16 %v1076
        %v1526 = vunpack.c.l.b16 %v1077
        %v1527 = vunpack.c.l.b16 %v1078
        %v1528 = vunpack.c.h.b16 %v1078
        %v1529 = vunpack.c.l.b16 %v1079
        %v1530 = vunpack.c.l.b16 %v1080
        %v1531 = vunpack.c.h.b16 %v1080
        %v1532 = vunpack.c.l.b16 %v1081
        %v1533 = vunpack.c.l.b16 %v1082
        %v1534 = vunpack.c.h.b16 %v1082
        %v1535 = vunpack.c.l.b16 %v1083
        %v1536 = vunpack.c.l.b16 %v1084
        %v1537 = vunpack.c.h.b16 %v1084
        %v1538 = vunpack.c.l.b16 %v1085
        %v1539 = vunpack.c.l.b16 %v1086
        %v1540 = vunpack.c.h.b16 %v1086
        %v1541 = vunpack.c.l.b16 %v1087
        %v1542 = vunpack.c.l.b16 %v1088
        %v1543 = vunpack.c.h.b16 %v1088
        %v1544 = vunpack.c.l.b16 %v1089
        %v1545 = vunpack.c.l.b16 %v1090
        %v1546 = vunpack.c.h.b16 %v1090
        %v1547 = vunpack.c.l.b16 %v1091
        %v1548 = vunpack.c.l.b16 %v1092
        %v1549 = vunpack.c.h.b16 %v1092
        %v1550 = vunpack.c.l.b16 %v1093
        %v1551 = vunpack.c.l.b16 %v1094
        %v1552 = vunpack.c.h.b16 %v1094
        %v1553 = vunpack.c.l.b16 %v1095
        %v1554 = vunpack.c.l.b16 %v1096
        %v1555 = vunpack.c.h.b16 %v1096
        %v1556 = vunpack.c.l.b16 %v1097
        %v1557 = vunpack.c.l.b16 %v1098
        %v1558 = vunpack.c.h.b16 %v1098
        %v1559 = vunpack.c.l.b16 %v1099
        %v1560 = vunpack.c.l.b16 %v1100
        %v1561 = vunpack.c.h.b16 %v1100
        %v1562 = vunpack.c.l.b16 %v1101
        %v1563 = vunpack.c.l.b16 %v1102
        %v1564 = vunpack.c.h.b16 %v1102
        %v1565 = vunpack.c.l.b16 %v1103
        %v1566 = vunpack.c.l.b16 %v1104
        %v1567 = vunpack.c.h.b16 %v1104
        %v1568 = vunpack.c.l.b16 %v1105
        %v1569 = vunpack.c.l.b16 %v1106
        %v1570 = vunpack.c.h.b16 %v1106
        %v1571 = vunpack.c.l.b16 %v1107
        %v1572 = vunpack.c.l.b16 %v1108
        %v1573 = vunpack.c.h.b16 %v1108
        %v1574 = vunpack.c.l.b16 %v1109
        %v1575 = vunpack.c.l.b16 %v1110
        %v1576 = vunpack.c.h.b16 %v1110
        %v1577 = vunpack.c.l.b16 %v1111
        %v1578 = vunpack.c.l.b16 %v1112
        %v1579 = vunpack.c.h.b16 %v1112
        %v1580 = vunpack.c.l.b16 %v1113
        %v1581 = vunpack.c.l.b16 %v1114
        %v1582 = vunpack.c.h.b16 %v1114
        %v1583 = vunpack.c.l.b16 %v1115
        %v1584 = vunpack.c.l.b16 %v1116
        %v1585 = vunpack.c.h.b16 %v1116
        %v1586 = vunpack.c.l.b16 %v1117
        %v1587 = vunpack.c.l.b16 %v1118
        %v1588 = vunpack.c.h.b16 %v1118
        %v1589 = vunpack.c.l.b16 %v1119
        %v1590 = vunpack.c.l.b16 %v1120
        %v1591 = vunpack.c.h.b16 %v1120
        %v1592 = vunpack.c.l.b16 %v1121
        %v1593 = vunpack.c.l.b16 %v1122
        %v1594 = vunpack.c.h.b16 %v1122
        %v1595 = vunpack.c.l.b16 %v1123
        %v1596 = vunpack.c.l.b16 %v1124
        %v1597 = vunpack.c.h.b16 %v1124
        %v1598 = vunpack.c.l.b16 %v1125
        %v1599 = vunpack.c.l.b16 %v1126
        %v1600 = vunpack.c.h.b16 %v1126
        %v1601 = vunpack.c.l.b16 %v1127
        %v1602 = vunpack.c.l.b16 %v1128
        %v1603 = vunpack.c.h.b16 %v1128
        %v1604 = vunpack.c.l.b16 %v1129
        %v1605 = vunpack.c.l.b16 %v1130
        %v1606 = vunpack.c.h.b16 %v1130
        %v1607 = vunpack.c.l.b16 %v1131
        %v1608 = vunpack.c.l.b16 %v1132
        %v1609 = vunpack.c.h.b16 %v1132
        %v1610 = vunpack.c.l.b16 %v1133
        %v1611 = vunpack.c.l.b16 %v1134
        %v1612 = vunpack.c.h.b16 %v1134
        %v1613 = vunpack.c.l.b16 %v1135
        %v1614 = vunpack.c.l.b16 %v1136
        %v1615 = vunpack.c.h.b16 %v1136
        %v1616 = vunpack.c.l.b16 %v1137
        %v1617 = vunpack.c.l.b16 %v1138
        %v1618 = vunpack.c.h.b16 %v1138
        %v1619 = vunpack.c.l.b16 %v1139
        %v1620 = vunpack.c.l.b16 %v1140
        %v1621 = vunpack.c.h.b16 %v1140
        %v1622 = vunpack.c.l.b16 %v1141
        %v1623 = vunpack.c.l.b16 %v1142
        %v1624 = vunpack.c.h.b16 %v1142
        %v1625 = vunpack.c.l.b16 %v1143
        %v1626 = vunpack.c.l.b16 %v1144
        %v1627 = vunpack.c.h.b16 %v1144
        %v1628 = vunpack.c.l.b16 %v1145
        %v1629 = vunpack.c.l.b16 %v1146
        %v1630 = vunpack.c.h.b16 %v1146
        %v1631 = vunpack.c.l.b16 %v1147
        %v1632 = vunpack.c.l.b16 %v1148
        %v1633 = vunpack.c.h.b16 %v1148
        %v1634 = vunpack.c.l.b16 %v1149
        %v1635 = vunpack.c.l.b16 %v1150
        %v1636 = vunpack.c.h.b16 %v1150
        %v1637 = vunpack.c.l.b16 %v1151
        %v1638 = vunpack.c.l.b16 %v1152
        %v1639 = vunpack.c.h.b16 %v1152
        %v1640 = vunpack.c.l.b16 %v1153
        %v1641 = vunpack.c.l.b16 %v1154
        %v1642 = vunpack.c.h.b16 %v1154
        %v1643 = vunpack.c.l.b16 %v1155
        %v1644 = vunpack.c.l.b16 %v1156
        %v1645 = vunpack.c.h.b16 %v1156
        %v1646 = vunpack.c.l.b16 %v1157
        %v1647 = vunpack.c.l.b16 %v1158
        %v1648 = vunpack.c.h.b16 %v1158
        %v1649 = vunpack.c.l.b16 %v1159
        %v1650 = vunpack.c.l.b16 %v1160
        %v1651 = vunpack.c.h.b16 %v1160
        %v1652 = vunpack.c.l.b16 %v1161
        %v1653 = vunpack.c.l.b16 %v1162
        %v1654 = vunpack.c.h.b16 %v1162
        %v1655 = vunpack.c.l.b16 %v1163
        %v1656 = vunpack.c.l.b16 %v1164
        %v1657 = vunpack.c.h.b16 %v1164
        %v1658 = vunpack.c.l.b16 %v1165
        %v1659 = vunpack.c.l.b16 %v1166
        %v1660 = vunpack.c.h.b16 %v1166
        %v1661 = vunpack.c.l.b16 %v1167
        %v1662 = vunpack.c.l.b16 %v1168
        %v1663 = vunpack.c.h.b16 %v1168
        %v1664 = vunpack.c.l.b16 %v1169
        %v1665 = vunpack.c.l.b16 %v1170
        %v1666 = vunpack.c.h.b16 %v1170
        %v1667 = vunpack.c.l.b16 %v1171
        %v1668 = vunpack.c.l.b16 %v1172
        %v1669 = vunpack.c.h.b16 %v1172
        %v1670 = vunpack.c.l.b16 %v1173
        %v1671 = vpack.c.b16 %v1386, %v1383
        %v1672 = vpack.c.b16 %v1387, %v1384
        %v1673 = vpack.c.b16 %v1388, %v1385
        %v1674 = vpack.c.b16 %v1392, %v1389
        %v1675 = vpack.c.b16 %v1393, %v1390
        %v1676 = vpack.c.b16 %v1394, %v1391
        %v1677 = vpack.c.b16 %v1398, %v1395
        %v1678 = vpack.c.b16 %v1399, %v1396
        %v1679 = vpack.c.b16 %v1400, %v1397
        %v1680 = vpack.c.b16 %v1404, %v1401
        %v1681 = vpack.c.b16 %v1405, %v1402
        %v1682 = vpack.c.b16 %v1406, %v1403
        %v1683 = vpack.c.b16 %v1410, %v1407
        %v1684 = vpack.c.b16 %v1411, %v1408
        %v1685 = vpack.c.b16 %v1412, %v1409
        %v1686 = vpack.c.b16 %v1416, %v1413
        %v1687 = vpack.c.b16 %v1417, %v1414
        %v1688 = vpack.c.b16 %v1418, %v1415
        %v1689 = vpack.c.b16 %v1422, %v1419
        %v1690 = vpack.c.b16 %v1423, %v1420
        %v1691 = vpack.c.b16 %v1424, %v1421
        %v1692 = vpack.c.b16 %v1428, %v1425
        %v1693 = vpack.c.b16 %v1429, %v1426
        %v1694 = vpack.c.b16 %v1430, %v1427
        %v1695 = vpack.c.b16 %v1434, %v1431
        %v1696 = vpack.c.b16 %v1435, %v1432
        %v1697 = vpack.c.b16 %v1436, %v1433
        %v1698 = vpack.c.b16 %v1440, %v1437
        %v1699 = vpack.c.b16 %v1441, %v1438
        %v1700 = vpack.c.b16 %v1442, %v1439
        %v1701 = vpack.c.b16 %v1446, %v1443
        %v1702 = vpack.c.b16 %v1447, %v1444
        %v1703 = vpack.c.b16 %v1448, %v1445
        %v1704 = vpack.c.b16 %v1452, %v1449
        %v1705 = vpack.c.b16 %v1453, %v1450
        %v1706 = vpack.c.b16 %v1454, %v1451
        %v1707 = vpack.c.b16 %v1458, %v1455
        %v1708 = vpack.c.b16 %v1459, %v1456
        %v1709 = vpack.c.b16 %v1460, %v1457
        %v1710 = vpack.c.b16 %v1464, %v1461
        %v1711 = vpack.c.b16 %v1465, %v1462
        %v1712 = vpack.c.b16 %v1466, %v1463
        %v1713 = vpack.c.b16 %v1470, %v1467
        %v1714 = vpack.c.b16 %v1471, %v1468
        %v1715 = vpack.c.b16 %v1472, %v1469
        %v1716 = vpack.c.b16 %v1476, %v1473
        %v1717 = vpack.c.b16 %v1477, %v1474
        %v1718 = vpack.c.b16 %v1478, %v1475
        %v1719 = vpack.c.b16 %v1482, %v1479
        %v1720 = vpack.c.b16 %v1483, %v1480
        %v1721 = vpack.c.b16 %v1484, %v1481
        %v1722 = vpack.c.b16 %v1488, %v1485
        %v1723 = vpack.c.b16 %v1489, %v1486
        %v1724 = vpack.c.b16 %v1490, %v1487
        %v1725 = vpack.c.b16 %v1494, %v1491
        %v1726 = vpack.c.b16 %v1495, %v1492
        %v1727 = vpack.c.b16 %v1496, %v1493
        %v1728 = vpack.c.b16 %v1500, %v1497
        %v1729 = vpack.c.b16 %v1501, %v1498
        %v1730 = vpack.c.b16 %v1502, %v1499
        %v1731 = vpack.c.b16 %v1506, %v1503
        %v1732 = vpack.c.b16 %v1507, %v1504
        %v1733 = vpack.c.b16 %v1508, %v1505
        %v1734 = vpack.c.b16 %v1512, %v1509
        %v1735 = vpack.c.b16 %v1513, %v1510
        %v1736 = vpack.c.b16 %v1514, %v1511
        %v1737 = vpack.c.b16 %v1518, %v1515
        %v1738 = vpack.c.b16 %v1519, %v1516
        %v1739 = vpack.c.b16 %v1520, %v1517
        %v1740 = vpack.c.b16 %v1524, %v1521
        %v1741 = vpack.c.b16 %v1525, %v1522
        %v1742 = vpack.c.b16 %v1526, %v1523
        %v1743 = vpack.c.b16 %v1530, %v1527
        %v1744 = vpack.c.b16 %v1531, %v1528
        %v1745 = vpack.c.b16 %v1532, %v1529
        %v1746 = vpack.c.b16 %v1536, %v1533
        %v1747 = vpack.c.b16 %v1537, %v1534
        %v1748 = vpack.c.b16 %v1538, %v1535
        %v1749 = vpack.c.b16 %v1542, %v1539
        %v1750 = vpack.c.b16 %v1543, %v1540
        %v1751 = vpack.c.b16 %v1544, %v1541
        %v1752 = vpack.c.b16 %v1548, %v1545
        %v1753 = vpack.c.b16 %v1549, %v1546
        %v1754 = vpack.c.b16 %v1550, %v1547
        %v1755 = vpack.c.b16 %v1554, %v1551
        %v1756 = vpack.c.b16 %v1555, %v1552
        %v1757 = vpack.c.b16 %v1556, %v1553
        %v1758 = vpack.c.b16 %v1560, %v1557
        %v1759 = vpack.c.b16 %v1561, %v1558
        %v1760 = vpack.c.b16 %v1562, %v1559
        %v1761 = vpack.c.b16 %v1566, %v1563
        %v1762 = vpack.c.b16 %v1567, %v1564
        %v1763 = vpack.c.b16 %v1568, %v1565
        %v1764 = vpack.c.b16 %v1572, %v1569
        %v1765 = vpack.c.b16 %v1573, %v1570
        %v1766 = vpack.c.b16 %v1574, %v1571
        %v1767 = vpack.c.b16 %v1578, %v1575
        %v1768 = vpack.c.b16 %v1579, %v1576
        %v1769 = vpack.c.b16 %v1580, %v1577
        %v1770 = vpack.c.b16 %v1584, %v1581
        %v1771 = vpack.c.b16 %v1585, %v1582
        %v1772 = vpack.c.b16 %v1586, %v1583
        %v1773 = vpack.c.b16 %v1590, %v1587
        %v1774 = vpack.c.b16 %v1591, %v1588
        %v1775 = vpack.c.b16 %v1592, %v1589
        %v1776 = vpack.c.b16 %v1596, %v1593
        %v1777 = vpack.c.b16 %v1597, %v1594
        %v1778 = vpack.c.b16 %v1598, %v1595
        %v1779 = vpack.c.b16 %v1602, %v1599
        %v1780 = vpack.c.b16 %v1603, %v1600
        %v1781 = vpack.c.b16 %v1604, %v1601
        %v1782 = vpack.c.b16 %v1608, %v1605
        %v1783 = vpack.c.b16 %v1609, %v1606
        %v1784 = vpack.c.b16 %v1610, %v1607
        %v1785 = vpack.c.b16 %v1614, %v1611
        %v1786 = vpack.c.b16 %v1615, %v1612
        %v1787 = vpack.c.b16 %v1616, %v1613
        %v1788 = vpack.c.b16 %v1620, %v1617
        %v1789 = vpack.c.b16 %v1621, %v1618
        %v1790 = vpack.c.b16 %v1622, %v1619
        %v1791 = vpack.c.b16 %v1626, %v1623
        %v1792 = vpack.c.b16 %v1627, %v1624
        %v1793 = vpack.c.b16 %v1628, %v1625
        %v1794 = vpack.c.b16 %v1632, %v1629
        %v1795 = vpack.c.b16 %v1633, %v1630
        %v1796 = vpack.c.b16 %v1634, %v1631
        %v1797 = vpack.c.b16 %v1638, %v1635
        %v1798 = vpack.c.b16 %v1639, %v1636
        %v1799 = vpack.c.b16 %v1640, %v1637
        %v1800 = vpack.c.b16 %v1644, %v1641
        %v1801 = vpack.c.b16 %v1645, %v1642
        %v1802 = vpack.c.b16 %v1646, %v1643
        %v1803 = vpack.c.b16 %v1650, %v1647
        %v1804 = vpack.c.b16 %v1651, %v1648
        %v1805 = vpack.c.b16 %v1652, %v1649
        %v1806 = vpack.c.b16 %v1656, %v1653
        %v1807 = vpack.c.b16 %v1657, %v1654
        %v1808 = vpack.c.b16 %v1658, %v1655
        %v1809 = vpack.c.b16 %v1662, %v1659
        %v1810 = vpack.c.b16 %v1663, %v1660
        %v1811 = vpack.c.b16 %v1664, %v1661
        %v1812 = vpack.c.b16 %v1668, %v1665
        %v1813 = vpack.c.b16 %v1669, %v1666
        %v1814 = vpack.c.b16 %v1670, %v1667
        %1959 = vmatprep.subr.bf16.mxu0 %v1672
        %1960 = vmatpush1.bf16.msra.mxu0 %v1671
        %1961 = vmatprep.subr.bf16.mxu0 %v1675
        %1962 = vmatpush1.bf16.msra.mxu0 %v1674
        %1963 = vmatprep.subr.bf16.mxu0 %v1678
        %1964 = vmatpush1.bf16.msra.mxu0 %v1677
        %1965 = vmatprep.subr.bf16.mxu0 %v1681
        %1966 = vmatpush1.bf16.msra.mxu0 %v1680
        %1967 = vmatprep.subr.bf16.mxu0 %v1684
        %1968 = vmatpush1.bf16.msra.mxu0 %v1683
        %1969 = vmatprep.subr.bf16.mxu0 %v1687
        %1970 = vmatpush1.bf16.msra.mxu0 %v1686
        %1971 = vmatprep.subr.bf16.mxu0 %v1690
        %1972 = vmatpush1.bf16.msra.mxu0 %v1689
        %1973 = vmatprep.subr.bf16.mxu0 %v1693
        %1974 = vmatpush1.bf16.msra.mxu0 %v1692
        %1975 = vmatprep.subr.bf16.mxu0 %v1696
        %1976 = vmatpush1.bf16.msra.mxu0 %v1695
        %1977 = vmatprep.subr.bf16.mxu0 %v1699
        %1978 = vmatpush1.bf16.msra.mxu0 %v1698
        %1979 = vmatprep.subr.bf16.mxu0 %v1702
        %1980 = vmatpush1.bf16.msra.mxu0 %v1701
        %1981 = vmatprep.subr.bf16.mxu0 %v1705
        %1982 = vmatpush1.bf16.msra.mxu0 %v1704
        %1983 = vmatprep.subr.bf16.mxu0 %v1708
        %1984 = vmatpush1.bf16.msra.mxu0 %v1707
        %1985 = vmatprep.subr.bf16.mxu0 %v1711
        %1986 = vmatpush1.bf16.msra.mxu0 %v1710
        %1987 = vmatprep.subr.bf16.mxu0 %v1714
        %1988 = vmatpush1.bf16.msra.mxu0 %v1713
        %1989 = vmatprep.subr.bf16.mxu0 %v1717
        %1990 = vmatpush1.bf16.msra.mxu0 %v1716
        %1991 = vmatprep.mubr.bf16.mxu0 %v977
        %1992 = vmatmul.mubr.bf16.gmra.mrb[0].mxu0 %v976
        %v1993 = vpop.f32.mrb[0].mxu0
        %v1994 = vadd.f32 %v1179, %v1993
        %v1995 = vpop.f32.mrb[0].mxu0
        %v1996 = vadd.f32 %v1183, %v1995
        %v1997 = vpop.f32.mrb[0].mxu0
        %v1998 = vadd.f32 %v1179, %v1997
        %v1999 = vpop.f32.mrb[0].mxu0
        %v2000 = vadd.f32 %v1183, %v1999
        %2001 = vdwg.mxu0
        %2002 = vmatprep.subr.bf16.mxu0 %v1720
        %2003 = vmatpush1.bf16.msra.mxu0 %v1719
        %2004 = vmatprep.subr.bf16.mxu0 %v1723
        %2005 = vmatpush1.bf16.msra.mxu0 %v1722
        %2006 = vmatprep.subr.bf16.mxu0 %v1726
        %2007 = vmatpush1.bf16.msra.mxu0 %v1725
        %2008 = vmatprep.subr.bf16.mxu0 %v1729
        %2009 = vmatpush1.bf16.msra.mxu0 %v1728
        %2010 = vmatprep.subr.bf16.mxu0 %v1732
        %2011 = vmatpush1.bf16.msra.mxu0 %v1731
        %2012 = vmatprep.subr.bf16.mxu0 %v1735
        %2013 = vmatpush1.bf16.msra.mxu0 %v1734
        %2014 = vmatprep.subr.bf16.mxu0 %v1738
        %2015 = vmatpush1.bf16.msra.mxu0 %v1737
        %2016 = vmatprep.subr.bf16.mxu0 %v1741
        %2017 = vmatpush1.bf16.msra.mxu0 %v1740
        %2018 = vmatprep.subr.bf16.mxu0 %v1744
        %2019 = vmatpush1.bf16.msra.mxu0 %v1743
        %2020 = vmatprep.subr.bf16.mxu0 %v1747
        %2021 = vmatpush1.bf16.msra.mxu0 %v1746
        %2022 = vmatprep.subr.bf16.mxu0 %v1750
        %2023 = vmatpush1.bf16.msra.mxu0 %v1749
        %2024 = vmatprep.subr.bf16.mxu0 %v1753
        %2025 = vmatpush1.bf16.msra.mxu0 %v1752
        %2026 = vmatprep.subr.bf16.mxu0 %v1756
        %2027 = vmatpush1.bf16.msra.mxu0 %v1755
        %2028 = vmatprep.subr.bf16.mxu0 %v1759
        %2029 = vmatpush1.bf16.msra.mxu0 %v1758
        %2030 = vmatprep.subr.bf16.mxu0 %v1762
        %2031 = vmatpush1.bf16.msra.mxu0 %v1761
        %2032 = vmatprep.subr.bf16.mxu0 %v1765
        %2033 = vmatpush1.bf16.msra.mxu0 %v1764
        %2034 = vmatprep.mubr.bf16.mxu0 %v979
        %2035 = vmatmul.mubr.bf16.gmra.mrb[0].mxu0 %v978
        %v2036 = vpop.f32.mrb[0].mxu0
        %v2037 = vadd.f32 %v1994, %v2036
        %v2038 = vpop.f32.mrb[0].mxu0
        %v2039 = vadd.f32 %v1996, %v2038
        %v2040 = vpop.f32.mrb[0].mxu0
        %v2041 = vadd.f32 %v1998, %v2040
        %v2042 = vpop.f32.mrb[0].mxu0
        %v2043 = vadd.f32 %v2000, %v2042
        %2044 = vdwg.mxu0
        %2045 = vmatprep.subr.bf16.mxu0 %v1768
        %2046 = vmatpush1.bf16.msra.mxu0 %v1767
        %2047 = vmatprep.subr.bf16.mxu0 %v1771
        %2048 = vmatpush1.bf16.msra.mxu0 %v1770
        %2049 = vmatprep.subr.bf16.mxu0 %v1774
        %2050 = vmatpush1.bf16.msra.mxu0 %v1773
        %2051 = vmatprep.subr.bf16.mxu0 %v1777
        %2052 = vmatpush1.bf16.msra.mxu0 %v1776
        %2053 = vmatprep.subr.bf16.mxu0 %v1780
        %2054 = vmatpush1.bf16.msra.mxu0 %v1779
        %2055 = vmatprep.subr.bf16.mxu0 %v1783
        %2056 = vmatpush1.bf16.msra.mxu0 %v1782
        %2057 = vmatprep.subr.bf16.mxu0 %v1786
        %2058 = vmatpush1.bf16.msra.mxu0 %v1785
        %2059 = vmatprep.subr.bf16.mxu0 %v1789
        %2060 = vmatpush1.bf16.msra.mxu0 %v1788
        %2061 = vmatprep.subr.bf16.mxu0 %v1792
        %2062 = vmatpush1.bf16.msra.mxu0 %v1791
        %2063 = vmatprep.subr.bf16.mxu0 %v1795
        %2064 = vmatpush1.bf16.msra.mxu0 %v1794
        %2065 = vmatprep.subr.bf16.mxu0 %v1798
        %2066 = vmatpush1.bf16.msra.mxu0 %v1797
        %2067 = vmatprep.subr.bf16.mxu0 %v1801
        %2068 = vmatpush1.bf16.msra.mxu0 %v1800
        %2069 = vmatprep.subr.bf16.mxu0 %v1804
        %2070 = vmatpush1.bf16.msra.mxu0 %v1803
        %2071 = vmatprep.subr.bf16.mxu0 %v1807
        %2072 = vmatpush1.bf16.msra.mxu0 %v1806
        %2073 = vmatprep.subr.bf16.mxu0 %v1810
        %2074 = vmatpush1.bf16.msra.mxu0 %v1809
        %2075 = vmatprep.subr.bf16.mxu0 %v1813
        %2076 = vmatpush1.bf16.msra.mxu0 %v1812
        %2077 = vmatprep.mubr.bf16.mxu0 %v981
        %2078 = vmatmul.mubr.bf16.gmra.mrb[0].mxu0 %v980
        %v2079 = vpop.f32.mrb[0].mxu0
        %v2080 = vadd.f32 %v2037, %v2079
        %v2081 = vpop.f32.mrb[0].mxu0
        %v2082 = vadd.f32 %v2039, %v2081
        %v2083 = vpop.f32.mrb[0].mxu0
        %v2084 = vadd.f32 %v2041, %v2083
        %v2085 = vpop.f32.mrb[0].mxu0
        %v2086 = vadd.f32 %v2043, %v2085
        %2087 = vdwg.mxu0
        %2088 = vmatprep.subr.bf16.mxu0 0
        %2089 = vmatpush1.bf16.msra.mxu0 %v1673
        %2090 = vmatprep.subr.bf16.mxu0 0
        %2091 = vmatpush1.bf16.msra.mxu0 %v1676
        %2092 = vmatprep.subr.bf16.mxu0 0
        %2093 = vmatpush1.bf16.msra.mxu0 %v1679
        %2094 = vmatprep.subr.bf16.mxu0 0
        %2095 = vmatpush1.bf16.msra.mxu0 %v1682
        %2096 = vmatprep.subr.bf16.mxu0 0
        %2097 = vmatpush1.bf16.msra.mxu0 %v1685
        %2098 = vmatprep.subr.bf16.mxu0 0
        %2099 = vmatpush1.bf16.msra.mxu0 %v1688
        %2100 = vmatprep.subr.bf16.mxu0 0
        %2101 = vmatpush1.bf16.msra.mxu0 %v1691
        %2102 = vmatprep.subr.bf16.mxu0 0
        %2103 = vmatpush1.bf16.msra.mxu0 %v1694
        %2104 = vmatprep.subr.bf16.mxu0 0
        %2105 = vmatpush1.bf16.msra.mxu0 %v1697
        %2106 = vmatprep.subr.bf16.mxu0 0
        %2107 = vmatpush1.bf16.msra.mxu0 %v1700
        %2108 = vmatprep.subr.bf16.mxu0 0
        %2109 = vmatpush1.bf16.msra.mxu0 %v1703
        %2110 = vmatprep.subr.bf16.mxu0 0
        %2111 = vmatpush1.bf16.msra.mxu0 %v1706
        %2112 = vmatprep.subr.bf16.mxu0 0
        %2113 = vmatpush1.bf16.msra.mxu0 %v1709
        %2114 = vmatprep.subr.bf16.mxu0 0
        %2115 = vmatpush1.bf16.msra.mxu0 %v1712
        %2116 = vmatprep.subr.bf16.mxu0 0
        %2117 = vmatpush1.bf16.msra.mxu0 %v1715
        %2118 = vmatprep.subr.bf16.mxu0 0
        %2119 = vmatpush1.bf16.msra.mxu0 %v1718
        %2120 = vmatprep.mubr.bf16.mxu0 %v977
        %2121 = vmatmul.mubr.bf16.gmra.mrb[0].mxu0 %v976
        %v2122 = vpop.f32.mrb[0].mxu0
        %v2123 = vadd.f32 %v1187, %v2122
        %v2124 = vpop.f32.mrb[0].mxu0
        %v2125 = vpop.f32.mrb[0].mxu0
        %v2126 = vadd.f32 %v1187, %v2125
        %v2127 = vpop.f32.mrb[0].mxu0
        %2128 = vdwg.mxu0
        %2129 = vmatprep.subr.bf16.mxu0 0
        %2130 = vmatpush1.bf16.msra.mxu0 %v1721
        %2131 = vmatprep.subr.bf16.mxu0 0
        %2132 = vmatpush1.bf16.msra.mxu0 %v1724
        %2133 = vmatprep.subr.bf16.mxu0 0
        %2134 = vmatpush1.bf16.msra.mxu0 %v1727
        %2135 = vmatprep.subr.bf16.mxu0 0
        %2136 = vmatpush1.bf16.msra.mxu0 %v1730
        %2137 = vmatprep.subr.bf16.mxu0 0
        %2138 = vmatpush1.bf16.msra.mxu0 %v1733
        %2139 = vmatprep.subr.bf16.mxu0 0
        %2140 = vmatpush1.bf16.msra.mxu0 %v1736
        %2141 = vmatprep.subr.bf16.mxu0 0
        %2142 = vmatpush1.bf16.msra.mxu0 %v1739
        %2143 = vmatprep.subr.bf16.mxu0 0
        %2144 = vmatpush1.bf16.msra.mxu0 %v1742
        %2145 = vmatprep.subr.bf16.mxu0 0
        %2146 = vmatpush1.bf16.msra.mxu0 %v1745
        %2147 = vmatprep.subr.bf16.mxu0 0
        %2148 = vmatpush1.bf16.msra.mxu0 %v1748
        %2149 = vmatprep.subr.bf16.mxu0 0
        %2150 = vmatpush1.bf16.msra.mxu0 %v1751
        %2151 = vmatprep.subr.bf16.mxu0 0
        %2152 = vmatpush1.bf16.msra.mxu0 %v1754
        %2153 = vmatprep.subr.bf16.mxu0 0
        %2154 = vmatpush1.bf16.msra.mxu0 %v1757
        %2155 = vmatprep.subr.bf16.mxu0 0
        %2156 = vmatpush1.bf16.msra.mxu0 %v1760
        %2157 = vmatprep.subr.bf16.mxu0 0
        %2158 = vmatpush1.bf16.msra.mxu0 %v1763
        %2159 = vmatprep.subr.bf16.mxu0 0
        %2160 = vmatpush1.bf16.msra.mxu0 %v1766
        %2161 = vmatprep.mubr.bf16.mxu0 %v979
        %2162 = vmatmul.mubr.bf16.gmra.mrb[0].mxu0 %v978
        %v2163 = vpop.f32.mrb[0].mxu0
        %v2164 = vadd.f32 %v2123, %v2163
        %v2165 = vpop.f32.mrb[0].mxu0
        %v2166 = vpop.f32.mrb[0].mxu0
        %v2167 = vadd.f32 %v2126, %v2166
        %v2168 = vpop.f32.mrb[0].mxu0
        %2169 = vdwg.mxu0
        %2170 = vmatprep.subr.bf16.mxu0 0
        %2171 = vmatpush1.bf16.msra.mxu0 %v1769
        %2172 = vmatprep.subr.bf16.mxu0 0
        %2173 = vmatpush1.bf16.msra.mxu0 %v1772
        %2174 = vmatprep.subr.bf16.mxu0 0
        %2175 = vmatpush1.bf16.msra.mxu0 %v1775
        %2176 = vmatprep.subr.bf16.mxu0 0
        %2177 = vmatpush1.bf16.msra.mxu0 %v1778
        %2178 = vmatprep.subr.bf16.mxu0 0
        %2179 = vmatpush1.bf16.msra.mxu0 %v1781
        %2180 = vmatprep.subr.bf16.mxu0 0
        %2181 = vmatpush1.bf16.msra.mxu0 %v1784
        %2182 = vmatprep.subr.bf16.mxu0 0
        %2183 = vmatpush1.bf16.msra.mxu0 %v1787
        %2184 = vmatprep.subr.bf16.mxu0 0
        %2185 = vmatpush1.bf16.msra.mxu0 %v1790
        %2186 = vmatprep.subr.bf16.mxu0 0
        %2187 = vmatpush1.bf16.msra.mxu0 %v1793
        %2188 = vmatprep.subr.bf16.mxu0 0
        %2189 = vmatpush1.bf16.msra.mxu0 %v1796
        %2190 = vmatprep.subr.bf16.mxu0 0
        %2191 = vmatpush1.bf16.msra.mxu0 %v1799
        %2192 = vmatprep.subr.bf16.mxu0 0
        %2193 = vmatpush1.bf16.msra.mxu0 %v1802
        %2194 = vmatprep.subr.bf16.mxu0 0
        %2195 = vmatpush1.bf16.msra.mxu0 %v1805
        %2196 = vmatprep.subr.bf16.mxu0 0
        %2197 = vmatpush1.bf16.msra.mxu0 %v1808
        %2198 = vmatprep.subr.bf16.mxu0 0
        %2199 = vmatpush1.bf16.msra.mxu0 %v1811
        %2200 = vmatprep.subr.bf16.mxu0 0
        %2201 = vmatpush1.bf16.msra.mxu0 %v1814
        %2202 = vmatprep.mubr.bf16.mxu0 %v981
        %2203 = vmatmul.mubr.bf16.gmra.mrb[0].mxu0 %v980
        %v2204 = vpop.f32.mrb[0].mxu0
        %v2205 = vadd.f32 %v2164, %v2204
        %v2206 = vpop.f32.mrb[0].mxu0
        %v2207 = vpop.f32.mrb[0].mxu0
        %v2208 = vadd.f32 %v2167, %v2207
        %v2209 = vpop.f32.mrb[0].mxu0
        %2210 = vdwg.mxu0
        %v2211 = vmax.f32 %v2080, 0.0
        %v2212 = vmax.f32 %v2082, 0.0
        %v2213 = vmax.f32 %v2205, 0.0
        %v2214 = vmax.f32 %v2084, 0.0
        %v2215 = vmax.f32 %v2086, 0.0
        %v2216 = vmax.f32 %v2208, 0.0
        %v2217 = vadd.f32 %v2211, %v2212
        %v2218 = vadd.f32 %v2217, %v2213
        %2219 = vadd.xlane.f32.xlu0 %v2218
        %v2220 = vpop.xlane.xlu0 %2219
        %v2221 = vadd.f32 %v2214, %v2215
        %v2222 = vadd.f32 %v2221, %v2216
        %2223 = vadd.xlane.f32.xlu0 %v2222
        %v2224 = vpop.xlane.xlu0 %2223
        %v2225 = vmul.f32 %v2220, 0.0026041667
        %v2226 = vmul.f32 %v2224, 0.0026041667
        %v2227 = vmul.f32 %v2211, %v2211
        %v2228 = vmul.f32 %v2212, %v2212
        %v2229 = vmul.f32 %v2213, %v2213
        %v2230 = vmul.f32 %v2214, %v2214
        %v2231 = vmul.f32 %v2215, %v2215
        %v2232 = vmul.f32 %v2216, %v2216
        %v2233 = vadd.f32 %v2227, %v2228
        %v2234 = vadd.f32 %v2233, %v2229
        %2235 = vadd.xlane.f32.xlu0 %v2234
        %v2236 = vpop.xlane.xlu0 %2235
        %v2237 = vadd.f32 %v2230, %v2231
        %v2238 = vadd.f32 %v2237, %v2232
        %2239 = vadd.xlane.f32.xlu0 %v2238
        %v2240 = vpop.xlane.xlu0 %2239
        %v2241 = vmul.f32 %v2236, 0.0026041667
        %v2242 = vmul.f32 %v2240, 0.0026041667
        %v2243 = vmul.f32 %v2225, %v2225
        %v2244 = vmul.f32 %v2226, %v2226
        %v2245 = vsub.f32 %v2241, %v2243
        %v2246 = vsub.f32 %v2242, %v2244
        %v2247 = vmax.f32 %v2245, 0.0
        %v2248 = vmax.f32 %v2246, 0.0
        %v2249 = vsub.f32 %v2211, %v2225
        %v2250 = vsub.f32 %v2212, %v2225
        %v2251 = vsub.f32 %v2213, %v2225
        %v2252 = vsub.f32 %v2214, %v2226
        %v2253 = vsub.f32 %v2215, %v2226
        %v2254 = vsub.f32 %v2216, %v2226
        %v2255 = vadd.f32 %v2247, 1e-05
        %v2256 = vadd.f32 %v2248, 1e-05
        %v2257 = vrsqrt.pop %v2255
        %v2258 = vrsqrt.pop %v2256
        %v2259 = vmul.f32 %v2249, %v2257
        %v2260 = vmul.f32 %v2250, %v2257
        %v2261 = vmul.f32 %v2251, %v2257
        %v2262 = vmul.f32 %v2252, %v2258
        %v2263 = vmul.f32 %v2253, %v2258
        %v2264 = vmul.f32 %v2254, %v2258
        %v2265 = vpack.c.bf16 %v960, %v944
        %v2266 = vpack.c.bf16 %v961, %v945
        %v2267 = vpack.c.bf16 %v962, %v946
        %v2268 = vpack.c.bf16 %v963, %v947
        %v2269 = vpack.c.bf16 %v964, %v948
        %v2270 = vpack.c.bf16 %v965, %v949
        %v2271 = vpack.c.bf16 %v966, %v950
        %v2272 = vpack.c.bf16 %v967, %v951
        %v2273 = vpack.c.bf16 %v968, %v952
        %v2274 = vpack.c.bf16 %v969, %v953
        %v2275 = vpack.c.bf16 %v970, %v954
        %v2276 = vpack.c.bf16 %v971, %v955
        %v2277 = vpack.c.bf16 %v972, %v956
        %v2278 = vpack.c.bf16 %v973, %v957
        %v2279 = vpack.c.bf16 %v974, %v958
        %v2280 = vpack.c.bf16 %v975, %v959
        %v2281 = vld [vmem:[#allocation10] sm:$0xff]
        %v2282 = vld [vmem:[#allocation10 + $0x8] sm:$0xf]
        %v2283 = vld [vmem:[#allocation10 + $0xc] sm:$0xff]
        %v2284 = vld [vmem:[#allocation10 + $0x14] sm:$0xf]
        %v2285 = vld [vmem:[#allocation10 + $0x18] sm:$0xff]
        %v2286 = vld [vmem:[#allocation10 + $0x20] sm:$0xf]
        %v2287 = vld [vmem:[#allocation10 + $0x24] sm:$0xff]
        %v2288 = vld [vmem:[#allocation10 + $0x2c] sm:$0xf]
        %v2289 = vld [vmem:[#allocation10 + $0x30] sm:$0xff]
        %v2290 = vld [vmem:[#allocation10 + $0x38] sm:$0xf]
        %v2291 = vld [vmem:[#allocation10 + $0x3c] sm:$0xff]
        %v2292 = vld [vmem:[#allocation10 + $0x44] sm:$0xf]
        %v2293 = vld [vmem:[#allocation10 + $0x48] sm:$0xff]
        %v2294 = vld [vmem:[#allocation10 + $0x50] sm:$0xf]
        %v2295 = vld [vmem:[#allocation10 + $0x54] sm:$0xff]
        %v2296 = vld [vmem:[#allocation10 + $0x5c] sm:$0xf]
        %v2297 = vld [vmem:[#allocation10 + $0x60] sm:$0xff]
        %v2298 = vld [vmem:[#allocation10 + $0x68] sm:$0xf]
        %v2299 = vld [vmem:[#allocation10 + $0x6c] sm:$0xff]
        %v2300 = vld [vmem:[#allocation10 + $0x74] sm:$0xf]
        %v2301 = vld [vmem:[#allocation10 + $0x78] sm:$0xff]
        %v2302 = vld [vmem:[#allocation10 + $0x80] sm:$0xf]
        %v2303 = vld [vmem:[#allocation10 + $0x84] sm:$0xff]
        %v2304 = vld [vmem:[#allocation10 + $0x8c] sm:$0xf]
        %v2305 = vld [vmem:[#allocation10 + $0x90] sm:$0xff]
        %v2306 = vld [vmem:[#allocation10 + $0x98] sm:$0xf]
        %v2307 = vld [vmem:[#allocation10 + $0x9c] sm:$0xff]
        %v2308 = vld [vmem:[#allocation10 + $0xa4] sm:$0xf]
        %v2309 = vld [vmem:[#allocation10 + $0xa8] sm:$0xff]
        %v2310 = vld [vmem:[#allocation10 + $0xb0] sm:$0xf]
        %v2311 = vld [vmem:[#allocation10 + $0xb4] sm:$0xff]
        %v2312 = vld [vmem:[#allocation10 + $0xbc] sm:$0xf]
        %v2313 = vld [vmem:[#allocation10 + $0xc0] sm:$0xff]
        %v2314 = vld [vmem:[#allocation10 + $0xc8] sm:$0xf]
        %v2315 = vld [vmem:[#allocation10 + $0xcc] sm:$0xff]
        %v2316 = vld [vmem:[#allocation10 + $0xd4] sm:$0xf]
        %v2317 = vld [vmem:[#allocation10 + $0xd8] sm:$0xff]
        %v2318 = vld [vmem:[#allocation10 + $0xe0] sm:$0xf]
        %v2319 = vld [vmem:[#allocation10 + $0xe4] sm:$0xff]
        %v2320 = vld [vmem:[#allocation10 + $0xec] sm:$0xf]
        %v2321 = vld [vmem:[#allocation10 + $0xf0] sm:$0xff]
        %v2322 = vld [vmem:[#allocation10 + $0xf8] sm:$0xf]
        %v2323 = vld [vmem:[#allocation10 + $0xfc] sm:$0xff]
        %v2324 = vld [vmem:[#allocation10 + $0x104] sm:$0xf]
        %v2325 = vld [vmem:[#allocation10 + $0x108] sm:$0xff]
        %v2326 = vld [vmem:[#allocation10 + $0x110] sm:$0xf]
        %v2327 = vld [vmem:[#allocation10 + $0x114] sm:$0xff]
        %v2328 = vld [vmem:[#allocation10 + $0x11c] sm:$0xf]
        %v2329 = vld [vmem:[#allocation10 + $0x120] sm:$0xff]
        %v2330 = vld [vmem:[#allocation10 + $0x128] sm:$0xf]
        %v2331 = vld [vmem:[#allocation10 + $0x12c] sm:$0xff]
        %v2332 = vld [vmem:[#allocation10 + $0x134] sm:$0xf]
        %v2333 = vld [vmem:[#allocation10 + $0x138] sm:$0xff]
        %v2334 = vld [vmem:[#allocation10 + $0x140] sm:$0xf]
        %v2335 = vld [vmem:[#allocation10 + $0x144] sm:$0xff]
        %v2336 = vld [vmem:[#allocation10 + $0x14c] sm:$0xf]
        %v2337 = vld [vmem:[#allocation10 + $0x150] sm:$0xff]
        %v2338 = vld [vmem:[#allocation10 + $0x158] sm:$0xf]
        %v2339 = vld [vmem:[#allocation10 + $0x15c] sm:$0xff]
        %v2340 = vld [vmem:[#allocation10 + $0x164] sm:$0xf]
        %v2341 = vld [vmem:[#allocation10 + $0x168] sm:$0xff]
        %v2342 = vld [vmem:[#allocation10 + $0x170] sm:$0xf]
        %v2343 = vld [vmem:[#allocation10 + $0x174] sm:$0xff]
        %v2344 = vld [vmem:[#allocation10 + $0x17c] sm:$0xf]
        %v2345 = vld [vmem:[#allocation10 + $0x180] sm:$0xff]
        %v2346 = vld [vmem:[#allocation10 + $0x188] sm:$0xf]
        %v2347 = vld [vmem:[#allocation10 + $0x18c] sm:$0xff]
        %v2348 = vld [vmem:[#allocation10 + $0x194] sm:$0xf]
        %v2349 = vld [vmem:[#allocation10 + $0x198] sm:$0xff]
        %v2350 = vld [vmem:[#allocation10 + $0x1a0] sm:$0xf]
        %v2351 = vld [vmem:[#allocation10 + $0x1a4] sm:$0xff]
        %v2352 = vld [vmem:[#allocation10 + $0x1ac] sm:$0xf]
        %v2353 = vld [vmem:[#allocation10 + $0x1b0] sm:$0xff]
        %v2354 = vld [vmem:[#allocation10 + $0x1b8] sm:$0xf]
        %v2355 = vld [vmem:[#allocation10 + $0x1bc] sm:$0xff]
        %v2356 = vld [vmem:[#allocation10 + $0x1c4] sm:$0xf]
        %v2357 = vld [vmem:[#allocation10 + $0x1c8] sm:$0xff]
        %v2358 = vld [vmem:[#allocation10 + $0x1d0] sm:$0xf]
        %v2359 = vld [vmem:[#allocation10 + $0x1d4] sm:$0xff]
        %v2360 = vld [vmem:[#allocation10 + $0x1dc] sm:$0xf]
        %v2361 = vld [vmem:[#allocation10 + $0x1e0] sm:$0xff]
        %v2362 = vld [vmem:[#allocation10 + $0x1e8] sm:$0xf]
        %v2363 = vld [vmem:[#allocation10 + $0x1ec] sm:$0xff]
        %v2364 = vld [vmem:[#allocation10 + $0x1f4] sm:$0xf]
        %v2365 = vld [vmem:[#allocation10 + $0x1f8] sm:$0xff]
        %v2366 = vld [vmem:[#allocation10 + $0x200] sm:$0xf]
        %v2367 = vld [vmem:[#allocation10 + $0x204] sm:$0xff]
        %v2368 = vld [vmem:[#allocation10 + $0x20c] sm:$0xf]
        %v2369 = vld [vmem:[#allocation10 + $0x210] sm:$0xff]
        %v2370 = vld [vmem:[#allocation10 + $0x218] sm:$0xf]
        %v2371 = vld [vmem:[#allocation10 + $0x21c] sm:$0xff]
        %v2372 = vld [vmem:[#allocation10 + $0x224] sm:$0xf]
        %v2373 = vld [vmem:[#allocation10 + $0x228] sm:$0xff]
        %v2374 = vld [vmem:[#allocation10 + $0x230] sm:$0xf]
        %v2375 = vld [vmem:[#allocation10 + $0x234] sm:$0xff]
        %v2376 = vld [vmem:[#allocation10 + $0x23c] sm:$0xf]
        %v2377 = vld [vmem:[#allocation10 + $0x240] sm:$0xff]
        %v2378 = vld [vmem:[#allocation10 + $0x248] sm:$0xf]
        %v2379 = vld [vmem:[#allocation10 + $0x24c] sm:$0xff]
        %v2380 = vld [vmem:[#allocation10 + $0x254] sm:$0xf]
        %v2381 = vld [vmem:[#allocation10 + $0x258] sm:$0xff]
        %v2382 = vld [vmem:[#allocation10 + $0x260] sm:$0xf]
        %v2383 = vld [vmem:[#allocation10 + $0x264] sm:$0xff]
        %v2384 = vld [vmem:[#allocation10 + $0x26c] sm:$0xf]
        %v2385 = vld [vmem:[#allocation10 + $0x270] sm:$0xff]
        %v2386 = vld [vmem:[#allocation10 + $0x278] sm:$0xf]
        %v2387 = vld [vmem:[#allocation10 + $0x27c] sm:$0xff]
        %v2388 = vld [vmem:[#allocation10 + $0x284] sm:$0xf]
        %v2389 = vld [vmem:[#allocation10 + $0x288] sm:$0xff]
        %v2390 = vld [vmem:[#allocation10 + $0x290] sm:$0xf]
        %v2391 = vld [vmem:[#allocation10 + $0x294] sm:$0xff]
        %v2392 = vld [vmem:[#allocation10 + $0x29c] sm:$0xf]
        %v2393 = vld [vmem:[#allocation10 + $0x2a0] sm:$0xff]
        %v2394 = vld [vmem:[#allocation10 + $0x2a8] sm:$0xf]
        %v2395 = vld [vmem:[#allocation10 + $0x2ac] sm:$0xff]
        %v2396 = vld [vmem:[#allocation10 + $0x2b4] sm:$0xf]
        %v2397 = vld [vmem:[#allocation10 + $0x2b8] sm:$0xff]
        %v2398 = vld [vmem:[#allocation10 + $0x2c0] sm:$0xf]
        %v2399 = vld [vmem:[#allocation10 + $0x2c4] sm:$0xff]
        %v2400 = vld [vmem:[#allocation10 + $0x2cc] sm:$0xf]
        %v2401 = vld [vmem:[#allocation10 + $0x2d0] sm:$0xff]
        %v2402 = vld [vmem:[#allocation10 + $0x2d8] sm:$0xf]
        %v2403 = vld [vmem:[#allocation10 + $0x2dc] sm:$0xff]
        %v2404 = vld [vmem:[#allocation10 + $0x2e4] sm:$0xf]
        %v2405 = vld [vmem:[#allocation10 + $0x2e8] sm:$0xff]
        %v2406 = vld [vmem:[#allocation10 + $0x2f0] sm:$0xf]
        %v2407 = vld [vmem:[#allocation10 + $0x2f4] sm:$0xff]
        %v2408 = vld [vmem:[#allocation10 + $0x2fc] sm:$0xf]
        %v2409 = vld [vmem:[#allocation10 + $0x300] sm:$0xff]
        %v2410 = vld [vmem:[#allocation10 + $0x308] sm:$0xf]
        %v2411 = vld [vmem:[#allocation10 + $0x30c] sm:$0xff]
        %v2412 = vld [vmem:[#allocation10 + $0x314] sm:$0xf]
        %v2413 = vld [vmem:[#allocation10 + $0x318] sm:$0xff]
        %v2414 = vld [vmem:[#allocation10 + $0x320] sm:$0xf]
        %v2415 = vld [vmem:[#allocation10 + $0x324] sm:$0xff]
        %v2416 = vld [vmem:[#allocation10 + $0x32c] sm:$0xf]
        %v2417 = vld [vmem:[#allocation10 + $0x330] sm:$0xff]
        %v2418 = vld [vmem:[#allocation10 + $0x338] sm:$0xf]
        %v2419 = vld [vmem:[#allocation10 + $0x33c] sm:$0xff]
        %v2420 = vld [vmem:[#allocation10 + $0x344] sm:$0xf]
        %v2421 = vld [vmem:[#allocation10 + $0x348] sm:$0xff]
        %v2422 = vld [vmem:[#allocation10 + $0x350] sm:$0xf]
        %v2423 = vld [vmem:[#allocation10 + $0x354] sm:$0xff]
        %v2424 = vld [vmem:[#allocation10 + $0x35c] sm:$0xf]
        %v2425 = vld [vmem:[#allocation10 + $0x360] sm:$0xff]
        %v2426 = vld [vmem:[#allocation10 + $0x368] sm:$0xf]
        %v2427 = vld [vmem:[#allocation10 + $0x36c] sm:$0xff]
        %v2428 = vld [vmem:[#allocation10 + $0x374] sm:$0xf]
        %v2429 = vld [vmem:[#allocation10 + $0x378] sm:$0xff]
        %v2430 = vld [vmem:[#allocation10 + $0x380] sm:$0xf]
        %v2431 = vld [vmem:[#allocation10 + $0x384] sm:$0xff]
        %v2432 = vld [vmem:[#allocation10 + $0x38c] sm:$0xf]
        %v2433 = vld [vmem:[#allocation10 + $0x390] sm:$0xff]
        %v2434 = vld [vmem:[#allocation10 + $0x398] sm:$0xf]
        %v2435 = vld [vmem:[#allocation10 + $0x39c] sm:$0xff]
        %v2436 = vld [vmem:[#allocation10 + $0x3a4] sm:$0xf]
        %v2437 = vld [vmem:[#allocation10 + $0x3a8] sm:$0xff]
        %v2438 = vld [vmem:[#allocation10 + $0x3b0] sm:$0xf]
        %v2439 = vld [vmem:[#allocation10 + $0x3b4] sm:$0xff]
        %v2440 = vld [vmem:[#allocation10 + $0x3bc] sm:$0xf]
        %v2441 = vld [vmem:[#allocation10 + $0x3c0] sm:$0xff]
        %v2442 = vld [vmem:[#allocation10 + $0x3c8] sm:$0xf]
        %v2443 = vld [vmem:[#allocation10 + $0x3cc] sm:$0xff]
        %v2444 = vld [vmem:[#allocation10 + $0x3d4] sm:$0xf]
        %v2445 = vld [vmem:[#allocation10 + $0x3d8] sm:$0xff]
        %v2446 = vld [vmem:[#allocation10 + $0x3e0] sm:$0xf]
        %v2447 = vld [vmem:[#allocation10 + $0x3e4] sm:$0xff]
        %v2448 = vld [vmem:[#allocation10 + $0x3ec] sm:$0xf]
        %v2449 = vld [vmem:[#allocation10 + $0x3f0] sm:$0xff]
        %v2450 = vld [vmem:[#allocation10 + $0x3f8] sm:$0xf]
        %v2451 = vld [vmem:[#allocation10 + $0x3fc] sm:$0xff]
        %v2452 = vld [vmem:[#allocation10 + $0x404] sm:$0xf]
        %v2453 = vld [vmem:[#allocation10 + $0x408] sm:$0xff]
        %v2454 = vld [vmem:[#allocation10 + $0x410] sm:$0xf]
        %v2455 = vld [vmem:[#allocation10 + $0x414] sm:$0xff]
        %v2456 = vld [vmem:[#allocation10 + $0x41c] sm:$0xf]
        %v2457 = vld [vmem:[#allocation10 + $0x420] sm:$0xff]
        %v2458 = vld [vmem:[#allocation10 + $0x428] sm:$0xf]
        %v2459 = vld [vmem:[#allocation10 + $0x42c] sm:$0xff]
        %v2460 = vld [vmem:[#allocation10 + $0x434] sm:$0xf]
        %v2461 = vld [vmem:[#allocation10 + $0x438] sm:$0xff]
        %v2462 = vld [vmem:[#allocation10 + $0x440] sm:$0xf]
        %v2463 = vld [vmem:[#allocation10 + $0x444] sm:$0xff]
        %v2464 = vld [vmem:[#allocation10 + $0x44c] sm:$0xf]
        %v2465 = vld [vmem:[#allocation10 + $0x450] sm:$0xff]
        %v2466 = vld [vmem:[#allocation10 + $0x458] sm:$0xf]
        %v2467 = vld [vmem:[#allocation10 + $0x45c] sm:$0xff]
        %v2468 = vld [vmem:[#allocation10 + $0x464] sm:$0xf]
        %v2469 = vld [vmem:[#allocation10 + $0x468] sm:$0xff]
        %v2470 = vld [vmem:[#allocation10 + $0x470] sm:$0xf]
        %v2471 = vld [vmem:[#allocation10 + $0x474] sm:$0xff]
        %v2472 = vld [vmem:[#allocation10 + $0x47c] sm:$0xf]
        %v2473 = vld [vmem:[#allocation10 + $0x480] sm:$0xff]
        %v2474 = vld [vmem:[#allocation10 + $0x488] sm:$0xf]
        %v2475 = vld [vmem:[#allocation10 + $0x48c] sm:$0xff]
        %v2476 = vld [vmem:[#allocation10 + $0x494] sm:$0xf]
        %v2477 = vld [vmem:[#allocation10 + $0x498] sm:$0xff]
        %v2478 = vld [vmem:[#allocation10 + $0x4a0] sm:$0xf]
        %v2479 = vld [vmem:[#allocation10 + $0x4a4] sm:$0xff]
        %v2480 = vld [vmem:[#allocation10 + $0x4ac] sm:$0xf]
        %v2481 = vld [vmem:[#allocation10 + $0x4b0] sm:$0xff]
        %v2482 = vld [vmem:[#allocation10 + $0x4b8] sm:$0xf]
        %v2483 = vld [vmem:[#allocation10 + $0x4bc] sm:$0xff]
        %v2484 = vld [vmem:[#allocation10 + $0x4c4] sm:$0xf]
        %v2485 = vld [vmem:[#allocation10 + $0x4c8] sm:$0xff]
        %v2486 = vld [vmem:[#allocation10 + $0x4d0] sm:$0xf]
        %v2487 = vld [vmem:[#allocation10 + $0x4d4] sm:$0xff]
        %v2488 = vld [vmem:[#allocation10 + $0x4dc] sm:$0xf]
        %v2489 = vld [vmem:[#allocation10 + $0x4e0] sm:$0xff]
        %v2490 = vld [vmem:[#allocation10 + $0x4e8] sm:$0xf]
        %v2491 = vld [vmem:[#allocation10 + $0x4ec] sm:$0xff]
        %v2492 = vld [vmem:[#allocation10 + $0x4f4] sm:$0xf]
        %v2493 = vld [vmem:[#allocation10 + $0x4f8] sm:$0xff]
        %v2494 = vld [vmem:[#allocation10 + $0x500] sm:$0xf]
        %v2495 = vld [vmem:[#allocation10 + $0x504] sm:$0xff]
        %v2496 = vld [vmem:[#allocation10 + $0x50c] sm:$0xf]
        %v2497 = vld [vmem:[#allocation10 + $0x510] sm:$0xff]
        %v2498 = vld [vmem:[#allocation10 + $0x518] sm:$0xf]
        %v2499 = vld [vmem:[#allocation10 + $0x51c] sm:$0xff]
        %v2500 = vld [vmem:[#allocation10 + $0x524] sm:$0xf]
        %v2501 = vld [vmem:[#allocation10 + $0x528] sm:$0xff]
        %v2502 = vld [vmem:[#allocation10 + $0x530] sm:$0xf]
        %v2503 = vld [vmem:[#allocation10 + $0x534] sm:$0xff]
        %v2504 = vld [vmem:[#allocation10 + $0x53c] sm:$0xf]
        %v2505 = vld [vmem:[#allocation10 + $0x540] sm:$0xff]
        %v2506 = vld [vmem:[#allocation10 + $0x548] sm:$0xf]
        %v2507 = vld [vmem:[#allocation10 + $0x54c] sm:$0xff]
        %v2508 = vld [vmem:[#allocation10 + $0x554] sm:$0xf]
        %v2509 = vld [vmem:[#allocation10 + $0x558] sm:$0xff]
        %v2510 = vld [vmem:[#allocation10 + $0x560] sm:$0xf]
        %v2511 = vld [vmem:[#allocation10 + $0x564] sm:$0xff]
        %v2512 = vld [vmem:[#allocation10 + $0x56c] sm:$0xf]
        %v2513 = vld [vmem:[#allocation10 + $0x570] sm:$0xff]
        %v2514 = vld [vmem:[#allocation10 + $0x578] sm:$0xf]
        %v2515 = vld [vmem:[#allocation10 + $0x57c] sm:$0xff]
        %v2516 = vld [vmem:[#allocation10 + $0x584] sm:$0xf]
        %v2517 = vld [vmem:[#allocation10 + $0x588] sm:$0xff]
        %v2518 = vld [vmem:[#allocation10 + $0x590] sm:$0xf]
        %v2519 = vld [vmem:[#allocation10 + $0x594] sm:$0xff]
        %v2520 = vld [vmem:[#allocation10 + $0x59c] sm:$0xf]
        %v2521 = vld [vmem:[#allocation10 + $0x5a0] sm:$0xff]
        %v2522 = vld [vmem:[#allocation10 + $0x5a8] sm:$0xf]
        %v2523 = vld [vmem:[#allocation10 + $0x5ac] sm:$0xff]
        %v2524 = vld [vmem:[#allocation10 + $0x5b4] sm:$0xf]
        %v2525 = vld [vmem:[#allocation10 + $0x5b8] sm:$0xff]
        %v2526 = vld [vmem:[#allocation10 + $0x5c0] sm:$0xf]
        %v2527 = vld [vmem:[#allocation10 + $0x5c4] sm:$0xff]
        %v2528 = vld [vmem:[#allocation10 + $0x5cc] sm:$0xf]
        %v2529 = vld [vmem:[#allocation10 + $0x5d0] sm:$0xff]
        %v2530 = vld [vmem:[#allocation10 + $0x5d8] sm:$0xf]
        %v2531 = vld [vmem:[#allocation10 + $0x5dc] sm:$0xff]
        %v2532 = vld [vmem:[#allocation10 + $0x5e4] sm:$0xf]
        %v2533 = vld [vmem:[#allocation10 + $0x5e8] sm:$0xff]
        %v2534 = vld [vmem:[#allocation10 + $0x5f0] sm:$0xf]
        %v2535 = vld [vmem:[#allocation10 + $0x5f4] sm:$0xff]
        %v2536 = vld [vmem:[#allocation10 + $0x5fc] sm:$0xf]
        %v2537 = vld [vmem:[#allocation10 + $0x600] sm:$0xff]
        %v2538 = vld [vmem:[#allocation10 + $0x608] sm:$0xf]
        %v2539 = vld [vmem:[#allocation10 + $0x60c] sm:$0xff]
        %v2540 = vld [vmem:[#allocation10 + $0x614] sm:$0xf]
        %v2541 = vld [vmem:[#allocation10 + $0x618] sm:$0xff]
        %v2542 = vld [vmem:[#allocation10 + $0x620] sm:$0xf]
        %v2543 = vld [vmem:[#allocation10 + $0x624] sm:$0xff]
        %v2544 = vld [vmem:[#allocation10 + $0x62c] sm:$0xf]
        %v2545 = vld [vmem:[#allocation10 + $0x630] sm:$0xff]
        %v2546 = vld [vmem:[#allocation10 + $0x638] sm:$0xf]
        %v2547 = vld [vmem:[#allocation10 + $0x63c] sm:$0xff]
        %v2548 = vld [vmem:[#allocation10 + $0x644] sm:$0xf]
        %v2549 = vld [vmem:[#allocation10 + $0x648] sm:$0xff]
        %v2550 = vld [vmem:[#allocation10 + $0x650] sm:$0xf]
        %v2551 = vld [vmem:[#allocation10 + $0x654] sm:$0xff]
        %v2552 = vld [vmem:[#allocation10 + $0x65c] sm:$0xf]
        %v2553 = vld [vmem:[#allocation10 + $0x660] sm:$0xff]
        %v2554 = vld [vmem:[#allocation10 + $0x668] sm:$0xf]
        %v2555 = vld [vmem:[#allocation10 + $0x66c] sm:$0xff]
        %v2556 = vld [vmem:[#allocation10 + $0x674] sm:$0xf]
        %v2557 = vld [vmem:[#allocation10 + $0x678] sm:$0xff]
        %v2558 = vld [vmem:[#allocation10 + $0x680] sm:$0xf]
        %v2559 = vld [vmem:[#allocation10 + $0x684] sm:$0xff]
        %v2560 = vld [vmem:[#allocation10 + $0x68c] sm:$0xf]
        %v2561 = vld [vmem:[#allocation10 + $0x690] sm:$0xff]
        %v2562 = vld [vmem:[#allocation10 + $0x698] sm:$0xf]
        %v2563 = vld [vmem:[#allocation10 + $0x69c] sm:$0xff]
        %v2564 = vld [vmem:[#allocation10 + $0x6a4] sm:$0xf]
        %v2565 = vld [vmem:[#allocation10 + $0x6a8] sm:$0xff]
        %v2566 = vld [vmem:[#allocation10 + $0x6b0] sm:$0xf]
        %v2567 = vld [vmem:[#allocation10 + $0x6b4] sm:$0xff]
        %v2568 = vld [vmem:[#allocation10 + $0x6bc] sm:$0xf]
        %v2569 = vld [vmem:[#allocation10 + $0x6c0] sm:$0xff]
        %v2570 = vld [vmem:[#allocation10 + $0x6c8] sm:$0xf]
        %v2571 = vld [vmem:[#allocation10 + $0x6cc] sm:$0xff]
        %v2572 = vld [vmem:[#allocation10 + $0x6d4] sm:$0xf]
        %v2573 = vld [vmem:[#allocation10 + $0x6d8] sm:$0xff]
        %v2574 = vld [vmem:[#allocation10 + $0x6e0] sm:$0xf]
        %v2575 = vld [vmem:[#allocation10 + $0x6e4] sm:$0xff]
        %v2576 = vld [vmem:[#allocation10 + $0x6ec] sm:$0xf]
        %v2577 = vld [vmem:[#allocation10 + $0x6f0] sm:$0xff]
        %v2578 = vld [vmem:[#allocation10 + $0x6f8] sm:$0xf]
        %v2579 = vld [vmem:[#allocation10 + $0x6fc] sm:$0xff]
        %v2580 = vld [vmem:[#allocation10 + $0x704] sm:$0xf]
        %v2581 = vld [vmem:[#allocation10 + $0x708] sm:$0xff]
        %v2582 = vld [vmem:[#allocation10 + $0x710] sm:$0xf]
        %v2583 = vld [vmem:[#allocation10 + $0x714] sm:$0xff]
        %v2584 = vld [vmem:[#allocation10 + $0x71c] sm:$0xf]
        %v2585 = vld [vmem:[#allocation10 + $0x720] sm:$0xff]
        %v2586 = vld [vmem:[#allocation10 + $0x728] sm:$0xf]
        %v2587 = vld [vmem:[#allocation10 + $0x72c] sm:$0xff]
        %v2588 = vld [vmem:[#allocation10 + $0x734] sm:$0xf]
        %v2589 = vld [vmem:[#allocation10 + $0x738] sm:$0xff]
        %v2590 = vld [vmem:[#allocation10 + $0x740] sm:$0xf]
        %v2591 = vld [vmem:[#allocation10 + $0x744] sm:$0xff]
        %v2592 = vld [vmem:[#allocation10 + $0x74c] sm:$0xf]
        %v2593 = vld [vmem:[#allocation10 + $0x750] sm:$0xff]
        %v2594 = vld [vmem:[#allocation10 + $0x758] sm:$0xf]
        %v2595 = vld [vmem:[#allocation10 + $0x75c] sm:$0xff]
        %v2596 = vld [vmem:[#allocation10 + $0x764] sm:$0xf]
        %v2597 = vld [vmem:[#allocation10 + $0x768] sm:$0xff]
        %v2598 = vld [vmem:[#allocation10 + $0x770] sm:$0xf]
        %v2599 = vld [vmem:[#allocation10 + $0x774] sm:$0xff]
        %v2600 = vld [vmem:[#allocation10 + $0x77c] sm:$0xf]
        %v2601 = vld [vmem:[#allocation10 + $0x780] sm:$0xff]
        %v2602 = vld [vmem:[#allocation10 + $0x788] sm:$0xf]
        %v2603 = vld [vmem:[#allocation10 + $0x78c] sm:$0xff]
        %v2604 = vld [vmem:[#allocation10 + $0x794] sm:$0xf]
        %v2605 = vld [vmem:[#allocation10 + $0x798] sm:$0xff]
        %v2606 = vld [vmem:[#allocation10 + $0x7a0] sm:$0xf]
        %v2607 = vld [vmem:[#allocation10 + $0x7a4] sm:$0xff]
        %v2608 = vld [vmem:[#allocation10 + $0x7ac] sm:$0xf]
        %v2609 = vld [vmem:[#allocation10 + $0x7b0] sm:$0xff]
        %v2610 = vld [vmem:[#allocation10 + $0x7b8] sm:$0xf]
        %v2611 = vld [vmem:[#allocation10 + $0x7bc] sm:$0xff]
        %v2612 = vld [vmem:[#allocation10 + $0x7c4] sm:$0xf]
        %v2613 = vld [vmem:[#allocation10 + $0x7c8] sm:$0xff]
        %v2614 = vld [vmem:[#allocation10 + $0x7d0] sm:$0xf]
        %v2615 = vld [vmem:[#allocation10 + $0x7d4] sm:$0xff]
        %v2616 = vld [vmem:[#allocation10 + $0x7dc] sm:$0xf]
        %v2617 = vld [vmem:[#allocation10 + $0x7e0] sm:$0xff]
        %v2618 = vld [vmem:[#allocation10 + $0x7e8] sm:$0xf]
        %v2619 = vld [vmem:[#allocation10 + $0x7ec] sm:$0xff]
        %v2620 = vld [vmem:[#allocation10 + $0x7f4] sm:$0xf]
        %v2621 = vld [vmem:[#allocation10 + $0x7f8] sm:$0xff]
        %v2622 = vld [vmem:[#allocation10 + $0x800] sm:$0xf]
        %v2623 = vld [vmem:[#allocation10 + $0x804] sm:$0xff]
        %v2624 = vld [vmem:[#allocation10 + $0x80c] sm:$0xf]
        %v2625 = vld [vmem:[#allocation10 + $0x810] sm:$0xff]
        %v2626 = vld [vmem:[#allocation10 + $0x818] sm:$0xf]
        %v2627 = vld [vmem:[#allocation10 + $0x81c] sm:$0xff]
        %v2628 = vld [vmem:[#allocation10 + $0x824] sm:$0xf]
        %v2629 = vld [vmem:[#allocation10 + $0x828] sm:$0xff]
        %v2630 = vld [vmem:[#allocation10 + $0x830] sm:$0xf]
        %v2631 = vld [vmem:[#allocation10 + $0x834] sm:$0xff]
        %v2632 = vld [vmem:[#allocation10 + $0x83c] sm:$0xf]
        %v2633 = vld [vmem:[#allocation10 + $0x840] sm:$0xff]
        %v2634 = vld [vmem:[#allocation10 + $0x848] sm:$0xf]
        %v2635 = vld [vmem:[#allocation10 + $0x84c] sm:$0xff]
        %v2636 = vld [vmem:[#allocation10 + $0x854] sm:$0xf]
        %v2637 = vld [vmem:[#allocation10 + $0x858] sm:$0xff]
        %v2638 = vld [vmem:[#allocation10 + $0x860] sm:$0xf]
        %v2639 = vld [vmem:[#allocation10 + $0x864] sm:$0xff]
        %v2640 = vld [vmem:[#allocation10 + $0x86c] sm:$0xf]
        %v2641 = vld [vmem:[#allocation10 + $0x870] sm:$0xff]
        %v2642 = vld [vmem:[#allocation10 + $0x878] sm:$0xf]
        %v2643 = vld [vmem:[#allocation10 + $0x87c] sm:$0xff]
        %v2644 = vld [vmem:[#allocation10 + $0x884] sm:$0xf]
        %v2645 = vld [vmem:[#allocation10 + $0x888] sm:$0xff]
        %v2646 = vld [vmem:[#allocation10 + $0x890] sm:$0xf]
        %v2647 = vld [vmem:[#allocation10 + $0x894] sm:$0xff]
        %v2648 = vld [vmem:[#allocation10 + $0x89c] sm:$0xf]
        %v2649 = vld [vmem:[#allocation10 + $0x8a0] sm:$0xff]
        %v2650 = vld [vmem:[#allocation10 + $0x8a8] sm:$0xf]
        %v2651 = vld [vmem:[#allocation10 + $0x8ac] sm:$0xff]
        %v2652 = vld [vmem:[#allocation10 + $0x8b4] sm:$0xf]
        %v2653 = vld [vmem:[#allocation10 + $0x8b8] sm:$0xff]
        %v2654 = vld [vmem:[#allocation10 + $0x8c0] sm:$0xf]
        %v2655 = vld [vmem:[#allocation10 + $0x8c4] sm:$0xff]
        %v2656 = vld [vmem:[#allocation10 + $0x8cc] sm:$0xf]
        %v2657 = vld [vmem:[#allocation10 + $0x8d0] sm:$0xff]
        %v2658 = vld [vmem:[#allocation10 + $0x8d8] sm:$0xf]
        %v2659 = vld [vmem:[#allocation10 + $0x8dc] sm:$0xff]
        %v2660 = vld [vmem:[#allocation10 + $0x8e4] sm:$0xf]
        %v2661 = vld [vmem:[#allocation10 + $0x8e8] sm:$0xff]
        %v2662 = vld [vmem:[#allocation10 + $0x8f0] sm:$0xf]
        %v2663 = vld [vmem:[#allocation10 + $0x8f4] sm:$0xff]
        %v2664 = vld [vmem:[#allocation10 + $0x8fc] sm:$0xf]
        %v2665 = vld [vmem:[#allocation10 + $0x900] sm:$0xff]
        %v2666 = vld [vmem:[#allocation10 + $0x908] sm:$0xf]
        %v2667 = vld [vmem:[#allocation10 + $0x90c] sm:$0xff]
        %v2668 = vld [vmem:[#allocation10 + $0x914] sm:$0xf]
        %v2669 = vld [vmem:[#allocation10 + $0x918] sm:$0xff]
        %v2670 = vld [vmem:[#allocation10 + $0x920] sm:$0xf]
        %v2671 = vld [vmem:[#allocation10 + $0x924] sm:$0xff]
        %v2672 = vld [vmem:[#allocation10 + $0x92c] sm:$0xf]
        %v2673 = vld [vmem:[#allocation10 + $0x930] sm:$0xff]
        %v2674 = vld [vmem:[#allocation10 + $0x938] sm:$0xf]
        %v2675 = vld [vmem:[#allocation10 + $0x93c] sm:$0xff]
        %v2676 = vld [vmem:[#allocation10 + $0x944] sm:$0xf]
        %v2677 = vld [vmem:[#allocation10 + $0x948] sm:$0xff]
        %v2678 = vld [vmem:[#allocation10 + $0x950] sm:$0xf]
        %v2679 = vld [vmem:[#allocation10 + $0x954] sm:$0xff]
        %v2680 = vld [vmem:[#allocation10 + $0x95c] sm:$0xf]
        %v2681 = vld [vmem:[#allocation10 + $0x960] sm:$0xff]
        %v2682 = vld [vmem:[#allocation10 + $0x968] sm:$0xf]
        %v2683 = vld [vmem:[#allocation10 + $0x96c] sm:$0xff]
        %v2684 = vld [vmem:[#allocation10 + $0x974] sm:$0xf]
        %v2685 = vld [vmem:[#allocation10 + $0x978] sm:$0xff]
        %v2686 = vld [vmem:[#allocation10 + $0x980] sm:$0xf]
        %v2687 = vld [vmem:[#allocation10 + $0x984] sm:$0xff]
        %v2688 = vld [vmem:[#allocation10 + $0x98c] sm:$0xf]
        %v2689 = vld [vmem:[#allocation10 + $0x990] sm:$0xff]
        %v2690 = vld [vmem:[#allocation10 + $0x998] sm:$0xf]
        %v2691 = vld [vmem:[#allocation10 + $0x99c] sm:$0xff]
        %v2692 = vld [vmem:[#allocation10 + $0x9a4] sm:$0xf]
        %v2693 = vld [vmem:[#allocation10 + $0x9a8] sm:$0xff]
        %v2694 = vld [vmem:[#allocation10 + $0x9b0] sm:$0xf]
        %v2695 = vld [vmem:[#allocation10 + $0x9b4] sm:$0xff]
        %v2696 = vld [vmem:[#allocation10 + $0x9bc] sm:$0xf]
        %v2697 = vld [vmem:[#allocation10 + $0x9c0] sm:$0xff]
        %v2698 = vld [vmem:[#allocation10 + $0x9c8] sm:$0xf]
        %v2699 = vld [vmem:[#allocation10 + $0x9cc] sm:$0xff]
        %v2700 = vld [vmem:[#allocation10 + $0x9d4] sm:$0xf]
        %v2701 = vld [vmem:[#allocation10 + $0x9d8] sm:$0xff]
        %v2702 = vld [vmem:[#allocation10 + $0x9e0] sm:$0xf]
        %v2703 = vld [vmem:[#allocation10 + $0x9e4] sm:$0xff]
        %v2704 = vld [vmem:[#allocation10 + $0x9ec] sm:$0xf]
        %v2705 = vld [vmem:[#allocation10 + $0x9f0] sm:$0xff]
        %v2706 = vld [vmem:[#allocation10 + $0x9f8] sm:$0xf]
        %v2707 = vld [vmem:[#allocation10 + $0x9fc] sm:$0xff]
        %v2708 = vld [vmem:[#allocation10 + $0xa04] sm:$0xf]
        %v2709 = vld [vmem:[#allocation10 + $0xa08] sm:$0xff]
        %v2710 = vld [vmem:[#allocation10 + $0xa10] sm:$0xf]
        %v2711 = vld [vmem:[#allocation10 + $0xa14] sm:$0xff]
        %v2712 = vld [vmem:[#allocation10 + $0xa1c] sm:$0xf]
        %v2713 = vld [vmem:[#allocation10 + $0xa20] sm:$0xff]
        %v2714 = vld [vmem:[#allocation10 + $0xa28] sm:$0xf]
        %v2715 = vld [vmem:[#allocation10 + $0xa2c] sm:$0xff]
        %v2716 = vld [vmem:[#allocation10 + $0xa34] sm:$0xf]
        %v2717 = vld [vmem:[#allocation10 + $0xa38] sm:$0xff]
        %v2718 = vld [vmem:[#allocation10 + $0xa40] sm:$0xf]
        %v2719 = vld [vmem:[#allocation10 + $0xa44] sm:$0xff]
        %v2720 = vld [vmem:[#allocation10 + $0xa4c] sm:$0xf]
        %v2721 = vld [vmem:[#allocation10 + $0xa50] sm:$0xff]
        %v2722 = vld [vmem:[#allocation10 + $0xa58] sm:$0xf]
        %v2723 = vld [vmem:[#allocation10 + $0xa5c] sm:$0xff]
        %v2724 = vld [vmem:[#allocation10 + $0xa64] sm:$0xf]
        %v2725 = vld [vmem:[#allocation10 + $0xa68] sm:$0xff]
        %v2726 = vld [vmem:[#allocation10 + $0xa70] sm:$0xf]
        %v2727 = vld [vmem:[#allocation10 + $0xa74] sm:$0xff]
        %v2728 = vld [vmem:[#allocation10 + $0xa7c] sm:$0xf]
        %v2729 = vld [vmem:[#allocation10 + $0xa80] sm:$0xff]
        %v2730 = vld [vmem:[#allocation10 + $0xa88] sm:$0xf]
        %v2731 = vld [vmem:[#allocation10 + $0xa8c] sm:$0xff]
        %v2732 = vld [vmem:[#allocation10 + $0xa94] sm:$0xf]
        %v2733 = vld [vmem:[#allocation10 + $0xa98] sm:$0xff]
        %v2734 = vld [vmem:[#allocation10 + $0xaa0] sm:$0xf]
        %v2735 = vld [vmem:[#allocation10 + $0xaa4] sm:$0xff]
        %v2736 = vld [vmem:[#allocation10 + $0xaac] sm:$0xf]
        %v2737 = vld [vmem:[#allocation10 + $0xab0] sm:$0xff]
        %v2738 = vld [vmem:[#allocation10 + $0xab8] sm:$0xf]
        %v2739 = vld [vmem:[#allocation10 + $0xabc] sm:$0xff]
        %v2740 = vld [vmem:[#allocation10 + $0xac4] sm:$0xf]
        %v2741 = vld [vmem:[#allocation10 + $0xac8] sm:$0xff]
        %v2742 = vld [vmem:[#allocation10 + $0xad0] sm:$0xf]
        %v2743 = vld [vmem:[#allocation10 + $0xad4] sm:$0xff]
        %v2744 = vld [vmem:[#allocation10 + $0xadc] sm:$0xf]
        %v2745 = vld [vmem:[#allocation10 + $0xae0] sm:$0xff]
        %v2746 = vld [vmem:[#allocation10 + $0xae8] sm:$0xf]
        %v2747 = vld [vmem:[#allocation10 + $0xaec] sm:$0xff]
        %v2748 = vld [vmem:[#allocation10 + $0xaf4] sm:$0xf]
        %v2749 = vld [vmem:[#allocation10 + $0xaf8] sm:$0xff]
        %v2750 = vld [vmem:[#allocation10 + $0xb00] sm:$0xf]
        %v2751 = vld [vmem:[#allocation10 + $0xb04] sm:$0xff]
        %v2752 = vld [vmem:[#allocation10 + $0xb0c] sm:$0xf]
        %v2753 = vld [vmem:[#allocation10 + $0xb10] sm:$0xff]
        %v2754 = vld [vmem:[#allocation10 + $0xb18] sm:$0xf]
        %v2755 = vld [vmem:[#allocation10 + $0xb1c] sm:$0xff]
        %v2756 = vld [vmem:[#allocation10 + $0xb24] sm:$0xf]
        %v2757 = vld [vmem:[#allocation10 + $0xb28] sm:$0xff]
        %v2758 = vld [vmem:[#allocation10 + $0xb30] sm:$0xf]
        %v2759 = vld [vmem:[#allocation10 + $0xb34] sm:$0xff]
        %v2760 = vld [vmem:[#allocation10 + $0xb3c] sm:$0xf]
        %v2761 = vld [vmem:[#allocation10 + $0xb40] sm:$0xff]
        %v2762 = vld [vmem:[#allocation10 + $0xb48] sm:$0xf]
        %v2763 = vld [vmem:[#allocation10 + $0xb4c] sm:$0xff]
        %v2764 = vld [vmem:[#allocation10 + $0xb54] sm:$0xf]
        %v2765 = vld [vmem:[#allocation10 + $0xb58] sm:$0xff]
        %v2766 = vld [vmem:[#allocation10 + $0xb60] sm:$0xf]
        %v2767 = vld [vmem:[#allocation10 + $0xb64] sm:$0xff]
        %v2768 = vld [vmem:[#allocation10 + $0xb6c] sm:$0xf]
        %v2769 = vld [vmem:[#allocation10 + $0xb70] sm:$0xff]
        %v2770 = vld [vmem:[#allocation10 + $0xb78] sm:$0xf]
        %v2771 = vld [vmem:[#allocation10 + $0xb7c] sm:$0xff]
        %v2772 = vld [vmem:[#allocation10 + $0xb84] sm:$0xf]
        %v2773 = vld [vmem:[#allocation10 + $0xb88] sm:$0xff]
        %v2774 = vld [vmem:[#allocation10 + $0xb90] sm:$0xf]
        %v2775 = vld [vmem:[#allocation10 + $0xb94] sm:$0xff]
        %v2776 = vld [vmem:[#allocation10 + $0xb9c] sm:$0xf]
        %v2777 = vld [vmem:[#allocation10 + $0xba0] sm:$0xff]
        %v2778 = vld [vmem:[#allocation10 + $0xba8] sm:$0xf]
        %v2779 = vld [vmem:[#allocation10 + $0xbac] sm:$0xff]
        %v2780 = vld [vmem:[#allocation10 + $0xbb4] sm:$0xf]
        %v2781 = vld [vmem:[#allocation10 + $0xbb8] sm:$0xff]
        %v2782 = vld [vmem:[#allocation10 + $0xbc0] sm:$0xf]
        %v2783 = vld [vmem:[#allocation10 + $0xbc4] sm:$0xff]
        %v2784 = vld [vmem:[#allocation10 + $0xbcc] sm:$0xf]
        %v2785 = vld [vmem:[#allocation10 + $0xbd0] sm:$0xff]
        %v2786 = vld [vmem:[#allocation10 + $0xbd8] sm:$0xf]
        %v2787 = vld [vmem:[#allocation10 + $0xbdc] sm:$0xff]
        %v2788 = vld [vmem:[#allocation10 + $0xbe4] sm:$0xf]
        %v2789 = vld [vmem:[#allocation10 + $0xbe8] sm:$0xff]
        %v2790 = vld [vmem:[#allocation10 + $0xbf0] sm:$0xf]
        %v2791 = vld [vmem:[#allocation10 + $0xbf4] sm:$0xff]
        %v2792 = vld [vmem:[#allocation10 + $0xbfc] sm:$0xf]
        %v2793 = vld [vmem:[#allocation11] sm:$0x7]
        %v2795 = vlaneseq
        %v2796 = vshrl.u32 %v2795, 7
        %v2797 = vsub.s32 0, %v2796
        %v2798 = vrot.slane %v2793, %v2797
        %v2799 = vlaneseq
        %v2800 = vshrl.u32 %v2799, 7
        %v2801 = vsub.s32 1, %v2800
        %v2802 = vrot.slane %v2793, %v2801
        %v2803 = vlaneseq
        %v2804 = vshrl.u32 %v2803, 7
        %v2805 = vsub.s32 2, %v2804
        %v2806 = vrot.slane %v2793, %v2805
        %v3322 = vunpack.c.l.b16 %v2281
        %v3323 = vunpack.c.h.b16 %v2281
        %v3324 = vunpack.c.l.b16 %v2282
        %v3325 = vunpack.c.l.b16 %v2283
        %v3326 = vunpack.c.h.b16 %v2283
        %v3327 = vunpack.c.l.b16 %v2284
        %v3328 = vunpack.c.l.b16 %v2285
        %v3329 = vunpack.c.h.b16 %v2285
        %v3330 = vunpack.c.l.b16 %v2286
        %v3331 = vunpack.c.l.b16 %v2287
        %v3332 = vunpack.c.h.b16 %v2287
        %v3333 = vunpack.c.l.b16 %v2288
        %v3334 = vunpack.c.l.b16 %v2289
        %v3335 = vunpack.c.h.b16 %v2289
        %v3336 = vunpack.c.l.b16 %v2290
        %v3337 = vunpack.c.l.b16 %v2291
        %v3338 = vunpack.c.h.b16 %v2291
        %v3339 = vunpack.c.l.b16 %v2292
        %v3340 = vunpack.c.l.b16 %v2293
        %v3341 = vunpack.c.h.b16 %v2293
        %v3342 = vunpack.c.l.b16 %v2294
        %v3343 = vunpack.c.l.b16 %v2295
        %v3344 = vunpack.c.h.b16 %v2295
        %v3345 = vunpack.c.l.b16 %v2296
        %v3346 = vunpack.c.l.b16 %v2297
        %v3347 = vunpack.c.h.b16 %v2297
        %v3348 = vunpack.c.l.b16 %v2298
        %v3349 = vunpack.c.l.b16 %v2299
        %v3350 = vunpack.c.h.b16 %v2299
        %v3351 = vunpack.c.l.b16 %v2300
        %v3352 = vunpack.c.l.b16 %v2301
        %v3353 = vunpack.c.h.b16 %v2301
        %v3354 = vunpack.c.l.b16 %v2302
        %v3355 = vunpack.c.l.b16 %v2303
        %v3356 = vunpack.c.h.b16 %v2303
        %v3357 = vunpack.c.l.b16 %v2304
        %v3358 = vunpack.c.l.b16 %v2305
        %v3359 = vunpack.c.h.b16 %v2305
        %v3360 = vunpack.c.l.b16 %v2306
        %v3361 = vunpack.c.l.b16 %v2307
        %v3362 = vunpack.c.h.b16 %v2307
        %v3363 = vunpack.c.l.b16 %v2308
        %v3364 = vunpack.c.l.b16 %v2309
        %v3365 = vunpack.c.h.b16 %v2309
        %v3366 = vunpack.c.l.b16 %v2310
        %v3367 = vunpack.c.l.b16 %v2311
        %v3368 = vunpack.c.h.b16 %v2311
        %v3369 = vunpack.c.l.b16 %v2312
        %v3370 = vunpack.c.l.b16 %v2313
        %v3371 = vunpack.c.h.b16 %v2313
        %v3372 = vunpack.c.l.b16 %v2314
        %v3373 = vunpack.c.l.b16 %v2315
        %v3374 = vunpack.c.h.b16 %v2315
        %v3375 = vunpack.c.l.b16 %v2316
        %v3376 = vunpack.c.l.b16 %v2317
        %v3377 = vunpack.c.h.b16 %v2317
        %v3378 = vunpack.c.l.b16 %v2318
        %v3379 = vunpack.c.l.b16 %v2319
        %v3380 = vunpack.c.h.b16 %v2319
        %v3381 = vunpack.c.l.b16 %v2320
        %v3382 = vunpack.c.l.b16 %v2321
        %v3383 = vunpack.c.h.b16 %v2321
        %v3384 = vunpack.c.l.b16 %v2322
        %v3385 = vunpack.c.l.b16 %v2323
        %v3386 = vunpack.c.h.b16 %v2323
        %v3387 = vunpack.c.l.b16 %v2324
        %v3388 = vunpack.c.l.b16 %v2325
        %v3389 = vunpack.c.h.b16 %v2325
        %v3390 = vunpack.c.l.b16 %v2326
        %v3391 = vunpack.c.l.b16 %v2327
        %v3392 = vunpack.c.h.b16 %v2327
        %v3393 = vunpack.c.l.b16 %v2328
        %v3394 = vunpack.c.l.b16 %v2329
        %v3395 = vunpack.c.h.b16 %v2329
        %v3396 = vunpack.c.l.b16 %v2330
        %v3397 = vunpack.c.l.b16 %v2331
        %v3398 = vunpack.c.h.b16 %v2331
        %v3399 = vunpack.c.l.b16 %v2332
        %v3400 = vunpack.c.l.b16 %v2333
        %v3401 = vunpack.c.h.b16 %v2333
        %v3402 = vunpack.c.l.b16 %v2334
        %v3403 = vunpack.c.l.b16 %v2335
        %v3404 = vunpack.c.h.b16 %v2335
        %v3405 = vunpack.c.l.b16 %v2336
        %v3406 = vunpack.c.l.b16 %v2337
        %v3407 = vunpack.c.h.b16 %v2337
        %v3408 = vunpack.c.l.b16 %v2338
        %v3409 = vunpack.c.l.b16 %v2339
        %v3410 = vunpack.c.h.b16 %v2339
        %v3411 = vunpack.c.l.b16 %v2340
        %v3412 = vunpack.c.l.b16 %v2341
        %v3413 = vunpack.c.h.b16 %v2341
        %v3414 = vunpack.c.l.b16 %v2342
        %v3415 = vunpack.c.l.b16 %v2343
        %v3416 = vunpack.c.h.b16 %v2343
        %v3417 = vunpack.c.l.b16 %v2344
        %v3418 = vunpack.c.l.b16 %v2345
        %v3419 = vunpack.c.h.b16 %v2345
        %v3420 = vunpack.c.l.b16 %v2346
        %v3421 = vunpack.c.l.b16 %v2347
        %v3422 = vunpack.c.h.b16 %v2347
        %v3423 = vunpack.c.l.b16 %v2348
        %v3424 = vunpack.c.l.b16 %v2349
        %v3425 = vunpack.c.h.b16 %v2349
        %v3426 = vunpack.c.l.b16 %v2350
        %v3427 = vunpack.c.l.b16 %v2351
        %v3428 = vunpack.c.h.b16 %v2351
        %v3429 = vunpack.c.l.b16 %v2352
        %v3430 = vunpack.c.l.b16 %v2353
        %v3431 = vunpack.c.h.b16 %v2353
        %v3432 = vunpack.c.l.b16 %v2354
        %v3433 = vunpack.c.l.b16 %v2355
        %v3434 = vunpack.c.h.b16 %v2355
        %v3435 = vunpack.c.l.b16 %v2356
        %v3436 = vunpack.c.l.b16 %v2357
        %v3437 = vunpack.c.h.b16 %v2357
        %v3438 = vunpack.c.l.b16 %v2358
        %v3439 = vunpack.c.l.b16 %v2359
        %v3440 = vunpack.c.h.b16 %v2359
        %v3441 = vunpack.c.l.b16 %v2360
        %v3442 = vunpack.c.l.b16 %v2361
        %v3443 = vunpack.c.h.b16 %v2361
        %v3444 = vunpack.c.l.b16 %v2362
        %v3445 = vunpack.c.l.b16 %v2363
        %v3446 = vunpack.c.h.b16 %v2363
        %v3447 = vunpack.c.l.b16 %v2364
        %v3448 = vunpack.c.l.b16 %v2365
        %v3449 = vunpack.c.h.b16 %v2365
        %v3450 = vunpack.c.l.b16 %v2366
        %v3451 = vunpack.c.l.b16 %v2367
        %v3452 = vunpack.c.h.b16 %v2367
        %v3453 = vunpack.c.l.b16 %v2368
        %v3454 = vunpack.c.l.b16 %v2369
        %v3455 = vunpack.c.h.b16 %v2369
        %v3456 = vunpack.c.l.b16 %v2370
        %v3457 = vunpack.c.l.b16 %v2371
        %v3458 = vunpack.c.h.b16 %v2371
        %v3459 = vunpack.c.l.b16 %v2372
        %v3460 = vunpack.c.l.b16 %v2373
        %v3461 = vunpack.c.h.b16 %v2373
        %v3462 = vunpack.c.l.b16 %v2374
        %v3463 = vunpack.c.l.b16 %v2375
        %v3464 = vunpack.c.h.b16 %v2375
        %v3465 = vunpack.c.l.b16 %v2376
        %v3466 = vunpack.c.l.b16 %v2377
        %v3467 = vunpack.c.h.b16 %v2377
        %v3468 = vunpack.c.l.b16 %v2378
        %v3469 = vunpack.c.l.b16 %v2379
        %v3470 = vunpack.c.h.b16 %v2379
        %v3471 = vunpack.c.l.b16 %v2380
        %v3472 = vunpack.c.l.b16 %v2381
        %v3473 = vunpack.c.h.b16 %v2381
        %v3474 = vunpack.c.l.b16 %v2382
        %v3475 = vunpack.c.l.b16 %v2383
        %v3476 = vunpack.c.h.b16 %v2383
        %v3477 = vunpack.c.l.b16 %v2384
        %v3478 = vunpack.c.l.b16 %v2385
        %v3479 = vunpack.c.h.b16 %v2385
        %v3480 = vunpack.c.l.b16 %v2386
        %v3481 = vunpack.c.l.b16 %v2387
        %v3482 = vunpack.c.h.b16 %v2387
        %v3483 = vunpack.c.l.b16 %v2388
        %v3484 = vunpack.c.l.b16 %v2389
        %v3485 = vunpack.c.h.b16 %v2389
        %v3486 = vunpack.c.l.b16 %v2390
        %v3487 = vunpack.c.l.b16 %v2391
        %v3488 = vunpack.c.h.b16 %v2391
        %v3489 = vunpack.c.l.b16 %v2392
        %v3490 = vunpack.c.l.b16 %v2393
        %v3491 = vunpack.c.h.b16 %v2393
        %v3492 = vunpack.c.l.b16 %v2394
        %v3493 = vunpack.c.l.b16 %v2395
        %v3494 = vunpack.c.h.b16 %v2395
        %v3495 = vunpack.c.l.b16 %v2396
        %v3496 = vunpack.c.l.b16 %v2397
        %v3497 = vunpack.c.h.b16 %v2397
        %v3498 = vunpack.c.l.b16 %v2398
        %v3499 = vunpack.c.l.b16 %v2399
        %v3500 = vunpack.c.h.b16 %v2399
        %v3501 = vunpack.c.l.b16 %v2400
        %v3502 = vunpack.c.l.b16 %v2401
        %v3503 = vunpack.c.h.b16 %v2401
        %v3504 = vunpack.c.l.b16 %v2402
        %v3505 = vunpack.c.l.b16 %v2403
        %v3506 = vunpack.c.h.b16 %v2403
        %v3507 = vunpack.c.l.b16 %v2404
        %v3508 = vunpack.c.l.b16 %v2405
        %v3509 = vunpack.c.h.b16 %v2405
        %v3510 = vunpack.c.l.b16 %v2406
        %v3511 = vunpack.c.l.b16 %v2407
        %v3512 = vunpack.c.h.b16 %v2407
        %v3513 = vunpack.c.l.b16 %v2408
        %v3514 = vunpack.c.l.b16 %v2409
        %v3515 = vunpack.c.h.b16 %v2409
        %v3516 = vunpack.c.l.b16 %v2410
        %v3517 = vunpack.c.l.b16 %v2411
        %v3518 = vunpack.c.h.b16 %v2411
        %v3519 = vunpack.c.l.b16 %v2412
        %v3520 = vunpack.c.l.b16 %v2413
        %v3521 = vunpack.c.h.b16 %v2413
        %v3522 = vunpack.c.l.b16 %v2414
        %v3523 = vunpack.c.l.b16 %v2415
        %v3524 = vunpack.c.h.b16 %v2415
        %v3525 = vunpack.c.l.b16 %v2416
        %v3526 = vunpack.c.l.b16 %v2417
        %v3527 = vunpack.c.h.b16 %v2417
        %v3528 = vunpack.c.l.b16 %v2418
        %v3529 = vunpack.c.l.b16 %v2419
        %v3530 = vunpack.c.h.b16 %v2419
        %v3531 = vunpack.c.l.b16 %v2420
        %v3532 = vunpack.c.l.b16 %v2421
        %v3533 = vunpack.c.h.b16 %v2421
        %v3534 = vunpack.c.l.b16 %v2422
        %v3535 = vunpack.c.l.b16 %v2423
        %v3536 = vunpack.c.h.b16 %v2423
        %v3537 = vunpack.c.l.b16 %v2424
        %v3538 = vunpack.c.l.b16 %v2425
        %v3539 = vunpack.c.h.b16 %v2425
        %v3540 = vunpack.c.l.b16 %v2426
        %v3541 = vunpack.c.l.b16 %v2427
        %v3542 = vunpack.c.h.b16 %v2427
        %v3543 = vunpack.c.l.b16 %v2428
        %v3544 = vunpack.c.l.b16 %v2429
        %v3545 = vunpack.c.h.b16 %v2429
        %v3546 = vunpack.c.l.b16 %v2430
        %v3547 = vunpack.c.l.b16 %v2431
        %v3548 = vunpack.c.h.b16 %v2431
        %v3549 = vunpack.c.l.b16 %v2432
        %v3550 = vunpack.c.l.b16 %v2433
        %v3551 = vunpack.c.h.b16 %v2433
        %v3552 = vunpack.c.l.b16 %v2434
        %v3553 = vunpack.c.l.b16 %v2435
        %v3554 = vunpack.c.h.b16 %v2435
        %v3555 = vunpack.c.l.b16 %v2436
        %v3556 = vunpack.c.l.b16 %v2437
        %v3557 = vunpack.c.h.b16 %v2437
        %v3558 = vunpack.c.l.b16 %v2438
        %v3559 = vunpack.c.l.b16 %v2439
        %v3560 = vunpack.c.h.b16 %v2439
        %v3561 = vunpack.c.l.b16 %v2440
        %v3562 = vunpack.c.l.b16 %v2441
        %v3563 = vunpack.c.h.b16 %v2441
        %v3564 = vunpack.c.l.b16 %v2442
        %v3565 = vunpack.c.l.b16 %v2443
        %v3566 = vunpack.c.h.b16 %v2443
        %v3567 = vunpack.c.l.b16 %v2444
        %v3568 = vunpack.c.l.b16 %v2445
        %v3569 = vunpack.c.h.b16 %v2445
        %v3570 = vunpack.c.l.b16 %v2446
        %v3571 = vunpack.c.l.b16 %v2447
        %v3572 = vunpack.c.h.b16 %v2447
        %v3573 = vunpack.c.l.b16 %v2448
        %v3574 = vunpack.c.l.b16 %v2449
        %v3575 = vunpack.c.h.b16 %v2449
        %v3576 = vunpack.c.l.b16 %v2450
        %v3577 = vunpack.c.l.b16 %v2451
        %v3578 = vunpack.c.h.b16 %v2451
        %v3579 = vunpack.c.l.b16 %v2452
        %v3580 = vunpack.c.l.b16 %v2453
        %v3581 = vunpack.c.h.b16 %v2453
        %v3582 = vunpack.c.l.b16 %v2454
        %v3583 = vunpack.c.l.b16 %v2455
        %v3584 = vunpack.c.h.b16 %v2455
        %v3585 = vunpack.c.l.b16 %v2456
        %v3586 = vunpack.c.l.b16 %v2457
        %v3587 = vunpack.c.h.b16 %v2457
        %v3588 = vunpack.c.l.b16 %v2458
        %v3589 = vunpack.c.l.b16 %v2459
        %v3590 = vunpack.c.h.b16 %v2459
        %v3591 = vunpack.c.l.b16 %v2460
        %v3592 = vunpack.c.l.b16 %v2461
        %v3593 = vunpack.c.h.b16 %v2461
        %v3594 = vunpack.c.l.b16 %v2462
        %v3595 = vunpack.c.l.b16 %v2463
        %v3596 = vunpack.c.h.b16 %v2463
        %v3597 = vunpack.c.l.b16 %v2464
        %v3598 = vunpack.c.l.b16 %v2465
        %v3599 = vunpack.c.h.b16 %v2465
        %v3600 = vunpack.c.l.b16 %v2466
        %v3601 = vunpack.c.l.b16 %v2467
        %v3602 = vunpack.c.h.b16 %v2467
        %v3603 = vunpack.c.l.b16 %v2468
        %v3604 = vunpack.c.l.b16 %v2469
        %v3605 = vunpack.c.h.b16 %v2469
        %v3606 = vunpack.c.l.b16 %v2470
        %v3607 = vunpack.c.l.b16 %v2471
        %v3608 = vunpack.c.h.b16 %v2471
        %v3609 = vunpack.c.l.b16 %v2472
        %v3610 = vunpack.c.l.b16 %v2473
        %v3611 = vunpack.c.h.b16 %v2473
        %v3612 = vunpack.c.l.b16 %v2474
        %v3613 = vunpack.c.l.b16 %v2475
        %v3614 = vunpack.c.h.b16 %v2475
        %v3615 = vunpack.c.l.b16 %v2476
        %v3616 = vunpack.c.l.b16 %v2477
        %v3617 = vunpack.c.h.b16 %v2477
        %v3618 = vunpack.c.l.b16 %v2478
        %v3619 = vunpack.c.l.b16 %v2479
        %v3620 = vunpack.c.h.b16 %v2479
        %v3621 = vunpack.c.l.b16 %v2480
        %v3622 = vunpack.c.l.b16 %v2481
        %v3623 = vunpack.c.h.b16 %v2481
        %v3624 = vunpack.c.l.b16 %v2482
        %v3625 = vunpack.c.l.b16 %v2483
        %v3626 = vunpack.c.h.b16 %v2483
        %v3627 = vunpack.c.l.b16 %v2484
        %v3628 = vunpack.c.l.b16 %v2485
        %v3629 = vunpack.c.h.b16 %v2485
        %v3630 = vunpack.c.l.b16 %v2486
        %v3631 = vunpack.c.l.b16 %v2487
        %v3632 = vunpack.c.h.b16 %v2487
        %v3633 = vunpack.c.l.b16 %v2488
        %v3634 = vunpack.c.l.b16 %v2489
        %v3635 = vunpack.c.h.b16 %v2489
        %v3636 = vunpack.c.l.b16 %v2490
        %v3637 = vunpack.c.l.b16 %v2491
        %v3638 = vunpack.c.h.b16 %v2491
        %v3639 = vunpack.c.l.b16 %v2492
        %v3640 = vunpack.c.l.b16 %v2493
        %v3641 = vunpack.c.h.b16 %v2493
        %v3642 = vunpack.c.l.b16 %v2494
        %v3643 = vunpack.c.l.b16 %v2495
        %v3644 = vunpack.c.h.b16 %v2495
        %v3645 = vunpack.c.l.b16 %v2496
        %v3646 = vunpack.c.l.b16 %v2497
        %v3647 = vunpack.c.h.b16 %v2497
        %v3648 = vunpack.c.l.b16 %v2498
        %v3649 = vunpack.c.l.b16 %v2499
        %v3650 = vunpack.c.h.b16 %v2499
        %v3651 = vunpack.c.l.b16 %v2500
        %v3652 = vunpack.c.l.b16 %v2501
        %v3653 = vunpack.c.h.b16 %v2501
        %v3654 = vunpack.c.l.b16 %v2502
        %v3655 = vunpack.c.l.b16 %v2503
        %v3656 = vunpack.c.h.b16 %v2503
        %v3657 = vunpack.c.l.b16 %v2504
        %v3658 = vunpack.c.l.b16 %v2505
        %v3659 = vunpack.c.h.b16 %v2505
        %v3660 = vunpack.c.l.b16 %v2506
        %v3661 = vunpack.c.l.b16 %v2507
        %v3662 = vunpack.c.h.b16 %v2507
        %v3663 = vunpack.c.l.b16 %v2508
        %v3664 = vunpack.c.l.b16 %v2509
        %v3665 = vunpack.c.h.b16 %v2509
        %v3666 = vunpack.c.l.b16 %v2510
        %v3667 = vunpack.c.l.b16 %v2511
        %v3668 = vunpack.c.h.b16 %v2511
        %v3669 = vunpack.c.l.b16 %v2512
        %v3670 = vunpack.c.l.b16 %v2513
        %v3671 = vunpack.c.h.b16 %v2513
        %v3672 = vunpack.c.l.b16 %v2514
        %v3673 = vunpack.c.l.b16 %v2515
        %v3674 = vunpack.c.h.b16 %v2515
        %v3675 = vunpack.c.l.b16 %v2516
        %v3676 = vunpack.c.l.b16 %v2517
        %v3677 = vunpack.c.h.b16 %v2517
        %v3678 = vunpack.c.l.b16 %v2518
        %v3679 = vunpack.c.l.b16 %v2519
        %v3680 = vunpack.c.h.b16 %v2519
        %v3681 = vunpack.c.l.b16 %v2520
        %v3682 = vunpack.c.l.b16 %v2521
        %v3683 = vunpack.c.h.b16 %v2521
        %v3684 = vunpack.c.l.b16 %v2522
        %v3685 = vunpack.c.l.b16 %v2523
        %v3686 = vunpack.c.h.b16 %v2523
        %v3687 = vunpack.c.l.b16 %v2524
        %v3688 = vunpack.c.l.b16 %v2525
        %v3689 = vunpack.c.h.b16 %v2525
        %v3690 = vunpack.c.l.b16 %v2526
        %v3691 = vunpack.c.l.b16 %v2527
        %v3692 = vunpack.c.h.b16 %v2527
        %v3693 = vunpack.c.l.b16 %v2528
        %v3694 = vunpack.c.l.b16 %v2529
        %v3695 = vunpack.c.h.b16 %v2529
        %v3696 = vunpack.c.l.b16 %v2530
        %v3697 = vunpack.c.l.b16 %v2531
        %v3698 = vunpack.c.h.b16 %v2531
        %v3699 = vunpack.c.l.b16 %v2532
        %v3700 = vunpack.c.l.b16 %v2533
        %v3701 = vunpack.c.h.b16 %v2533
        %v3702 = vunpack.c.l.b16 %v2534
        %v3703 = vunpack.c.l.b16 %v2535
        %v3704 = vunpack.c.h.b16 %v2535
        %v3705 = vunpack.c.l.b16 %v2536
        %v3706 = vunpack.c.l.b16 %v2537
        %v3707 = vunpack.c.h.b16 %v2537
        %v3708 = vunpack.c.l.b16 %v2538
        %v3709 = vunpack.c.l.b16 %v2539
        %v3710 = vunpack.c.h.b16 %v2539
        %v3711 = vunpack.c.l.b16 %v2540
        %v3712 = vunpack.c.l.b16 %v2541
        %v3713 = vunpack.c.h.b16 %v2541
        %v3714 = vunpack.c.l.b16 %v2542
        %v3715 = vunpack.c.l.b16 %v2543
        %v3716 = vunpack.c.h.b16 %v2543
        %v3717 = vunpack.c.l.b16 %v2544
        %v3718 = vunpack.c.l.b16 %v2545
        %v3719 = vunpack.c.h.b16 %v2545
        %v3720 = vunpack.c.l.b16 %v2546
        %v3721 = vunpack.c.l.b16 %v2547
        %v3722 = vunpack.c.h.b16 %v2547
        %v3723 = vunpack.c.l.b16 %v2548
        %v3724 = vunpack.c.l.b16 %v2549
        %v3725 = vunpack.c.h.b16 %v2549
        %v3726 = vunpack.c.l.b16 %v2550
        %v3727 = vunpack.c.l.b16 %v2551
        %v3728 = vunpack.c.h.b16 %v2551
        %v3729 = vunpack.c.l.b16 %v2552
        %v3730 = vunpack.c.l.b16 %v2553
        %v3731 = vunpack.c.h.b16 %v2553
        %v3732 = vunpack.c.l.b16 %v2554
        %v3733 = vunpack.c.l.b16 %v2555
        %v3734 = vunpack.c.h.b16 %v2555
        %v3735 = vunpack.c.l.b16 %v2556
        %v3736 = vunpack.c.l.b16 %v2557
        %v3737 = vunpack.c.h.b16 %v2557
        %v3738 = vunpack.c.l.b16 %v2558
        %v3739 = vunpack.c.l.b16 %v2559
        %v3740 = vunpack.c.h.b16 %v2559
        %v3741 = vunpack.c.l.b16 %v2560
        %v3742 = vunpack.c.l.b16 %v2561
        %v3743 = vunpack.c.h.b16 %v2561
        %v3744 = vunpack.c.l.b16 %v2562
        %v3745 = vunpack.c.l.b16 %v2563
        %v3746 = vunpack.c.h.b16 %v2563
        %v3747 = vunpack.c.l.b16 %v2564
        %v3748 = vunpack.c.l.b16 %v2565
        %v3749 = vunpack.c.h.b16 %v2565
        %v3750 = vunpack.c.l.b16 %v2566
        %v3751 = vunpack.c.l.b16 %v2567
        %v3752 = vunpack.c.h.b16 %v2567
        %v3753 = vunpack.c.l.b16 %v2568
        %v3754 = vunpack.c.l.b16 %v2569
        %v3755 = vunpack.c.h.b16 %v2569
        %v3756 = vunpack.c.l.b16 %v2570
        %v3757 = vunpack.c.l.b16 %v2571
        %v3758 = vunpack.c.h.b16 %v2571
        %v3759 = vunpack.c.l.b16 %v2572
        %v3760 = vunpack.c.l.b16 %v2573
        %v3761 = vunpack.c.h.b16 %v2573
        %v3762 = vunpack.c.l.b16 %v2574
        %v3763 = vunpack.c.l.b16 %v2575
        %v3764 = vunpack.c.h.b16 %v2575
        %v3765 = vunpack.c.l.b16 %v2576
        %v3766 = vunpack.c.l.b16 %v2577
        %v3767 = vunpack.c.h.b16 %v2577
        %v3768 = vunpack.c.l.b16 %v2578
        %v3769 = vunpack.c.l.b16 %v2579
        %v3770 = vunpack.c.h.b16 %v2579
        %v3771 = vunpack.c.l.b16 %v2580
        %v3772 = vunpack.c.l.b16 %v2581
        %v3773 = vunpack.c.h.b16 %v2581
        %v3774 = vunpack.c.l.b16 %v2582
        %v3775 = vunpack.c.l.b16 %v2583
        %v3776 = vunpack.c.h.b16 %v2583
        %v3777 = vunpack.c.l.b16 %v2584
        %v3778 = vunpack.c.l.b16 %v2585
        %v3779 = vunpack.c.h.b16 %v2585
        %v3780 = vunpack.c.l.b16 %v2586
        %v3781 = vunpack.c.l.b16 %v2587
        %v3782 = vunpack.c.h.b16 %v2587
        %v3783 = vunpack.c.l.b16 %v2588
        %v3784 = vunpack.c.l.b16 %v2589
        %v3785 = vunpack.c.h.b16 %v2589
        %v3786 = vunpack.c.l.b16 %v2590
        %v3787 = vunpack.c.l.b16 %v2591
        %v3788 = vunpack.c.h.b16 %v2591
        %v3789 = vunpack.c.l.b16 %v2592
        %v3790 = vunpack.c.l.b16 %v2593
        %v3791 = vunpack.c.h.b16 %v2593
        %v3792 = vunpack.c.l.b16 %v2594
        %v3793 = vunpack.c.l.b16 %v2595
        %v3794 = vunpack.c.h.b16 %v2595
        %v3795 = vunpack.c.l.b16 %v2596
        %v3796 = vunpack.c.l.b16 %v2597
        %v3797 = vunpack.c.h.b16 %v2597
        %v3798 = vunpack.c.l.b16 %v2598
        %v3799 = vunpack.c.l.b16 %v2599
        %v3800 = vunpack.c.h.b16 %v2599
        %v3801 = vunpack.c.l.b16 %v2600
        %v3802 = vunpack.c.l.b16 %v2601
        %v3803 = vunpack.c.h.b16 %v2601
        %v3804 = vunpack.c.l.b16 %v2602
        %v3805 = vunpack.c.l.b16 %v2603
        %v3806 = vunpack.c.h.b16 %v2603
        %v3807 = vunpack.c.l.b16 %v2604
        %v3808 = vunpack.c.l.b16 %v2605
        %v3809 = vunpack.c.h.b16 %v2605
        %v3810 = vunpack.c.l.b16 %v2606
        %v3811 = vunpack.c.l.b16 %v2607
        %v3812 = vunpack.c.h.b16 %v2607
        %v3813 = vunpack.c.l.b16 %v2608
        %v3814 = vunpack.c.l.b16 %v2609
        %v3815 = vunpack.c.h.b16 %v2609
        %v3816 = vunpack.c.l.b16 %v2610
        %v3817 = vunpack.c.l.b16 %v2611
        %v3818 = vunpack.c.h.b16 %v2611
        %v3819 = vunpack.c.l.b16 %v2612
        %v3820 = vunpack.c.l.b16 %v2613
        %v3821 = vunpack.c.h.b16 %v2613
        %v3822 = vunpack.c.l.b16 %v2614
        %v3823 = vunpack.c.l.b16 %v2615
        %v3824 = vunpack.c.h.b16 %v2615
        %v3825 = vunpack.c.l.b16 %v2616
        %v3826 = vunpack.c.l.b16 %v2617
        %v3827 = vunpack.c.h.b16 %v2617
        %v3828 = vunpack.c.l.b16 %v2618
        %v3829 = vunpack.c.l.b16 %v2619
        %v3830 = vunpack.c.h.b16 %v2619
        %v3831 = vunpack.c.l.b16 %v2620
        %v3832 = vunpack.c.l.b16 %v2621
        %v3833 = vunpack.c.h.b16 %v2621
        %v3834 = vunpack.c.l.b16 %v2622
        %v3835 = vunpack.c.l.b16 %v2623
        %v3836 = vunpack.c.h.b16 %v2623
        %v3837 = vunpack.c.l.b16 %v2624
        %v3838 = vunpack.c.l.b16 %v2625
        %v3839 = vunpack.c.h.b16 %v2625
        %v3840 = vunpack.c.l.b16 %v2626
        %v3841 = vunpack.c.l.b16 %v2627
        %v3842 = vunpack.c.h.b16 %v2627
        %v3843 = vunpack.c.l.b16 %v2628
        %v3844 = vunpack.c.l.b16 %v2629
        %v3845 = vunpack.c.h.b16 %v2629
        %v3846 = vunpack.c.l.b16 %v2630
        %v3847 = vunpack.c.l.b16 %v2631
        %v3848 = vunpack.c.h.b16 %v2631
        %v3849 = vunpack.c.l.b16 %v2632
        %v3850 = vunpack.c.l.b16 %v2633
        %v3851 = vunpack.c.h.b16 %v2633
        %v3852 = vunpack.c.l.b16 %v2634
        %v3853 = vunpack.c.l.b16 %v2635
        %v3854 = vunpack.c.h.b16 %v2635
        %v3855 = vunpack.c.l.b16 %v2636
        %v3856 = vunpack.c.l.b16 %v2637
        %v3857 = vunpack.c.h.b16 %v2637
        %v3858 = vunpack.c.l.b16 %v2638
        %v3859 = vunpack.c.l.b16 %v2639
        %v3860 = vunpack.c.h.b16 %v2639
        %v3861 = vunpack.c.l.b16 %v2640
        %v3862 = vunpack.c.l.b16 %v2641
        %v3863 = vunpack.c.h.b16 %v2641
        %v3864 = vunpack.c.l.b16 %v2642
        %v3865 = vunpack.c.l.b16 %v2643
        %v3866 = vunpack.c.h.b16 %v2643
        %v3867 = vunpack.c.l.b16 %v2644
        %v3868 = vunpack.c.l.b16 %v2645
        %v3869 = vunpack.c.h.b16 %v2645
        %v3870 = vunpack.c.l.b16 %v2646
        %v3871 = vunpack.c.l.b16 %v2647
        %v3872 = vunpack.c.h.b16 %v2647
        %v3873 = vunpack.c.l.b16 %v2648
        %v3874 = vunpack.c.l.b16 %v2649
        %v3875 = vunpack.c.h.b16 %v2649
        %v3876 = vunpack.c.l.b16 %v2650
        %v3877 = vunpack.c.l.b16 %v2651
        %v3878 = vunpack.c.h.b16 %v2651
        %v3879 = vunpack.c.l.b16 %v2652
        %v3880 = vunpack.c.l.b16 %v2653
        %v3881 = vunpack.c.h.b16 %v2653
        %v3882 = vunpack.c.l.b16 %v2654
        %v3883 = vunpack.c.l.b16 %v2655
        %v3884 = vunpack.c.h.b16 %v2655
        %v3885 = vunpack.c.l.b16 %v2656
        %v3886 = vunpack.c.l.b16 %v2657
        %v3887 = vunpack.c.h.b16 %v2657
        %v3888 = vunpack.c.l.b16 %v2658
        %v3889 = vunpack.c.l.b16 %v2659
        %v3890 = vunpack.c.h.b16 %v2659
        %v3891 = vunpack.c.l.b16 %v2660
        %v3892 = vunpack.c.l.b16 %v2661
        %v3893 = vunpack.c.h.b16 %v2661
        %v3894 = vunpack.c.l.b16 %v2662
        %v3895 = vunpack.c.l.b16 %v2663
        %v3896 = vunpack.c.h.b16 %v2663
        %v3897 = vunpack.c.l.b16 %v2664
        %v3898 = vunpack.c.l.b16 %v2665
        %v3899 = vunpack.c.h.b16 %v2665
        %v3900 = vunpack.c.l.b16 %v2666
        %v3901 = vunpack.c.l.b16 %v2667
        %v3902 = vunpack.c.h.b16 %v2667
        %v3903 = vunpack.c.l.b16 %v2668
        %v3904 = vunpack.c.l.b16 %v2669
        %v3905 = vunpack.c.h.b16 %v2669
        %v3906 = vunpack.c.l.b16 %v2670
        %v3907 = vunpack.c.l.b16 %v2671
        %v3908 = vunpack.c.h.b16 %v2671
        %v3909 = vunpack.c.l.b16 %v2672
        %v3910 = vunpack.c.l.b16 %v2673
        %v3911 = vunpack.c.h.b16 %v2673
        %v3912 = vunpack.c.l.b16 %v2674
        %v3913 = vunpack.c.l.b16 %v2675
        %v3914 = vunpack.c.h.b16 %v2675
        %v3915 = vunpack.c.l.b16 %v2676
        %v3916 = vunpack.c.l.b16 %v2677
        %v3917 = vunpack.c.h.b16 %v2677
        %v3918 = vunpack.c.l.b16 %v2678
        %v3919 = vunpack.c.l.b16 %v2679
        %v3920 = vunpack.c.h.b16 %v2679
        %v3921 = vunpack.c.l.b16 %v2680
        %v3922 = vunpack.c.l.b16 %v2681
        %v3923 = vunpack.c.h.b16 %v2681
        %v3924 = vunpack.c.l.b16 %v2682
        %v3925 = vunpack.c.l.b16 %v2683
        %v3926 = vunpack.c.h.b16 %v2683
        %v3927 = vunpack.c.l.b16 %v2684
        %v3928 = vunpack.c.l.b16 %v2685
        %v3929 = vunpack.c.h.b16 %v2685
        %v3930 = vunpack.c.l.b16 %v2686
        %v3931 = vunpack.c.l.b16 %v2687
        %v3932 = vunpack.c.h.b16 %v2687
        %v3933 = vunpack.c.l.b16 %v2688
        %v3934 = vunpack.c.l.b16 %v2689
        %v3935 = vunpack.c.h.b16 %v2689
        %v3936 = vunpack.c.l.b16 %v2690
        %v3937 = vunpack.c.l.b16 %v2691
        %v3938 = vunpack.c.h.b16 %v2691
        %v3939 = vunpack.c.l.b16 %v2692
        %v3940 = vunpack.c.l.b16 %v2693
        %v3941 = vunpack.c.h.b16 %v2693
        %v3942 = vunpack.c.l.b16 %v2694
        %v3943 = vunpack.c.l.b16 %v2695
        %v3944 = vunpack.c.h.b16 %v2695
        %v3945 = vunpack.c.l.b16 %v2696
        %v3946 = vunpack.c.l.b16 %v2697
        %v3947 = vunpack.c.h.b16 %v2697
        %v3948 = vunpack.c.l.b16 %v2698
        %v3949 = vunpack.c.l.b16 %v2699
        %v3950 = vunpack.c.h.b16 %v2699
        %v3951 = vunpack.c.l.b16 %v2700
        %v3952 = vunpack.c.l.b16 %v2701
        %v3953 = vunpack.c.h.b16 %v2701
        %v3954 = vunpack.c.l.b16 %v2702
        %v3955 = vunpack.c.l.b16 %v2703
        %v3956 = vunpack.c.h.b16 %v2703
        %v3957 = vunpack.c.l.b16 %v2704
        %v3958 = vunpack.c.l.b16 %v2705
        %v3959 = vunpack.c.h.b16 %v2705
        %v3960 = vunpack.c.l.b16 %v2706
        %v3961 = vunpack.c.l.b16 %v2707
        %v3962 = vunpack.c.h.b16 %v2707
        %v3963 = vunpack.c.l.b16 %v2708
        %v3964 = vunpack.c.l.b16 %v2709
        %v3965 = vunpack.c.h.b16 %v2709
        %v3966 = vunpack.c.l.b16 %v2710
        %v3967 = vunpack.c.l.b16 %v2711
        %v3968 = vunpack.c.h.b16 %v2711
        %v3969 = vunpack.c.l.b16 %v2712
        %v3970 = vunpack.c.l.b16 %v2713
        %v3971 = vunpack.c.h.b16 %v2713
        %v3972 = vunpack.c.l.b16 %v2714
        %v3973 = vunpack.c.l.b16 %v2715
        %v3974 = vunpack.c.h.b16 %v2715
        %v3975 = vunpack.c.l.b16 %v2716
        %v3976 = vunpack.c.l.b16 %v2717
        %v3977 = vunpack.c.h.b16 %v2717
        %v3978 = vunpack.c.l.b16 %v2718
        %v3979 = vunpack.c.l.b16 %v2719
        %v3980 = vunpack.c.h.b16 %v2719
        %v3981 = vunpack.c.l.b16 %v2720
        %v3982 = vunpack.c.l.b16 %v2721
        %v3983 = vunpack.c.h.b16 %v2721
        %v3984 = vunpack.c.l.b16 %v2722
        %v3985 = vunpack.c.l.b16 %v2723
        %v3986 = vunpack.c.h.b16 %v2723
        %v3987 = vunpack.c.l.b16 %v2724
        %v3988 = vunpack.c.l.b16 %v2725
        %v3989 = vunpack.c.h.b16 %v2725
        %v3990 = vunpack.c.l.b16 %v2726
        %v3991 = vunpack.c.l.b16 %v2727
        %v3992 = vunpack.c.h.b16 %v2727
        %v3993 = vunpack.c.l.b16 %v2728
        %v3994 = vunpack.c.l.b16 %v2729
        %v3995 = vunpack.c.h.b16 %v2729
        %v3996 = vunpack.c.l.b16 %v2730
        %v3997 = vunpack.c.l.b16 %v2731
        %v3998 = vunpack.c.h.b16 %v2731
        %v3999 = vunpack.c.l.b16 %v2732
        %v4000 = vunpack.c.l.b16 %v2733
        %v4001 = vunpack.c.h.b16 %v2733
        %v4002 = vunpack.c.l.b16 %v2734
        %v4003 = vunpack.c.l.b16 %v2735
        %v4004 = vunpack.c.h.b16 %v2735
        %v4005 = vunpack.c.l.b16 %v2736
        %v4006 = vunpack.c.l.b16 %v2737
        %v4007 = vunpack.c.h.b16 %v2737
        %v4008 = vunpack.c.l.b16 %v2738
        %v4009 = vunpack.c.l.b16 %v2739
        %v4010 = vunpack.c.h.b16 %v2739
        %v4011 = vunpack.c.l.b16 %v2740
        %v4012 = vunpack.c.l.b16 %v2741
        %v4013 = vunpack.c.h.b16 %v2741
        %v4014 = vunpack.c.l.b16 %v2742
        %v4015 = vunpack.c.l.b16 %v2743
        %v4016 = vunpack.c.h.b16 %v2743
        %v4017 = vunpack.c.l.b16 %v2744
        %v4018 = vunpack.c.l.b16 %v2745
        %v4019 = vunpack.c.h.b16 %v2745
        %v4020 = vunpack.c.l.b16 %v2746
        %v4021 = vunpack.c.l.b16 %v2747
        %v4022 = vunpack.c.h.b16 %v2747
        %v4023 = vunpack.c.l.b16 %v2748
        %v4024 = vunpack.c.l.b16 %v2749
        %v4025 = vunpack.c.h.b16 %v2749
        %v4026 = vunpack.c.l.b16 %v2750
        %v4027 = vunpack.c.l.b16 %v2751
        %v4028 = vunpack.c.h.b16 %v2751
        %v4029 = vunpack.c.l.b16 %v2752
        %v4030 = vunpack.c.l.b16 %v2753
        %v4031 = vunpack.c.h.b16 %v2753
        %v4032 = vunpack.c.l.b16 %v2754
        %v4033 = vunpack.c.l.b16 %v2755
        %v4034 = vunpack.c.h.b16 %v2755
        %v4035 = vunpack.c.l.b16 %v2756
        %v4036 = vunpack.c.l.b16 %v2757
        %v4037 = vunpack.c.h.b16 %v2757
        %v4038 = vunpack.c.l.b16 %v2758
        %v4039 = vunpack.c.l.b16 %v2759
        %v4040 = vunpack.c.h.b16 %v2759
        %v4041 = vunpack.c.l.b16 %v2760
        %v4042 = vunpack.c.l.b16 %v2761
        %v4043 = vunpack.c.h.b16 %v2761
        %v4044 = vunpack.c.l.b16 %v2762
        %v4045 = vunpack.c.l.b16 %v2763
        %v4046 = vunpack.c.h.b16 %v2763
        %v4047 = vunpack.c.l.b16 %v2764
        %v4048 = vunpack.c.l.b16 %v2765
        %v4049 = vunpack.c.h.b16 %v2765
        %v4050 = vunpack.c.l.b16 %v2766
        %v4051 = vunpack.c.l.b16 %v2767
        %v4052 = vunpack.c.h.b16 %v2767
        %v4053 = vunpack.c.l.b16 %v2768
        %v4054 = vunpack.c.l.b16 %v2769
        %v4055 = vunpack.c.h.b16 %v2769
        %v4056 = vunpack.c.l.b16 %v2770
        %v4057 = vunpack.c.l.b16 %v2771
        %v4058 = vunpack.c.h.b16 %v2771
        %v4059 = vunpack.c.l.b16 %v2772
        %v4060 = vunpack.c.l.b16 %v2773
        %v4061 = vunpack.c.h.b16 %v2773
        %v4062 = vunpack.c.l.b16 %v2774
        %v4063 = vunpack.c.l.b16 %v2775
        %v4064 = vunpack.c.h.b16 %v2775
        %v4065 = vunpack.c.l.b16 %v2776
        %v4066 = vunpack.c.l.b16 %v2777
        %v4067 = vunpack.c.h.b16 %v2777
        %v4068 = vunpack.c.l.b16 %v2778
        %v4069 = vunpack.c.l.b16 %v2779
        %v4070 = vunpack.c.h.b16 %v2779
        %v4071 = vunpack.c.l.b16 %v2780
        %v4072 = vunpack.c.l.b16 %v2781
        %v4073 = vunpack.c.h.b16 %v2781
        %v4074 = vunpack.c.l.b16 %v2782
        %v4075 = vunpack.c.l.b16 %v2783
        %v4076 = vunpack.c.h.b16 %v2783
        %v4077 = vunpack.c.l.b16 %v2784
        %v4078 = vunpack.c.l.b16 %v2785
        %v4079 = vunpack.c.h.b16 %v2785
        %v4080 = vunpack.c.l.b16 %v2786
        %v4081 = vunpack.c.l.b16 %v2787
        %v4082 = vunpack.c.h.b16 %v2787
        %v4083 = vunpack.c.l.b16 %v2788
        %v4084 = vunpack.c.l.b16 %v2789
        %v4085 = vunpack.c.h.b16 %v2789
        %v4086 = vunpack.c.l.b16 %v2790
        %v4087 = vunpack.c.l.b16 %v2791
        %v4088 = vunpack.c.h.b16 %v2791
        %v4089 = vunpack.c.l.b16 %v2792
        %v4090 = vpack.c.b16 %v3325, %v3322
        %v4091 = vpack.c.b16 %v3326, %v3323
        %v4092 = vpack.c.b16 %v3327, %v3324
        %v4093 = vpack.c.b16 %v3331, %v3328
        %v4094 = vpack.c.b16 %v3332, %v3329
        %v4095 = vpack.c.b16 %v3333, %v3330
        %v4096 = vpack.c.b16 %v3337, %v3334
        %v4097 = vpack.c.b16 %v3338, %v3335
        %v4098 = vpack.c.b16 %v3339, %v3336
        %v4099 = vpack.c.b16 %v3343, %v3340
        %v4100 = vpack.c.b16 %v3344, %v3341
        %v4101 = vpack.c.b16 %v3345, %v3342
        %v4102 = vpack.c.b16 %v3349, %v3346
        %v4103 = vpack.c.b16 %v3350, %v3347
        %v4104 = vpack.c.b16 %v3351, %v3348
        %v4105 = vpack.c.b16 %v3355, %v3352
        %v4106 = vpack.c.b16 %v3356, %v3353
        %v4107 = vpack.c.b16 %v3357, %v3354
        %v4108 = vpack.c.b16 %v3361, %v3358
        %v4109 = vpack.c.b16 %v3362, %v3359
        %v4110 = vpack.c.b16 %v3363, %v3360
        %v4111 = vpack.c.b16 %v3367, %v3364
        %v4112 = vpack.c.b16 %v3368, %v3365
        %v4113 = vpack.c.b16 %v3369, %v3366
        %v4114 = vpack.c.b16 %v3373, %v3370
        %v4115 = vpack.c.b16 %v3374, %v3371
        %v4116 = vpack.c.b16 %v3375, %v3372
        %v4117 = vpack.c.b16 %v3379, %v3376
        %v4118 = vpack.c.b16 %v3380, %v3377
        %v4119 = vpack.c.b16 %v3381, %v3378
        %v4120 = vpack.c.b16 %v3385, %v3382
        %v4121 = vpack.c.b16 %v3386, %v3383
        %v4122 = vpack.c.b16 %v3387, %v3384
        %v4123 = vpack.c.b16 %v3391, %v3388
        %v4124 = vpack.c.b16 %v3392, %v3389
        %v4125 = vpack.c.b16 %v3393, %v3390
        %v4126 = vpack.c.b16 %v3397, %v3394
        %v4127 = vpack.c.b16 %v3398, %v3395
        %v4128 = vpack.c.b16 %v3399, %v3396
        %v4129 = vpack.c.b16 %v3403, %v3400
        %v4130 = vpack.c.b16 %v3404, %v3401
        %v4131 = vpack.c.b16 %v3405, %v3402
        %v4132 = vpack.c.b16 %v3409, %v3406
        %v4133 = vpack.c.b16 %v3410, %v3407
        %v4134 = vpack.c.b16 %v3411, %v3408
        %v4135 = vpack.c.b16 %v3415, %v3412
        %v4136 = vpack.c.b16 %v3416, %v3413
        %v4137 = vpack.c.b16 %v3417, %v3414
        %v4138 = vpack.c.b16 %v3421, %v3418
        %v4139 = vpack.c.b16 %v3422, %v3419
        %v4140 = vpack.c.b16 %v3423, %v3420
        %v4141 = vpack.c.b16 %v3427, %v3424
        %v4142 = vpack.c.b16 %v3428, %v3425
        %v4143 = vpack.c.b16 %v3429, %v3426
        %v4144 = vpack.c.b16 %v3433, %v3430
        %v4145 = vpack.c.b16 %v3434, %v3431
        %v4146 = vpack.c.b16 %v3435, %v3432
        %v4147 = vpack.c.b16 %v3439, %v3436
        %v4148 = vpack.c.b16 %v3440, %v3437
        %v4149 = vpack.c.b16 %v3441, %v3438
        %v4150 = vpack.c.b16 %v3445, %v3442
        %v4151 = vpack.c.b16 %v3446, %v3443
        %v4152 = vpack.c.b16 %v3447, %v3444
        %v4153 = vpack.c.b16 %v3451, %v3448
        %v4154 = vpack.c.b16 %v3452, %v3449
        %v4155 = vpack.c.b16 %v3453, %v3450
        %v4156 = vpack.c.b16 %v3457, %v3454
        %v4157 = vpack.c.b16 %v3458, %v3455
        %v4158 = vpack.c.b16 %v3459, %v3456
        %v4159 = vpack.c.b16 %v3463, %v3460
        %v4160 = vpack.c.b16 %v3464, %v3461
        %v4161 = vpack.c.b16 %v3465, %v3462
        %v4162 = vpack.c.b16 %v3469, %v3466
        %v4163 = vpack.c.b16 %v3470, %v3467
        %v4164 = vpack.c.b16 %v3471, %v3468
        %v4165 = vpack.c.b16 %v3475, %v3472
        %v4166 = vpack.c.b16 %v3476, %v3473
        %v4167 = vpack.c.b16 %v3477, %v3474
        %v4168 = vpack.c.b16 %v3481, %v3478
        %v4169 = vpack.c.b16 %v3482, %v3479
        %v4170 = vpack.c.b16 %v3483, %v3480
        %v4171 = vpack.c.b16 %v3487, %v3484
        %v4172 = vpack.c.b16 %v3488, %v3485
        %v4173 = vpack.c.b16 %v3489, %v3486
        %v4174 = vpack.c.b16 %v3493, %v3490
        %v4175 = vpack.c.b16 %v3494, %v3491
        %v4176 = vpack.c.b16 %v3495, %v3492
        %v4177 = vpack.c.b16 %v3499, %v3496
        %v4178 = vpack.c.b16 %v3500, %v3497
        %v4179 = vpack.c.b16 %v3501, %v3498
        %v4180 = vpack.c.b16 %v3505, %v3502
        %v4181 = vpack.c.b16 %v3506, %v3503
        %v4182 = vpack.c.b16 %v3507, %v3504
        %v4183 = vpack.c.b16 %v3511, %v3508
        %v4184 = vpack.c.b16 %v3512, %v3509
        %v4185 = vpack.c.b16 %v3513, %v3510
        %v4186 = vpack.c.b16 %v3517, %v3514
        %v4187 = vpack.c.b16 %v3518, %v3515
        %v4188 = vpack.c.b16 %v3519, %v3516
        %v4189 = vpack.c.b16 %v3523, %v3520
        %v4190 = vpack.c.b16 %v3524, %v3521
        %v4191 = vpack.c.b16 %v3525, %v3522
        %v4192 = vpack.c.b16 %v3529, %v3526
        %v4193 = vpack.c.b16 %v3530, %v3527
        %v4194 = vpack.c.b16 %v3531, %v3528
        %v4195 = vpack.c.b16 %v3535, %v3532
        %v4196 = vpack.c.b16 %v3536, %v3533
        %v4197 = vpack.c.b16 %v3537, %v3534
        %v4198 = vpack.c.b16 %v3541, %v3538
        %v4199 = vpack.c.b16 %v3542, %v3539
        %v4200 = vpack.c.b16 %v3543, %v3540
        %v4201 = vpack.c.b16 %v3547, %v3544
        %v4202 = vpack.c.b16 %v3548, %v3545
        %v4203 = vpack.c.b16 %v3549, %v3546
        %v4204 = vpack.c.b16 %v3553, %v3550
        %v4205 = vpack.c.b16 %v3554, %v3551
        %v4206 = vpack.c.b16 %v3555, %v3552
        %v4207 = vpack.c.b16 %v3559, %v3556
        %v4208 = vpack.c.b16 %v3560, %v3557
        %v4209 = vpack.c.b16 %v3561, %v3558
        %v4210 = vpack.c.b16 %v3565, %v3562
        %v4211 = vpack.c.b16 %v3566, %v3563
        %v4212 = vpack.c.b16 %v3567, %v3564
        %v4213 = vpack.c.b16 %v3571, %v3568
        %v4214 = vpack.c.b16 %v3572, %v3569
        %v4215 = vpack.c.b16 %v3573, %v3570
        %v4216 = vpack.c.b16 %v3577, %v3574
        %v4217 = vpack.c.b16 %v3578, %v3575
        %v4218 = vpack.c.b16 %v3579, %v3576
        %v4219 = vpack.c.b16 %v3583, %v3580
        %v4220 = vpack.c.b16 %v3584, %v3581
        %v4221 = vpack.c.b16 %v3585, %v3582
        %v4222 = vpack.c.b16 %v3589, %v3586
        %v4223 = vpack.c.b16 %v3590, %v3587
        %v4224 = vpack.c.b16 %v3591, %v3588
        %v4225 = vpack.c.b16 %v3595, %v3592
        %v4226 = vpack.c.b16 %v3596, %v3593
        %v4227 = vpack.c.b16 %v3597, %v3594
        %v4228 = vpack.c.b16 %v3601, %v3598
        %v4229 = vpack.c.b16 %v3602, %v3599
        %v4230 = vpack.c.b16 %v3603, %v3600
        %v4231 = vpack.c.b16 %v3607, %v3604
        %v4232 = vpack.c.b16 %v3608, %v3605
        %v4233 = vpack.c.b16 %v3609, %v3606
        %v4234 = vpack.c.b16 %v3613, %v3610
        %v4235 = vpack.c.b16 %v3614, %v3611
        %v4236 = vpack.c.b16 %v3615, %v3612
        %v4237 = vpack.c.b16 %v3619, %v3616
        %v4238 = vpack.c.b16 %v3620, %v3617
        %v4239 = vpack.c.b16 %v3621, %v3618
        %v4240 = vpack.c.b16 %v3625, %v3622
        %v4241 = vpack.c.b16 %v3626, %v3623
        %v4242 = vpack.c.b16 %v3627, %v3624
        %v4243 = vpack.c.b16 %v3631, %v3628
        %v4244 = vpack.c.b16 %v3632, %v3629
        %v4245 = vpack.c.b16 %v3633, %v3630
        %v4246 = vpack.c.b16 %v3637, %v3634
        %v4247 = vpack.c.b16 %v3638, %v3635
        %v4248 = vpack.c.b16 %v3639, %v3636
        %v4249 = vpack.c.b16 %v3643, %v3640
        %v4250 = vpack.c.b16 %v3644, %v3641
        %v4251 = vpack.c.b16 %v3645, %v3642
        %v4252 = vpack.c.b16 %v3649, %v3646
        %v4253 = vpack.c.b16 %v3650, %v3647
        %v4254 = vpack.c.b16 %v3651, %v3648
        %v4255 = vpack.c.b16 %v3655, %v3652
        %v4256 = vpack.c.b16 %v3656, %v3653
        %v4257 = vpack.c.b16 %v3657, %v3654
        %v4258 = vpack.c.b16 %v3661, %v3658
        %v4259 = vpack.c.b16 %v3662, %v3659
        %v4260 = vpack.c.b16 %v3663, %v3660
        %v4261 = vpack.c.b16 %v3667, %v3664
        %v4262 = vpack.c.b16 %v3668, %v3665
        %v4263 = vpack.c.b16 %v3669, %v3666
        %v4264 = vpack.c.b16 %v3673, %v3670
        %v4265 = vpack.c.b16 %v3674, %v3671
        %v4266 = vpack.c.b16 %v3675, %v3672
        %v4267 = vpack.c.b16 %v3679, %v3676
        %v4268 = vpack.c.b16 %v3680, %v3677
        %v4269 = vpack.c.b16 %v3681, %v3678
        %v4270 = vpack.c.b16 %v3685, %v3682
        %v4271 = vpack.c.b16 %v3686, %v3683
        %v4272 = vpack.c.b16 %v3687, %v3684
        %v4273 = vpack.c.b16 %v3691, %v3688
        %v4274 = vpack.c.b16 %v3692, %v3689
        %v4275 = vpack.c.b16 %v3693, %v3690
        %v4276 = vpack.c.b16 %v3697, %v3694
        %v4277 = vpack.c.b16 %v3698, %v3695
        %v4278 = vpack.c.b16 %v3699, %v3696
        %v4279 = vpack.c.b16 %v3703, %v3700
        %v4280 = vpack.c.b16 %v3704, %v3701
        %v4281 = vpack.c.b16 %v3705, %v3702
        %v4282 = vpack.c.b16 %v3709, %v3706
        %v4283 = vpack.c.b16 %v3710, %v3707
        %v4284 = vpack.c.b16 %v3711, %v3708
        %v4285 = vpack.c.b16 %v3715, %v3712
        %v4286 = vpack.c.b16 %v3716, %v3713
        %v4287 = vpack.c.b16 %v3717, %v3714
        %v4288 = vpack.c.b16 %v3721, %v3718
        %v4289 = vpack.c.b16 %v3722, %v3719
        %v4290 = vpack.c.b16 %v3723, %v3720
        %v4291 = vpack.c.b16 %v3727, %v3724
        %v4292 = vpack.c.b16 %v3728, %v3725
        %v4293 = vpack.c.b16 %v3729, %v3726
        %v4294 = vpack.c.b16 %v3733, %v3730
        %v4295 = vpack.c.b16 %v3734, %v3731
        %v4296 = vpack.c.b16 %v3735, %v3732
        %v4297 = vpack.c.b16 %v3739, %v3736
        %v4298 = vpack.c.b16 %v3740, %v3737
        %v4299 = vpack.c.b16 %v3741, %v3738
        %v4300 = vpack.c.b16 %v3745, %v3742
        %v4301 = vpack.c.b16 %v3746, %v3743
        %v4302 = vpack.c.b16 %v3747, %v3744
        %v4303 = vpack.c.b16 %v3751, %v3748
        %v4304 = vpack.c.b16 %v3752, %v3749
        %v4305 = vpack.c.b16 %v3753, %v3750
        %v4306 = vpack.c.b16 %v3757, %v3754
        %v4307 = vpack.c.b16 %v3758, %v3755
        %v4308 = vpack.c.b16 %v3759, %v3756
        %v4309 = vpack.c.b16 %v3763, %v3760
        %v4310 = vpack.c.b16 %v3764, %v3761
        %v4311 = vpack.c.b16 %v3765, %v3762
        %v4312 = vpack.c.b16 %v3769, %v3766
        %v4313 = vpack.c.b16 %v3770, %v3767
        %v4314 = vpack.c.b16 %v3771, %v3768
        %v4315 = vpack.c.b16 %v3775, %v3772
        %v4316 = vpack.c.b16 %v3776, %v3773
        %v4317 = vpack.c.b16 %v3777, %v3774
        %v4318 = vpack.c.b16 %v3781, %v3778
        %v4319 = vpack.c.b16 %v3782, %v3779
        %v4320 = vpack.c.b16 %v3783, %v3780
        %v4321 = vpack.c.b16 %v3787, %v3784
        %v4322 = vpack.c.b16 %v3788, %v3785
        %v4323 = vpack.c.b16 %v3789, %v3786
        %v4324 = vpack.c.b16 %v3793, %v3790
        %v4325 = vpack.c.b16 %v3794, %v3791
        %v4326 = vpack.c.b16 %v3795, %v3792
        %v4327 = vpack.c.b16 %v3799, %v3796
        %v4328 = vpack.c.b16 %v3800, %v3797
        %v4329 = vpack.c.b16 %v3801, %v3798
        %v4330 = vpack.c.b16 %v3805, %v3802
        %v4331 = vpack.c.b16 %v3806, %v3803
        %v4332 = vpack.c.b16 %v3807, %v3804
        %v4333 = vpack.c.b16 %v3811, %v3808
        %v4334 = vpack.c.b16 %v3812, %v3809
        %v4335 = vpack.c.b16 %v3813, %v3810
        %v4336 = vpack.c.b16 %v3817, %v3814
        %v4337 = vpack.c.b16 %v3818, %v3815
        %v4338 = vpack.c.b16 %v3819, %v3816
        %v4339 = vpack.c.b16 %v3823, %v3820
        %v4340 = vpack.c.b16 %v3824, %v3821
        %v4341 = vpack.c.b16 %v3825, %v3822
        %v4342 = vpack.c.b16 %v3829, %v3826
        %v4343 = vpack.c.b16 %v3830, %v3827
        %v4344 = vpack.c.b16 %v3831, %v3828
        %v4345 = vpack.c.b16 %v3835, %v3832
        %v4346 = vpack.c.b16 %v3836, %v3833
        %v4347 = vpack.c.b16 %v3837, %v3834
        %v4348 = vpack.c.b16 %v3841, %v3838
        %v4349 = vpack.c.b16 %v3842, %v3839
        %v4350 = vpack.c.b16 %v3843, %v3840
        %v4351 = vpack.c.b16 %v3847, %v3844
        %v4352 = vpack.c.b16 %v3848, %v3845
        %v4353 = vpack.c.b16 %v3849, %v3846
        %v4354 = vpack.c.b16 %v3853, %v3850
        %v4355 = vpack.c.b16 %v3854, %v3851
        %v4356 = vpack.c.b16 %v3855, %v3852
        %v4357 = vpack.c.b16 %v3859, %v3856
        %v4358 = vpack.c.b16 %v3860, %v3857
        %v4359 = vpack.c.b16 %v3861, %v3858
        %v4360 = vpack.c.b16 %v3865, %v3862
        %v4361 = vpack.c.b16 %v3866, %v3863
        %v4362 = vpack.c.b16 %v3867, %v3864
        %v4363 = vpack.c.b16 %v3871, %v3868
        %v4364 = vpack.c.b16 %v3872, %v3869
        %v4365 = vpack.c.b16 %v3873, %v3870
        %v4366 = vpack.c.b16 %v3877, %v3874
        %v4367 = vpack.c.b16 %v3878, %v3875
        %v4368 = vpack.c.b16 %v3879, %v3876
        %v4369 = vpack.c.b16 %v3883, %v3880
        %v4370 = vpack.c.b16 %v3884, %v3881
        %v4371 = vpack.c.b16 %v3885, %v3882
        %v4372 = vpack.c.b16 %v3889, %v3886
        %v4373 = vpack.c.b16 %v3890, %v3887
        %v4374 = vpack.c.b16 %v3891, %v3888
        %v4375 = vpack.c.b16 %v3895, %v3892
        %v4376 = vpack.c.b16 %v3896, %v3893
        %v4377 = vpack.c.b16 %v3897, %v3894
        %v4378 = vpack.c.b16 %v3901, %v3898
        %v4379 = vpack.c.b16 %v3902, %v3899
        %v4380 = vpack.c.b16 %v3903, %v3900
        %v4381 = vpack.c.b16 %v3907, %v3904
        %v4382 = vpack.c.b16 %v3908, %v3905
        %v4383 = vpack.c.b16 %v3909, %v3906
        %v4384 = vpack.c.b16 %v3913, %v3910
        %v4385 = vpack.c.b16 %v3914, %v3911
        %v4386 = vpack.c.b16 %v3915, %v3912
        %v4387 = vpack.c.b16 %v3919, %v3916
        %v4388 = vpack.c.b16 %v3920, %v3917
        %v4389 = vpack.c.b16 %v3921, %v3918
        %v4390 = vpack.c.b16 %v3925, %v3922
        %v4391 = vpack.c.b16 %v3926, %v3923
        %v4392 = vpack.c.b16 %v3927, %v3924
        %v4393 = vpack.c.b16 %v3931, %v3928
        %v4394 = vpack.c.b16 %v3932, %v3929
        %v4395 = vpack.c.b16 %v3933, %v3930
        %v4396 = vpack.c.b16 %v3937, %v3934
        %v4397 = vpack.c.b16 %v3938, %v3935
        %v4398 = vpack.c.b16 %v3939, %v3936
        %v4399 = vpack.c.b16 %v3943, %v3940
        %v4400 = vpack.c.b16 %v3944, %v3941
        %v4401 = vpack.c.b16 %v3945, %v3942
        %v4402 = vpack.c.b16 %v3949, %v3946
        %v4403 = vpack.c.b16 %v3950, %v3947
        %v4404 = vpack.c.b16 %v3951, %v3948
        %v4405 = vpack.c.b16 %v3955, %v3952
        %v4406 = vpack.c.b16 %v3956, %v3953
        %v4407 = vpack.c.b16 %v3957, %v3954
        %v4408 = vpack.c.b16 %v3961, %v3958
        %v4409 = vpack.c.b16 %v3962, %v3959
        %v4410 = vpack.c.b16 %v3963, %v3960
        %v4411 = vpack.c.b16 %v3967, %v3964
        %v4412 = vpack.c.b16 %v3968, %v3965
        %v4413 = vpack.c.b16 %v3969, %v3966
        %v4414 = vpack.c.b16 %v3973, %v3970
        %v4415 = vpack.c.b16 %v3974, %v3971
        %v4416 = vpack.c.b16 %v3975, %v3972
        %v4417 = vpack.c.b16 %v3979, %v3976
        %v4418 = vpack.c.b16 %v3980, %v3977
        %v4419 = vpack.c.b16 %v3981, %v3978
        %v4420 = vpack.c.b16 %v3985, %v3982
        %v4421 = vpack.c.b16 %v3986, %v3983
        %v4422 = vpack.c.b16 %v3987, %v3984
        %v4423 = vpack.c.b16 %v3991, %v3988
        %v4424 = vpack.c.b16 %v3992, %v3989
        %v4425 = vpack.c.b16 %v3993, %v3990
        %v4426 = vpack.c.b16 %v3997, %v3994
        %v4427 = vpack.c.b16 %v3998, %v3995
        %v4428 = vpack.c.b16 %v3999, %v3996
        %v4429 = vpack.c.b16 %v4003, %v4000
        %v4430 = vpack.c.b16 %v4004, %v4001
        %v4431 = vpack.c.b16 %v4005, %v4002
        %v4432 = vpack.c.b16 %v4009, %v4006
        %v4433 = vpack.c.b16 %v4010, %v4007
        %v4434 = vpack.c.b16 %v4011, %v4008
        %v4435 = vpack.c.b16 %v4015, %v4012
        %v4436 = vpack.c.b16 %v4016, %v4013
        %v4437 = vpack.c.b16 %v4017, %v4014
        %v4438 = vpack.c.b16 %v4021, %v4018
        %v4439 = vpack.c.b16 %v4022, %v4019
        %v4440 = vpack.c.b16 %v4023, %v4020
        %v4441 = vpack.c.b16 %v4027, %v4024
        %v4442 = vpack.c.b16 %v4028, %v4025
        %v4443 = vpack.c.b16 %v4029, %v4026
        %v4444 = vpack.c.b16 %v4033, %v4030
        %v4445 = vpack.c.b16 %v4034, %v4031
        %v4446 = vpack.c.b16 %v4035, %v4032
        %v4447 = vpack.c.b16 %v4039, %v4036
        %v4448 = vpack.c.b16 %v4040, %v4037
        %v4449 = vpack.c.b16 %v4041, %v4038
        %v4450 = vpack.c.b16 %v4045, %v4042
        %v4451 = vpack.c.b16 %v4046, %v4043
        %v4452 = vpack.c.b16 %v4047, %v4044
        %v4453 = vpack.c.b16 %v4051, %v4048
        %v4454 = vpack.c.b16 %v4052, %v4049
        %v4455 = vpack.c.b16 %v4053, %v4050
        %v4456 = vpack.c.b16 %v4057, %v4054
        %v4457 = vpack.c.b16 %v4058, %v4055
        %v4458 = vpack.c.b16 %v4059, %v4056
        %v4459 = vpack.c.b16 %v4063, %v4060
        %v4460 = vpack.c.b16 %v4064, %v4061
        %v4461 = vpack.c.b16 %v4065, %v4062
        %v4462 = vpack.c.b16 %v4069, %v4066
        %v4463 = vpack.c.b16 %v4070, %v4067
        %v4464 = vpack.c.b16 %v4071, %v4068
        %v4465 = vpack.c.b16 %v4075, %v4072
        %v4466 = vpack.c.b16 %v4076, %v4073
        %v4467 = vpack.c.b16 %v4077, %v4074
        %v4468 = vpack.c.b16 %v4081, %v4078
        %v4469 = vpack.c.b16 %v4082, %v4079
        %v4470 = vpack.c.b16 %v4083, %v4080
        %v4471 = vpack.c.b16 %v4087, %v4084
        %v4472 = vpack.c.b16 %v4088, %v4085
        %v4473 = vpack.c.b16 %v4089, %v4086
        %4858 = vmatprep.subr.bf16.mxu0 %v4091
        %4859 = vmatpush1.bf16.msra.mxu0 %v4090
        %4860 = vmatprep.subr.bf16.mxu0 %v4094
        %4861 = vmatpush1.bf16.msra.mxu0 %v4093
        %4862 = vmatprep.subr.bf16.mxu0 %v4097
        %4863 = vmatpush1.bf16.msra.mxu0 %v4096
        %4864 = vmatprep.subr.bf16.mxu0 %v4100
        %4865 = vmatpush1.bf16.msra.mxu0 %v4099
        %4866 = vmatprep.subr.bf16.mxu0 %v4103
        %4867 = vmatpush1.bf16.msra.mxu0 %v4102
        %4868 = vmatprep.subr.bf16.mxu0 %v4106
        %4869 = vmatpush1.bf16.msra.mxu0 %v4105
        %4870 = vmatprep.subr.bf16.mxu0 %v4109
        %4871 = vmatpush1.bf16.msra.mxu0 %v4108
        %4872 = vmatprep.subr.bf16.mxu0 %v4112
        %4873 = vmatpush1.bf16.msra.mxu0 %v4111
        %4874 = vmatprep.subr.bf16.mxu0 %v4115
        %4875 = vmatpush1.bf16.msra.mxu0 %v4114
        %4876 = vmatprep.subr.bf16.mxu0 %v4118
        %4877 = vmatpush1.bf16.msra.mxu0 %v4117
        %4878 = vmatprep.subr.bf16.mxu0 %v4121
        %4879 = vmatpush1.bf16.msra.mxu0 %v4120
        %4880 = vmatprep.subr.bf16.mxu0 %v4124
        %4881 = vmatpush1.bf16.msra.mxu0 %v4123
        %4882 = vmatprep.subr.bf16.mxu0 %v4127
        %4883 = vmatpush1.bf16.msra.mxu0 %v4126
        %4884 = vmatprep.subr.bf16.mxu0 %v4130
        %4885 = vmatpush1.bf16.msra.mxu0 %v4129
        %4886 = vmatprep.subr.bf16.mxu0 %v4133
        %4887 = vmatpush1.bf16.msra.mxu0 %v4132
        %4888 = vmatprep.subr.bf16.mxu0 %v4136
        %4889 = vmatpush1.bf16.msra.mxu0 %v4135
        %4890 = vmatprep.mubr.bf16.mxu0 %v2266
        %4891 = vmatmul.mubr.bf16.gmra.mrb[0].mxu0 %v2265
        %v4892 = vpop.f32.mrb[0].mxu0
        %v4893 = vadd.f32 %v2798, %v4892
        %v4894 = vpop.f32.mrb[0].mxu0
        %v4895 = vadd.f32 %v2802, %v4894
        %v4896 = vpop.f32.mrb[0].mxu0
        %v4897 = vadd.f32 %v2798, %v4896
        %v4898 = vpop.f32.mrb[0].mxu0
        %v4899 = vadd.f32 %v2802, %v4898
        %4900 = vdwg.mxu0
        %4901 = vmatprep.subr.bf16.mxu0 %v4139
        %4902 = vmatpush1.bf16.msra.mxu0 %v4138
        %4903 = vmatprep.subr.bf16.mxu0 %v4142
        %4904 = vmatpush1.bf16.msra.mxu0 %v4141
        %4905 = vmatprep.subr.bf16.mxu0 %v4145
        %4906 = vmatpush1.bf16.msra.mxu0 %v4144
        %4907 = vmatprep.subr.bf16.mxu0 %v4148
        %4908 = vmatpush1.bf16.msra.mxu0 %v4147
        %4909 = vmatprep.subr.bf16.mxu0 %v4151
        %4910 = vmatpush1.bf16.msra.mxu0 %v4150
        %4911 = vmatprep.subr.bf16.mxu0 %v4154
        %4912 = vmatpush1.bf16.msra.mxu0 %v4153
        %4913 = vmatprep.subr.bf16.mxu0 %v4157
        %4914 = vmatpush1.bf16.msra.mxu0 %v4156
        %4915 = vmatprep.subr.bf16.mxu0 %v4160
        %4916 = vmatpush1.bf16.msra.mxu0 %v4159
        %4917 = vmatprep.subr.bf16.mxu0 %v4163
        %4918 = vmatpush1.bf16.msra.mxu0 %v4162
        %4919 = vmatprep.subr.bf16.mxu0 %v4166
        %4920 = vmatpush1.bf16.msra.mxu0 %v4165
        %4921 = vmatprep.subr.bf16.mxu0 %v4169
        %4922 = vmatpush1.bf16.msra.mxu0 %v4168
        %4923 = vmatprep.subr.bf16.mxu0 %v4172
        %4924 = vmatpush1.bf16.msra.mxu0 %v4171
        %4925 = vmatprep.subr.bf16.mxu0 %v4175
        %4926 = vmatpush1.bf16.msra.mxu0 %v4174
        %4927 = vmatprep.subr.bf16.mxu0 %v4178
        %4928 = vmatpush1.bf16.msra.mxu0 %v4177
        %4929 = vmatprep.subr.bf16.mxu0 %v4181
        %4930 = vmatpush1.bf16.msra.mxu0 %v4180
        %4931 = vmatprep.subr.bf16.mxu0 %v4184
        %4932 = vmatpush1.bf16.msra.mxu0 %v4183
        %4933 = vmatprep.mubr.bf16.mxu0 %v2268
        %4934 = vmatmul.mubr.bf16.gmra.mrb[0].mxu0 %v2267
        %v4935 = vpop.f32.mrb[0].mxu0
        %v4936 = vadd.f32 %v4893, %v4935
        %v4937 = vpop.f32.mrb[0].mxu0
        %v4938 = vadd.f32 %v4895, %v4937
        %v4939 = vpop.f32.mrb[0].mxu0
        %v4940 = vadd.f32 %v4897, %v4939
        %v4941 = vpop.f32.mrb[0].mxu0
        %v4942 = vadd.f32 %v4899, %v4941
        %4943 = vdwg.mxu0
        %4944 = vmatprep.subr.bf16.mxu0 %v4187
        %4945 = vmatpush1.bf16.msra.mxu0 %v4186
        %4946 = vmatprep.subr.bf16.mxu0 %v4190
        %4947 = vmatpush1.bf16.msra.mxu0 %v4189
        %4948 = vmatprep.subr.bf16.mxu0 %v4193
        %4949 = vmatpush1.bf16.msra.mxu0 %v4192
        %4950 = vmatprep.subr.bf16.mxu0 %v4196
        %4951 = vmatpush1.bf16.msra.mxu0 %v4195
        %4952 = vmatprep.subr.bf16.mxu0 %v4199
        %4953 = vmatpush1.bf16.msra.mxu0 %v4198
        %4954 = vmatprep.subr.bf16.mxu0 %v4202
        %4955 = vmatpush1.bf16.msra.mxu0 %v4201
        %4956 = vmatprep.subr.bf16.mxu0 %v4205
        %4957 = vmatpush1.bf16.msra.mxu0 %v4204
        %4958 = vmatprep.subr.bf16.mxu0 %v4208
        %4959 = vmatpush1.bf16.msra.mxu0 %v4207
        %4960 = vmatprep.subr.bf16.mxu0 %v4211
        %4961 = vmatpush1.bf16.msra.mxu0 %v4210
        %4962 = vmatprep.subr.bf16.mxu0 %v4214
        %4963 = vmatpush1.bf16.msra.mxu0 %v4213
        %4964 = vmatprep.subr.bf16.mxu0 %v4217
        %4965 = vmatpush1.bf16.msra.mxu0 %v4216
        %4966 = vmatprep.subr.bf16.mxu0 %v4220
        %4967 = vmatpush1.bf16.msra.mxu0 %v4219
        %4968 = vmatprep.subr.bf16.mxu0 %v4223
        %4969 = vmatpush1.bf16.msra.mxu0 %v4222
        %4970 = vmatprep.subr.bf16.mxu0 %v4226
        %4971 = vmatpush1.bf16.msra.mxu0 %v4225
        %4972 = vmatprep.subr.bf16.mxu0 %v4229
        %4973 = vmatpush1.bf16.msra.mxu0 %v4228
        %4974 = vmatprep.subr.bf16.mxu0 %v4232
        %4975 = vmatpush1.bf16.msra.mxu0 %v4231
        %4976 = vmatprep.mubr.bf16.mxu0 %v2270
        %4977 = vmatmul.mubr.bf16.gmra.mrb[0].mxu0 %v2269
        %v4978 = vpop.f32.mrb[0].mxu0
        %v4979 = vadd.f32 %v4936, %v4978
        %v4980 = vpop.f32.mrb[0].mxu0
        %v4981 = vadd.f32 %v4938, %v4980
        %v4982 = vpop.f32.mrb[0].mxu0
        %v4983 = vadd.f32 %v4940, %v4982
        %v4984 = vpop.f32.mrb[0].mxu0
        %v4985 = vadd.f32 %v4942, %v4984
        %4986 = vdwg.mxu0
        %4987 = vmatprep.subr.bf16.mxu0 %v4235
        %4988 = vmatpush1.bf16.msra.mxu0 %v4234
        %4989 = vmatprep.subr.bf16.mxu0 %v4238
        %4990 = vmatpush1.bf16.msra.mxu0 %v4237
        %4991 = vmatprep.subr.bf16.mxu0 %v4241
        %4992 = vmatpush1.bf16.msra.mxu0 %v4240
        %4993 = vmatprep.subr.bf16.mxu0 %v4244
        %4994 = vmatpush1.bf16.msra.mxu0 %v4243
        %4995 = vmatprep.subr.bf16.mxu0 %v4247
        %4996 = vmatpush1.bf16.msra.mxu0 %v4246
        %4997 = vmatprep.subr.bf16.mxu0 %v4250
        %4998 = vmatpush1.bf16.msra.mxu0 %v4249
        %4999 = vmatprep.subr.bf16.mxu0 %v4253
        %5000 = vmatpush1.bf16.msra.mxu0 %v4252
        %5001 = vmatprep.subr.bf16.mxu0 %v4256
        %5002 = vmatpush1.bf16.msra.mxu0 %v4255
        %5003 = vmatprep.subr.bf16.mxu0 %v4259
        %5004 = vmatpush1.bf16.msra.mxu0 %v4258
        %5005 = vmatprep.subr.bf16.mxu0 %v4262
        %5006 = vmatpush1.bf16.msra.mxu0 %v4261
        %5007 = vmatprep.subr.bf16.mxu0 %v4265
        %5008 = vmatpush1.bf16.msra.mxu0 %v4264
        %5009 = vmatprep.subr.bf16.mxu0 %v4268
        %5010 = vmatpush1.bf16.msra.mxu0 %v4267
        %5011 = vmatprep.subr.bf16.mxu0 %v4271
        %5012 = vmatpush1.bf16.msra.mxu0 %v4270
        %5013 = vmatprep.subr.bf16.mxu0 %v4274
        %5014 = vmatpush1.bf16.msra.mxu0 %v4273
        %5015 = vmatprep.subr.bf16.mxu0 %v4277
        %5016 = vmatpush1.bf16.msra.mxu0 %v4276
        %5017 = vmatprep.subr.bf16.mxu0 %v4280
        %5018 = vmatpush1.bf16.msra.mxu0 %v4279
        %5019 = vmatprep.mubr.bf16.mxu0 %v2272
        %5020 = vmatmul.mubr.bf16.gmra.mrb[0].mxu0 %v2271
        %v5021 = vpop.f32.mrb[0].mxu0
        %v5022 = vadd.f32 %v4979, %v5021
        %v5023 = vpop.f32.mrb[0].mxu0
        %v5024 = vadd.f32 %v4981, %v5023
        %v5025 = vpop.f32.mrb[0].mxu0
        %v5026 = vadd.f32 %v4983, %v5025
        %v5027 = vpop.f32.mrb[0].mxu0
        %v5028 = vadd.f32 %v4985, %v5027
        %5029 = vdwg.mxu0
        %5030 = vmatprep.subr.bf16.mxu0 %v4283
        %5031 = vmatpush1.bf16.msra.mxu0 %v4282
        %5032 = vmatprep.subr.bf16.mxu0 %v4286
        %5033 = vmatpush1.bf16.msra.mxu0 %v4285
        %5034 = vmatprep.subr.bf16.mxu0 %v4289
        %5035 = vmatpush1.bf16.msra.mxu0 %v4288
        %5036 = vmatprep.subr.bf16.mxu0 %v4292
        %5037 = vmatpush1.bf16.msra.mxu0 %v4291
        %5038 = vmatprep.subr.bf16.mxu0 %v4295
        %5039 = vmatpush1.bf16.msra.mxu0 %v4294
        %5040 = vmatprep.subr.bf16.mxu0 %v4298
        %5041 = vmatpush1.bf16.msra.mxu0 %v4297
        %5042 = vmatprep.subr.bf16.mxu0 %v4301
        %5043 = vmatpush1.bf16.msra.mxu0 %v4300
        %5044 = vmatprep.subr.bf16.mxu0 %v4304
        %5045 = vmatpush1.bf16.msra.mxu0 %v4303
        %5046 = vmatprep.subr.bf16.mxu0 %v4307
        %5047 = vmatpush1.bf16.msra.mxu0 %v4306
        %5048 = vmatprep.subr.bf16.mxu0 %v4310
        %5049 = vmatpush1.bf16.msra.mxu0 %v4309
        %5050 = vmatprep.subr.bf16.mxu0 %v4313
        %5051 = vmatpush1.bf16.msra.mxu0 %v4312
        %5052 = vmatprep.subr.bf16.mxu0 %v4316
        %5053 = vmatpush1.bf16.msra.mxu0 %v4315
        %5054 = vmatprep.subr.bf16.mxu0 %v4319
        %5055 = vmatpush1.bf16.msra.mxu0 %v4318
        %5056 = vmatprep.subr.bf16.mxu0 %v4322
        %5057 = vmatpush1.bf16.msra.mxu0 %v4321
        %5058 = vmatprep.subr.bf16.mxu0 %v4325
        %5059 = vmatpush1.bf16.msra.mxu0 %v4324
        %5060 = vmatprep.subr.bf16.mxu0 %v4328
        %5061 = vmatpush1.bf16.msra.mxu0 %v4327
        %5062 = vmatprep.mubr.bf16.mxu0 %v2274
        %5063 = vmatmul.mubr.bf16.gmra.mrb[0].mxu0 %v2273
        %v5064 = vpop.f32.mrb[0].mxu0
        %v5065 = vadd.f32 %v5022, %v5064
        %v5066 = vpop.f32.mrb[0].mxu0
        %v5067 = vadd.f32 %v5024, %v5066
        %v5068 = vpop.f32.mrb[0].mxu0
        %v5069 = vadd.f32 %v5026, %v5068
        %v5070 = vpop.f32.mrb[0].mxu0
        %v5071 = vadd.f32 %v5028, %v5070
        %5072 = vdwg.mxu0
        %5073 = vmatprep.subr.bf16.mxu0 %v4331
        %5074 = vmatpush1.bf16.msra.mxu0 %v4330
        %5075 = vmatprep.subr.bf16.mxu0 %v4334
        %5076 = vmatpush1.bf16.msra.mxu0 %v4333
        %5077 = vmatprep.subr.bf16.mxu0 %v4337
        %5078 = vmatpush1.bf16.msra.mxu0 %v4336
        %5079 = vmatprep.subr.bf16.mxu0 %v4340
        %5080 = vmatpush1.bf16.msra.mxu0 %v4339
        %5081 = vmatprep.subr.bf16.mxu0 %v4343
        %5082 = vmatpush1.bf16.msra.mxu0 %v4342
        %5083 = vmatprep.subr.bf16.mxu0 %v4346
        %5084 = vmatpush1.bf16.msra.mxu0 %v4345
        %5085 = vmatprep.subr.bf16.mxu0 %v4349
        %5086 = vmatpush1.bf16.msra.mxu0 %v4348
        %5087 = vmatprep.subr.bf16.mxu0 %v4352
        %5088 = vmatpush1.bf16.msra.mxu0 %v4351
        %5089 = vmatprep.subr.bf16.mxu0 %v4355
        %5090 = vmatpush1.bf16.msra.mxu0 %v4354
        %5091 = vmatprep.subr.bf16.mxu0 %v4358
        %5092 = vmatpush1.bf16.msra.mxu0 %v4357
        %5093 = vmatprep.subr.bf16.mxu0 %v4361
        %5094 = vmatpush1.bf16.msra.mxu0 %v4360
        %5095 = vmatprep.subr.bf16.mxu0 %v4364
        %5096 = vmatpush1.bf16.msra.mxu0 %v4363
        %5097 = vmatprep.subr.bf16.mxu0 %v4367
        %5098 = vmatpush1.bf16.msra.mxu0 %v4366
        %5099 = vmatprep.subr.bf16.mxu0 %v4370
        %5100 = vmatpush1.bf16.msra.mxu0 %v4369
        %5101 = vmatprep.subr.bf16.mxu0 %v4373
        %5102 = vmatpush1.bf16.msra.mxu0 %v4372
        %5103 = vmatprep.subr.bf16.mxu0 %v4376
        %5104 = vmatpush1.bf16.msra.mxu0 %v4375
        %5105 = vmatprep.mubr.bf16.mxu0 %v2276
        %5106 = vmatmul.mubr.bf16.gmra.mrb[0].mxu0 %v2275
        %v5107 = vpop.f32.mrb[0].mxu0
        %v5108 = vadd.f32 %v5065, %v5107
        %v5109 = vpop.f32.mrb[0].mxu0
        %v5110 = vadd.f32 %v5067, %v5109
        %v5111 = vpop.f32.mrb[0].mxu0
        %v5112 = vadd.f32 %v5069, %v5111
        %v5113 = vpop.f32.mrb[0].mxu0
        %v5114 = vadd.f32 %v5071, %v5113
        %5115 = vdwg.mxu0
        %5116 = vmatprep.subr.bf16.mxu0 %v4379
        %5117 = vmatpush1.bf16.msra.mxu0 %v4378
        %5118 = vmatprep.subr.bf16.mxu0 %v4382
        %5119 = vmatpush1.bf16.msra.mxu0 %v4381
        %5120 = vmatprep.subr.bf16.mxu0 %v4385
        %5121 = vmatpush1.bf16.msra.mxu0 %v4384
        %5122 = vmatprep.subr.bf16.mxu0 %v4388
        %5123 = vmatpush1.bf16.msra.mxu0 %v4387
        %5124 = vmatprep.subr.bf16.mxu0 %v4391
        %5125 = vmatpush1.bf16.msra.mxu0 %v4390
        %5126 = vmatprep.subr.bf16.mxu0 %v4394
        %5127 = vmatpush1.bf16.msra.mxu0 %v4393
        %5128 = vmatprep.subr.bf16.mxu0 %v4397
        %5129 = vmatpush1.bf16.msra.mxu0 %v4396
        %5130 = vmatprep.subr.bf16.mxu0 %v4400
        %5131 = vmatpush1.bf16.msra.mxu0 %v4399
        %5132 = vmatprep.subr.bf16.mxu0 %v4403
        %5133 = vmatpush1.bf16.msra.mxu0 %v4402
        %5134 = vmatprep.subr.bf16.mxu0 %v4406
        %5135 = vmatpush1.bf16.msra.mxu0 %v4405
        %5136 = vmatprep.subr.bf16.mxu0 %v4409
        %5137 = vmatpush1.bf16.msra.mxu0 %v4408
        %5138 = vmatprep.subr.bf16.mxu0 %v4412
        %5139 = vmatpush1.bf16.msra.mxu0 %v4411
        %5140 = vmatprep.subr.bf16.mxu0 %v4415
        %5141 = vmatpush1.bf16.msra.mxu0 %v4414
        %5142 = vmatprep.subr.bf16.mxu0 %v4418
        %5143 = vmatpush1.bf16.msra.mxu0 %v4417
        %5144 = vmatprep.subr.bf16.mxu0 %v4421
        %5145 = vmatpush1.bf16.msra.mxu0 %v4420
        %5146 = vmatprep.subr.bf16.mxu0 %v4424
        %5147 = vmatpush1.bf16.msra.mxu0 %v4423
        %5148 = vmatprep.mubr.bf16.mxu0 %v2278
        %5149 = vmatmul.mubr.bf16.gmra.mrb[0].mxu0 %v2277
        %v5150 = vpop.f32.mrb[0].mxu0
        %v5151 = vadd.f32 %v5108, %v5150
        %v5152 = vpop.f32.mrb[0].mxu0
        %v5153 = vadd.f32 %v5110, %v5152
        %v5154 = vpop.f32.mrb[0].mxu0
        %v5155 = vadd.f32 %v5112, %v5154
        %v5156 = vpop.f32.mrb[0].mxu0
        %v5157 = vadd.f32 %v5114, %v5156
        %5158 = vdwg.mxu0
        %5159 = vmatprep.subr.bf16.mxu0 %v4427
        %5160 = vmatpush1.bf16.msra.mxu0 %v4426
        %5161 = vmatprep.subr.bf16.mxu0 %v4430
        %5162 = vmatpush1.bf16.msra.mxu0 %v4429
        %5163 = vmatprep.subr.bf16.mxu0 %v4433
        %5164 = vmatpush1.bf16.msra.mxu0 %v4432
        %5165 = vmatprep.subr.bf16.mxu0 %v4436
        %5166 = vmatpush1.bf16.msra.mxu0 %v4435
        %5167 = vmatprep.subr.bf16.mxu0 %v4439
        %5168 = vmatpush1.bf16.msra.mxu0 %v4438
        %5169 = vmatprep.subr.bf16.mxu0 %v4442
        %5170 = vmatpush1.bf16.msra.mxu0 %v4441
        %5171 = vmatprep.subr.bf16.mxu0 %v4445
        %5172 = vmatpush1.bf16.msra.mxu0 %v4444
        %5173 = vmatprep.subr.bf16.mxu0 %v4448
        %5174 = vmatpush1.bf16.msra.mxu0 %v4447
        %5175 = vmatprep.subr.bf16.mxu0 %v4451
        %5176 = vmatpush1.bf16.msra.mxu0 %v4450
        %5177 = vmatprep.subr.bf16.mxu0 %v4454
        %5178 = vmatpush1.bf16.msra.mxu0 %v4453
        %5179 = vmatprep.subr.bf16.mxu0 %v4457
        %5180 = vmatpush1.bf16.msra.mxu0 %v4456
        %5181 = vmatprep.subr.bf16.mxu0 %v4460
        %5182 = vmatpush1.bf16.msra.mxu0 %v4459
        %5183 = vmatprep.subr.bf16.mxu0 %v4463
        %5184 = vmatpush1.bf16.msra.mxu0 %v4462
        %5185 = vmatprep.subr.bf16.mxu0 %v4466
        %5186 = vmatpush1.bf16.msra.mxu0 %v4465
        %5187 = vmatprep.subr.bf16.mxu0 %v4469
        %5188 = vmatpush1.bf16.msra.mxu0 %v4468
        %5189 = vmatprep.subr.bf16.mxu0 %v4472
        %5190 = vmatpush1.bf16.msra.mxu0 %v4471
        %5191 = vmatprep.mubr.bf16.mxu0 %v2280
        %5192 = vmatmul.mubr.bf16.gmra.mrb[0].mxu0 %v2279
        %v5193 = vpop.f32.mrb[0].mxu0
        %v5194 = vadd.f32 %v5151, %v5193
        %v5195 = vpop.f32.mrb[0].mxu0
        %v5196 = vadd.f32 %v5153, %v5195
        %v5197 = vpop.f32.mrb[0].mxu0
        %v5198 = vadd.f32 %v5155, %v5197
        %v5199 = vpop.f32.mrb[0].mxu0
        %v5200 = vadd.f32 %v5157, %v5199
        %5201 = vdwg.mxu0
        %5202 = vmatprep.subr.bf16.mxu0 0
        %5203 = vmatpush1.bf16.msra.mxu0 %v4092
        %5204 = vmatprep.subr.bf16.mxu0 0
        %5205 = vmatpush1.bf16.msra.mxu0 %v4095
        %5206 = vmatprep.subr.bf16.mxu0 0
        %5207 = vmatpush1.bf16.msra.mxu0 %v4098
        %5208 = vmatprep.subr.bf16.mxu0 0
        %5209 = vmatpush1.bf16.msra.mxu0 %v4101
        %5210 = vmatprep.subr.bf16.mxu0 0
        %5211 = vmatpush1.bf16.msra.mxu0 %v4104
        %5212 = vmatprep.subr.bf16.mxu0 0
        %5213 = vmatpush1.bf16.msra.mxu0 %v4107
        %5214 = vmatprep.subr.bf16.mxu0 0
        %5215 = vmatpush1.bf16.msra.mxu0 %v4110
        %5216 = vmatprep.subr.bf16.mxu0 0
        %5217 = vmatpush1.bf16.msra.mxu0 %v4113
        %5218 = vmatprep.subr.bf16.mxu0 0
        %5219 = vmatpush1.bf16.msra.mxu0 %v4116
        %5220 = vmatprep.subr.bf16.mxu0 0
        %5221 = vmatpush1.bf16.msra.mxu0 %v4119
        %5222 = vmatprep.subr.bf16.mxu0 0
        %5223 = vmatpush1.bf16.msra.mxu0 %v4122
        %5224 = vmatprep.subr.bf16.mxu0 0
        %5225 = vmatpush1.bf16.msra.mxu0 %v4125
        %5226 = vmatprep.subr.bf16.mxu0 0
        %5227 = vmatpush1.bf16.msra.mxu0 %v4128
        %5228 = vmatprep.subr.bf16.mxu0 0
        %5229 = vmatpush1.bf16.msra.mxu0 %v4131
        %5230 = vmatprep.subr.bf16.mxu0 0
        %5231 = vmatpush1.bf16.msra.mxu0 %v4134
        %5232 = vmatprep.subr.bf16.mxu0 0
        %5233 = vmatpush1.bf16.msra.mxu0 %v4137
        %5234 = vmatprep.mubr.bf16.mxu0 %v2266
        %5235 = vmatmul.mubr.bf16.gmra.mrb[0].mxu0 %v2265
        %v5236 = vpop.f32.mrb[0].mxu0
        %v5237 = vadd.f32 %v2806, %v5236
        %v5238 = vpop.f32.mrb[0].mxu0
        %v5239 = vpop.f32.mrb[0].mxu0
        %v5240 = vadd.f32 %v2806, %v5239
        %v5241 = vpop.f32.mrb[0].mxu0
        %5242 = vdwg.mxu0
        %5243 = vmatprep.subr.bf16.mxu0 0
        %5244 = vmatpush1.bf16.msra.mxu0 %v4140
        %5245 = vmatprep.subr.bf16.mxu0 0
        %5246 = vmatpush1.bf16.msra.mxu0 %v4143
        %5247 = vmatprep.subr.bf16.mxu0 0
        %5248 = vmatpush1.bf16.msra.mxu0 %v4146
        %5249 = vmatprep.subr.bf16.mxu0 0
        %5250 = vmatpush1.bf16.msra.mxu0 %v4149
        %5251 = vmatprep.subr.bf16.mxu0 0
        %5252 = vmatpush1.bf16.msra.mxu0 %v4152
        %5253 = vmatprep.subr.bf16.mxu0 0
        %5254 = vmatpush1.bf16.msra.mxu0 %v4155
        %5255 = vmatprep.subr.bf16.mxu0 0
        %5256 = vmatpush1.bf16.msra.mxu0 %v4158
        %5257 = vmatprep.subr.bf16.mxu0 0
        %5258 = vmatpush1.bf16.msra.mxu0 %v4161
        %5259 = vmatprep.subr.bf16.mxu0 0
        %5260 = vmatpush1.bf16.msra.mxu0 %v4164
        %5261 = vmatprep.subr.bf16.mxu0 0
        %5262 = vmatpush1.bf16.msra.mxu0 %v4167
        %5263 = vmatprep.subr.bf16.mxu0 0
        %5264 = vmatpush1.bf16.msra.mxu0 %v4170
        %5265 = vmatprep.subr.bf16.mxu0 0
        %5266 = vmatpush1.bf16.msra.mxu0 %v4173
        %5267 = vmatprep.subr.bf16.mxu0 0
        %5268 = vmatpush1.bf16.msra.mxu0 %v4176
        %5269 = vmatprep.subr.bf16.mxu0 0
        %5270 = vmatpush1.bf16.msra.mxu0 %v4179
        %5271 = vmatprep.subr.bf16.mxu0 0
        %5272 = vmatpush1.bf16.msra.mxu0 %v4182
        %5273 = vmatprep.subr.bf16.mxu0 0
        %5274 = vmatpush1.bf16.msra.mxu0 %v4185
        %5275 = vmatprep.mubr.bf16.mxu0 %v2268
        %5276 = vmatmul.mubr.bf16.gmra.mrb[0].mxu0 %v2267
        %v5277 = vpop.f32.mrb[0].mxu0
        %v5278 = vadd.f32 %v5237, %v5277
        %v5279 = vpop.f32.mrb[0].mxu0
        %v5280 = vpop.f32.mrb[0].mxu0
        %v5281 = vadd.f32 %v5240, %v5280
        %v5282 = vpop.f32.mrb[0].mxu0
        %5283 = vdwg.mxu0
        %5284 = vmatprep.subr.bf16.mxu0 0
        %5285 = vmatpush1.bf16.msra.mxu0 %v4188
        %5286 = vmatprep.subr.bf16.mxu0 0
        %5287 = vmatpush1.bf16.msra.mxu0 %v4191
        %5288 = vmatprep.subr.bf16.mxu0 0
        %5289 = vmatpush1.bf16.msra.mxu0 %v4194
        %5290 = vmatprep.subr.bf16.mxu0 0
        %5291 = vmatpush1.bf16.msra.mxu0 %v4197
        %5292 = vmatprep.subr.bf16.mxu0 0
        %5293 = vmatpush1.bf16.msra.mxu0 %v4200
        %5294 = vmatprep.subr.bf16.mxu0 0
        %5295 = vmatpush1.bf16.msra.mxu0 %v4203
        %5296 = vmatprep.subr.bf16.mxu0 0
        %5297 = vmatpush1.bf16.msra.mxu0 %v4206
        %5298 = vmatprep.subr.bf16.mxu0 0
        %5299 = vmatpush1.bf16.msra.mxu0 %v4209
        %5300 = vmatprep.subr.bf16.mxu0 0
        %5301 = vmatpush1.bf16.msra.mxu0 %v4212
        %5302 = vmatprep.subr.bf16.mxu0 0
        %5303 = vmatpush1.bf16.msra.mxu0 %v4215
        %5304 = vmatprep.subr.bf16.mxu0 0
        %5305 = vmatpush1.bf16.msra.mxu0 %v4218
        %5306 = vmatprep.subr.bf16.mxu0 0
        %5307 = vmatpush1.bf16.msra.mxu0 %v4221
        %5308 = vmatprep.subr.bf16.mxu0 0
        %5309 = vmatpush1.bf16.msra.mxu0 %v4224
        %5310 = vmatprep.subr.bf16.mxu0 0
        %5311 = vmatpush1.bf16.msra.mxu0 %v4227
        %5312 = vmatprep.subr.bf16.mxu0 0
        %5313 = vmatpush1.bf16.msra.mxu0 %v4230
        %5314 = vmatprep.subr.bf16.mxu0 0
        %5315 = vmatpush1.bf16.msra.mxu0 %v4233
        %5316 = vmatprep.mubr.bf16.mxu0 %v2270
        %5317 = vmatmul.mubr.bf16.gmra.mrb[0].mxu0 %v2269
        %v5318 = vpop.f32.mrb[0].mxu0
        %v5319 = vadd.f32 %v5278, %v5318
        %v5320 = vpop.f32.mrb[0].mxu0
        %v5321 = vpop.f32.mrb[0].mxu0
        %v5322 = vadd.f32 %v5281, %v5321
        %v5323 = vpop.f32.mrb[0].mxu0
        %5324 = vdwg.mxu0
        %5325 = vmatprep.subr.bf16.mxu0 0
        %5326 = vmatpush1.bf16.msra.mxu0 %v4236
        %5327 = vmatprep.subr.bf16.mxu0 0
        %5328 = vmatpush1.bf16.msra.mxu0 %v4239
        %5329 = vmatprep.subr.bf16.mxu0 0
        %5330 = vmatpush1.bf16.msra.mxu0 %v4242
        %5331 = vmatprep.subr.bf16.mxu0 0
        %5332 = vmatpush1.bf16.msra.mxu0 %v4245
        %5333 = vmatprep.subr.bf16.mxu0 0
        %5334 = vmatpush1.bf16.msra.mxu0 %v4248
        %5335 = vmatprep.subr.bf16.mxu0 0
        %5336 = vmatpush1.bf16.msra.mxu0 %v4251
        %5337 = vmatprep.subr.bf16.mxu0 0
        %5338 = vmatpush1.bf16.msra.mxu0 %v4254
        %5339 = vmatprep.subr.bf16.mxu0 0
        %5340 = vmatpush1.bf16.msra.mxu0 %v4257
        %5341 = vmatprep.subr.bf16.mxu0 0
        %5342 = vmatpush1.bf16.msra.mxu0 %v4260
        %5343 = vmatprep.subr.bf16.mxu0 0
        %5344 = vmatpush1.bf16.msra.mxu0 %v4263
        %5345 = vmatprep.subr.bf16.mxu0 0
        %5346 = vmatpush1.bf16.msra.mxu0 %v4266
        %5347 = vmatprep.subr.bf16.mxu0 0
        %5348 = vmatpush1.bf16.msra.mxu0 %v4269
        %5349 = vmatprep.subr.bf16.mxu0 0
        %5350 = vmatpush1.bf16.msra.mxu0 %v4272
        %5351 = vmatprep.subr.bf16.mxu0 0
        %5352 = vmatpush1.bf16.msra.mxu0 %v4275
        %5353 = vmatprep.subr.bf16.mxu0 0
        %5354 = vmatpush1.bf16.msra.mxu0 %v4278
        %5355 = vmatprep.subr.bf16.mxu0 0
        %5356 = vmatpush1.bf16.msra.mxu0 %v4281
        %5357 = vmatprep.mubr.bf16.mxu0 %v2272
        %5358 = vmatmul.mubr.bf16.gmra.mrb[0].mxu0 %v2271
        %v5359 = vpop.f32.mrb[0].mxu0
        %v5360 = vadd.f32 %v5319, %v5359
        %v5361 = vpop.f32.mrb[0].mxu0
        %v5362 = vpop.f32.mrb[0].mxu0
        %v5363 = vadd.f32 %v5322, %v5362
        %v5364 = vpop.f32.mrb[0].mxu0
        %5365 = vdwg.mxu0
        %5366 = vmatprep.subr.bf16.mxu0 0
        %5367 = vmatpush1.bf16.msra.mxu0 %v4284
        %5368 = vmatprep.subr.bf16.mxu0 0
        %5369 = vmatpush1.bf16.msra.mxu0 %v4287
        %5370 = vmatprep.subr.bf16.mxu0 0
        %5371 = vmatpush1.bf16.msra.mxu0 %v4290
        %5372 = vmatprep.subr.bf16.mxu0 0
        %5373 = vmatpush1.bf16.msra.mxu0 %v4293
        %5374 = vmatprep.subr.bf16.mxu0 0
        %5375 = vmatpush1.bf16.msra.mxu0 %v4296
        %5376 = vmatprep.subr.bf16.mxu0 0
        %5377 = vmatpush1.bf16.msra.mxu0 %v4299
        %5378 = vmatprep.subr.bf16.mxu0 0
        %5379 = vmatpush1.bf16.msra.mxu0 %v4302
        %5380 = vmatprep.subr.bf16.mxu0 0
        %5381 = vmatpush1.bf16.msra.mxu0 %v4305
        %5382 = vmatprep.subr.bf16.mxu0 0
        %5383 = vmatpush1.bf16.msra.mxu0 %v4308
        %5384 = vmatprep.subr.bf16.mxu0 0
        %5385 = vmatpush1.bf16.msra.mxu0 %v4311
        %5386 = vmatprep.subr.bf16.mxu0 0
        %5387 = vmatpush1.bf16.msra.mxu0 %v4314
        %5388 = vmatprep.subr.bf16.mxu0 0
        %5389 = vmatpush1.bf16.msra.mxu0 %v4317
        %5390 = vmatprep.subr.bf16.mxu0 0
        %5391 = vmatpush1.bf16.msra.mxu0 %v4320
        %5392 = vmatprep.subr.bf16.mxu0 0
        %5393 = vmatpush1.bf16.msra.mxu0 %v4323
        %5394 = vmatprep.subr.bf16.mxu0 0
        %5395 = vmatpush1.bf16.msra.mxu0 %v4326
        %5396 = vmatprep.subr.bf16.mxu0 0
        %5397 = vmatpush1.bf16.msra.mxu0 %v4329
        %5398 = vmatprep.mubr.bf16.mxu0 %v2274
        %5399 = vmatmul.mubr.bf16.gmra.mrb[0].mxu0 %v2273
        %v5400 = vpop.f32.mrb[0].mxu0
        %v5401 = vadd.f32 %v5360, %v5400
        %v5402 = vpop.f32.mrb[0].mxu0
        %v5403 = vpop.f32.mrb[0].mxu0
        %v5404 = vadd.f32 %v5363, %v5403
        %v5405 = vpop.f32.mrb[0].mxu0
        %5406 = vdwg.mxu0
        %5407 = vmatprep.subr.bf16.mxu0 0
        %5408 = vmatpush1.bf16.msra.mxu0 %v4332
        %5409 = vmatprep.subr.bf16.mxu0 0
        %5410 = vmatpush1.bf16.msra.mxu0 %v4335
        %5411 = vmatprep.subr.bf16.mxu0 0
        %5412 = vmatpush1.bf16.msra.mxu0 %v4338
        %5413 = vmatprep.subr.bf16.mxu0 0
        %5414 = vmatpush1.bf16.msra.mxu0 %v4341
        %5415 = vmatprep.subr.bf16.mxu0 0
        %5416 = vmatpush1.bf16.msra.mxu0 %v4344
        %5417 = vmatprep.subr.bf16.mxu0 0
        %5418 = vmatpush1.bf16.msra.mxu0 %v4347
        %5419 = vmatprep.subr.bf16.mxu0 0
        %5420 = vmatpush1.bf16.msra.mxu0 %v4350
        %5421 = vmatprep.subr.bf16.mxu0 0
        %5422 = vmatpush1.bf16.msra.mxu0 %v4353
        %5423 = vmatprep.subr.bf16.mxu0 0
        %5424 = vmatpush1.bf16.msra.mxu0 %v4356
        %5425 = vmatprep.subr.bf16.mxu0 0
        %5426 = vmatpush1.bf16.msra.mxu0 %v4359
        %5427 = vmatprep.subr.bf16.mxu0 0
        %5428 = vmatpush1.bf16.msra.mxu0 %v4362
        %5429 = vmatprep.subr.bf16.mxu0 0
        %5430 = vmatpush1.bf16.msra.mxu0 %v4365
        %5431 = vmatprep.subr.bf16.mxu0 0
        %5432 = vmatpush1.bf16.msra.mxu0 %v4368
        %5433 = vmatprep.subr.bf16.mxu0 0
        %5434 = vmatpush1.bf16.msra.mxu0 %v4371
        %5435 = vmatprep.subr.bf16.mxu0 0
        %5436 = vmatpush1.bf16.msra.mxu0 %v4374
        %5437 = vmatprep.subr.bf16.mxu0 0
        %5438 = vmatpush1.bf16.msra.mxu0 %v4377
        %5439 = vmatprep.mubr.bf16.mxu0 %v2276
        %5440 = vmatmul.mubr.bf16.gmra.mrb[0].mxu0 %v2275
        %v5441 = vpop.f32.mrb[0].mxu0
        %v5442 = vadd.f32 %v5401, %v5441
        %v5443 = vpop.f32.mrb[0].mxu0
        %v5444 = vpop.f32.mrb[0].mxu0
        %v5445 = vadd.f32 %v5404, %v5444
        %v5446 = vpop.f32.mrb[0].mxu0
        %5447 = vdwg.mxu0
        %5448 = vmatprep.subr.bf16.mxu0 0
        %5449 = vmatpush1.bf16.msra.mxu0 %v4380
        %5450 = vmatprep.subr.bf16.mxu0 0
        %5451 = vmatpush1.bf16.msra.mxu0 %v4383
        %5452 = vmatprep.subr.bf16.mxu0 0
        %5453 = vmatpush1.bf16.msra.mxu0 %v4386
        %5454 = vmatprep.subr.bf16.mxu0 0
        %5455 = vmatpush1.bf16.msra.mxu0 %v4389
        %5456 = vmatprep.subr.bf16.mxu0 0
        %5457 = vmatpush1.bf16.msra.mxu0 %v4392
        %5458 = vmatprep.subr.bf16.mxu0 0
        %5459 = vmatpush1.bf16.msra.mxu0 %v4395
        %5460 = vmatprep.subr.bf16.mxu0 0
        %5461 = vmatpush1.bf16.msra.mxu0 %v4398
        %5462 = vmatprep.subr.bf16.mxu0 0
        %5463 = vmatpush1.bf16.msra.mxu0 %v4401
        %5464 = vmatprep.subr.bf16.mxu0 0
        %5465 = vmatpush1.bf16.msra.mxu0 %v4404
        %5466 = vmatprep.subr.bf16.mxu0 0
        %5467 = vmatpush1.bf16.msra.mxu0 %v4407
        %5468 = vmatprep.subr.bf16.mxu0 0
        %5469 = vmatpush1.bf16.msra.mxu0 %v4410
        %5470 = vmatprep.subr.bf16.mxu0 0
        %5471 = vmatpush1.bf16.msra.mxu0 %v4413
        %5472 = vmatprep.subr.bf16.mxu0 0
        %5473 = vmatpush1.bf16.msra.mxu0 %v4416
        %5474 = vmatprep.subr.bf16.mxu0 0
        %5475 = vmatpush1.bf16.msra.mxu0 %v4419
        %5476 = vmatprep.subr.bf16.mxu0 0
        %5477 = vmatpush1.bf16.msra.mxu0 %v4422
        %5478 = vmatprep.subr.bf16.mxu0 0
        %5479 = vmatpush1.bf16.msra.mxu0 %v4425
        %5480 = vmatprep.mubr.bf16.mxu0 %v2278
        %5481 = vmatmul.mubr.bf16.gmra.mrb[0].mxu0 %v2277
        %v5482 = vpop.f32.mrb[0].mxu0
        %v5483 = vadd.f32 %v5442, %v5482
        %v5484 = vpop.f32.mrb[0].mxu0
        %v5485 = vpop.f32.mrb[0].mxu0
        %v5486 = vadd.f32 %v5445, %v5485
        %v5487 = vpop.f32.mrb[0].mxu0
        %5488 = vdwg.mxu0
        %5489 = vmatprep.subr.bf16.mxu0 0
        %5490 = vmatpush1.bf16.msra.mxu0 %v4428
        %5491 = vmatprep.subr.bf16.mxu0 0
        %5492 = vmatpush1.bf16.msra.mxu0 %v4431
        %5493 = vmatprep.subr.bf16.mxu0 0
        %5494 = vmatpush1.bf16.msra.mxu0 %v4434
        %5495 = vmatprep.subr.bf16.mxu0 0
        %5496 = vmatpush1.bf16.msra.mxu0 %v4437
        %5497 = vmatprep.subr.bf16.mxu0 0
        %5498 = vmatpush1.bf16.msra.mxu0 %v4440
        %5499 = vmatprep.subr.bf16.mxu0 0
        %5500 = vmatpush1.bf16.msra.mxu0 %v4443
        %5501 = vmatprep.subr.bf16.mxu0 0
        %5502 = vmatpush1.bf16.msra.mxu0 %v4446
        %5503 = vmatprep.subr.bf16.mxu0 0
        %5504 = vmatpush1.bf16.msra.mxu0 %v4449
        %5505 = vmatprep.subr.bf16.mxu0 0
        %5506 = vmatpush1.bf16.msra.mxu0 %v4452
        %5507 = vmatprep.subr.bf16.mxu0 0
        %5508 = vmatpush1.bf16.msra.mxu0 %v4455
        %5509 = vmatprep.subr.bf16.mxu0 0
        %5510 = vmatpush1.bf16.msra.mxu0 %v4458
        %5511 = vmatprep.subr.bf16.mxu0 0
        %5512 = vmatpush1.bf16.msra.mxu0 %v4461
        %5513 = vmatprep.subr.bf16.mxu0 0
        %5514 = vmatpush1.bf16.msra.mxu0 %v4464
        %5515 = vmatprep.subr.bf16.mxu0 0
        %5516 = vmatpush1.bf16.msra.mxu0 %v4467
        %5517 = vmatprep.subr.bf16.mxu0 0
        %5518 = vmatpush1.bf16.msra.mxu0 %v4470
        %5519 = vmatprep.subr.bf16.mxu0 0
        %5520 = vmatpush1.bf16.msra.mxu0 %v4473
        %5521 = vmatprep.mubr.bf16.mxu0 %v2280
        %5522 = vmatmul.mubr.bf16.gmra.mrb[0].mxu0 %v2279
        %v5523 = vpop.f32.mrb[0].mxu0
        %v5524 = vadd.f32 %v5483, %v5523
        %v5525 = vpop.f32.mrb[0].mxu0
        %v5526 = vpop.f32.mrb[0].mxu0
        %v5527 = vadd.f32 %v5486, %v5526
        %v5528 = vpop.f32.mrb[0].mxu0
        %5529 = vdwg.mxu0
        %v5530 = vmax.f32 %v5194, 0.0
        %v5531 = vmax.f32 %v5196, 0.0
        %v5532 = vmax.f32 %v5524, 0.0
        %v5533 = vmax.f32 %v5198, 0.0
        %v5534 = vmax.f32 %v5200, 0.0
        %v5535 = vmax.f32 %v5527, 0.0
        %v5536 = vadd.f32 %v5530, %v5531
        %v5537 = vadd.f32 %v5536, %v5532
        %5538 = vadd.xlane.f32.xlu0 %v5537
        %v5539 = vpop.xlane.xlu0 %5538
        %v5540 = vadd.f32 %v5533, %v5534
        %v5541 = vadd.f32 %v5540, %v5535
        %5542 = vadd.xlane.f32.xlu0 %v5541
        %v5543 = vpop.xlane.xlu0 %5542
        %v5544 = vmul.f32 %v5539, 0.0026041667
        %v5545 = vmul.f32 %v5543, 0.0026041667
        %v5546 = vmul.f32 %v5530, %v5530
        %v5547 = vmul.f32 %v5531, %v5531
        %v5548 = vmul.f32 %v5532, %v5532
        %v5549 = vmul.f32 %v5533, %v5533
        %v5550 = vmul.f32 %v5534, %v5534
        %v5551 = vmul.f32 %v5535, %v5535
        %v5552 = vadd.f32 %v5546, %v5547
        %v5553 = vadd.f32 %v5552, %v5548
        %5554 = vadd.xlane.f32.xlu0 %v5553
        %v5555 = vpop.xlane.xlu0 %5554
        %v5556 = vadd.f32 %v5549, %v5550
        %v5557 = vadd.f32 %v5556, %v5551
        %5558 = vadd.xlane.f32.xlu0 %v5557
        %v5559 = vpop.xlane.xlu0 %5558
        %v5560 = vmul.f32 %v5555, 0.0026041667
        %v5561 = vmul.f32 %v5559, 0.0026041667
        %v5562 = vmul.f32 %v5544, %v5544
        %v5563 = vmul.f32 %v5545, %v5545
        %v5564 = vsub.f32 %v5560, %v5562
        %v5565 = vsub.f32 %v5561, %v5563
        %v5566 = vmax.f32 %v5564, 0.0
        %v5567 = vmax.f32 %v5565, 0.0
        %v5568 = vsub.f32 %v5530, %v5544
        %v5569 = vsub.f32 %v5531, %v5544
        %v5570 = vsub.f32 %v5532, %v5544
        %v5571 = vsub.f32 %v5533, %v5545
        %v5572 = vsub.f32 %v5534, %v5545
        %v5573 = vsub.f32 %v5535, %v5545
        %v5574 = vadd.f32 %v5566, 1e-05
        %v5575 = vadd.f32 %v5567, 1e-05
        %v5576 = vrsqrt.pop %v5574
        %v5577 = vrsqrt.pop %v5575
        %v5578 = vmul.f32 %v5568, %v5576
        %v5579 = vmul.f32 %v5569, %v5576
        %v5580 = vmul.f32 %v5570, %v5576
        %v5581 = vmul.f32 %v5571, %v5577
        %v5582 = vmul.f32 %v5572, %v5577
        %v5583 = vmul.f32 %v5573, %v5577
        %v5584 = vpack.c.bf16 %v2262, %v2259
        %v5585 = vpack.c.bf16 %v2263, %v2260
        %v5586 = vpack.c.bf16 %v2264, %v2261
        %v5587 = vld [vmem:[#allocation13] sm:$0xff]
        %v5588 = vld [vmem:[#allocation13 + $0x8] sm:$0xff]
        %v5589 = vld [vmem:[#allocation13 + $0x10] sm:$0xff]
        %v5590 = vld [vmem:[#allocation13 + $0x18] sm:$0xff]
        %v5591 = vld [vmem:[#allocation13 + $0x20] sm:$0xff]
        %v5592 = vld [vmem:[#allocation13 + $0x28] sm:$0xff]
        %v5593 = vld [vmem:[#allocation13 + $0x30] sm:$0xff]
        %v5594 = vld [vmem:[#allocation13 + $0x38] sm:$0xff]
        %v5595 = vld [vmem:[#allocation13 + $0x40] sm:$0xff]
        %v5596 = vld [vmem:[#allocation13 + $0x48] sm:$0xff]
        %v5597 = vld [vmem:[#allocation13 + $0x50] sm:$0xff]
        %v5598 = vld [vmem:[#allocation13 + $0x58] sm:$0xff]
        %v5599 = vld [vmem:[#allocation13 + $0x60] sm:$0xff]
        %v5600 = vld [vmem:[#allocation13 + $0x68] sm:$0xff]
        %v5601 = vld [vmem:[#allocation13 + $0x70] sm:$0xff]
        %v5602 = vld [vmem:[#allocation13 + $0x78] sm:$0xff]
        %v5603 = vld [vmem:[#allocation13 + $0x80] sm:$0xff]
        %v5604 = vld [vmem:[#allocation13 + $0x88] sm:$0xff]
        %v5605 = vld [vmem:[#allocation13 + $0x90] sm:$0xff]
        %v5606 = vld [vmem:[#allocation13 + $0x98] sm:$0xff]
        %v5607 = vld [vmem:[#allocation13 + $0xa0] sm:$0xff]
        %v5608 = vld [vmem:[#allocation13 + $0xa8] sm:$0xff]
        %v5609 = vld [vmem:[#allocation13 + $0xb0] sm:$0xff]
        %v5610 = vld [vmem:[#allocation13 + $0xb8] sm:$0xff]
        %v5611 = vld [vmem:[#allocation13 + $0xc0] sm:$0xff]
        %v5612 = vld [vmem:[#allocation13 + $0xc8] sm:$0xff]
        %v5613 = vld [vmem:[#allocation13 + $0xd0] sm:$0xff]
        %v5614 = vld [vmem:[#allocation13 + $0xd8] sm:$0xff]
        %v5615 = vld [vmem:[#allocation13 + $0xe0] sm:$0xff]
        %v5616 = vld [vmem:[#allocation13 + $0xe8] sm:$0xff]
        %v5617 = vld [vmem:[#allocation13 + $0xf0] sm:$0xff]
        %v5618 = vld [vmem:[#allocation13 + $0xf8] sm:$0xff]
        %v5619 = vld [vmem:[#allocation13 + $0x100] sm:$0xff]
        %v5620 = vld [vmem:[#allocation13 + $0x108] sm:$0xff]
        %v5621 = vld [vmem:[#allocation13 + $0x110] sm:$0xff]
        %v5622 = vld [vmem:[#allocation13 + $0x118] sm:$0xff]
        %v5623 = vld [vmem:[#allocation13 + $0x120] sm:$0xff]
        %v5624 = vld [vmem:[#allocation13 + $0x128] sm:$0xff]
        %v5625 = vld [vmem:[#allocation13 + $0x130] sm:$0xff]
        %v5626 = vld [vmem:[#allocation13 + $0x138] sm:$0xff]
        %v5627 = vld [vmem:[#allocation13 + $0x140] sm:$0xff]
        %v5628 = vld [vmem:[#allocation13 + $0x148] sm:$0xff]
        %v5629 = vld [vmem:[#allocation13 + $0x150] sm:$0xff]
        %v5630 = vld [vmem:[#allocation13 + $0x158] sm:$0xff]
        %v5631 = vld [vmem:[#allocation13 + $0x160] sm:$0xff]
        %v5632 = vld [vmem:[#allocation13 + $0x168] sm:$0xff]
        %v5633 = vld [vmem:[#allocation13 + $0x170] sm:$0xff]
        %v5634 = vld [vmem:[#allocation13 + $0x178] sm:$0xff]
        %v5635 = vpack.c.bf16 %v5581, %v5578
        %v5636 = vpack.c.bf16 %v5582, %v5579
        %v5637 = vpack.c.bf16 %v5583, %v5580
        %v5638 = vld [vmem:[#allocation14] sm:$0xff]
        %v5639 = vld [vmem:[#allocation14 + $0x8] sm:$0xff]
        %v5640 = vld [vmem:[#allocation14 + $0x10] sm:$0xff]
        %v5641 = vld [vmem:[#allocation14 + $0x18] sm:$0xff]
        %v5642 = vld [vmem:[#allocation14 + $0x20] sm:$0xff]
        %v5643 = vld [vmem:[#allocation14 + $0x28] sm:$0xff]
        %v5644 = vld [vmem:[#allocation14 + $0x30] sm:$0xff]
        %v5645 = vld [vmem:[#allocation14 + $0x38] sm:$0xff]
        %v5646 = vld [vmem:[#allocation14 + $0x40] sm:$0xff]
        %v5647 = vld [vmem:[#allocation14 + $0x48] sm:$0xff]
        %v5648 = vld [vmem:[#allocation14 + $0x50] sm:$0xff]
        %v5649 = vld [vmem:[#allocation14 + $0x58] sm:$0xff]
        %v5650 = vld [vmem:[#allocation14 + $0x60] sm:$0xff]
        %v5651 = vld [vmem:[#allocation14 + $0x68] sm:$0xff]
        %v5652 = vld [vmem:[#allocation14 + $0x70] sm:$0xff]
        %v5653 = vld [vmem:[#allocation14 + $0x78] sm:$0xff]
        %v5654 = vld [vmem:[#allocation14 + $0x80] sm:$0xff]
        %v5655 = vld [vmem:[#allocation14 + $0x88] sm:$0xff]
        %v5656 = vld [vmem:[#allocation14 + $0x90] sm:$0xff]
        %v5657 = vld [vmem:[#allocation14 + $0x98] sm:$0xff]
        %v5658 = vld [vmem:[#allocation14 + $0xa0] sm:$0xff]
        %v5659 = vld [vmem:[#allocation14 + $0xa8] sm:$0xff]
        %v5660 = vld [vmem:[#allocation14 + $0xb0] sm:$0xff]
        %v5661 = vld [vmem:[#allocation14 + $0xb8] sm:$0xff]
        %v5662 = vld [vmem:[#allocation14 + $0xc0] sm:$0xff]
        %v5663 = vld [vmem:[#allocation14 + $0xc8] sm:$0xff]
        %v5664 = vld [vmem:[#allocation14 + $0xd0] sm:$0xff]
        %v5665 = vld [vmem:[#allocation14 + $0xd8] sm:$0xff]
        %v5666 = vld [vmem:[#allocation14 + $0xe0] sm:$0xff]
        %v5667 = vld [vmem:[#allocation14 + $0xe8] sm:$0xff]
        %v5668 = vld [vmem:[#allocation14 + $0xf0] sm:$0xff]
        %v5669 = vld [vmem:[#allocation14 + $0xf8] sm:$0xff]
        %v5670 = vld [vmem:[#allocation14 + $0x100] sm:$0xff]
        %v5671 = vld [vmem:[#allocation14 + $0x108] sm:$0xff]
        %v5672 = vld [vmem:[#allocation14 + $0x110] sm:$0xff]
        %v5673 = vld [vmem:[#allocation14 + $0x118] sm:$0xff]
        %v5674 = vld [vmem:[#allocation14 + $0x120] sm:$0xff]
        %v5675 = vld [vmem:[#allocation14 + $0x128] sm:$0xff]
        %v5676 = vld [vmem:[#allocation14 + $0x130] sm:$0xff]
        %v5677 = vld [vmem:[#allocation14 + $0x138] sm:$0xff]
        %v5678 = vld [vmem:[#allocation14 + $0x140] sm:$0xff]
        %v5679 = vld [vmem:[#allocation14 + $0x148] sm:$0xff]
        %v5680 = vld [vmem:[#allocation14 + $0x150] sm:$0xff]
        %v5681 = vld [vmem:[#allocation14 + $0x158] sm:$0xff]
        %v5682 = vld [vmem:[#allocation14 + $0x160] sm:$0xff]
        %v5683 = vld [vmem:[#allocation14 + $0x168] sm:$0xff]
        %v5684 = vld [vmem:[#allocation14 + $0x170] sm:$0xff]
        %v5685 = vld [vmem:[#allocation14 + $0x178] sm:$0xff]
        %v5734 = vunpack.c.l.b16 %v5638
        %v5735 = vunpack.c.h.b16 %v5638
        %v5736 = vunpack.c.l.b16 %v5639
        %v5737 = vunpack.c.h.b16 %v5639
        %v5738 = vunpack.c.l.b16 %v5640
        %v5739 = vunpack.c.h.b16 %v5640
        %v5740 = vunpack.c.l.b16 %v5641
        %v5741 = vunpack.c.h.b16 %v5641
        %v5742 = vunpack.c.l.b16 %v5642
        %v5743 = vunpack.c.h.b16 %v5642
        %v5744 = vunpack.c.l.b16 %v5643
        %v5745 = vunpack.c.h.b16 %v5643
        %v5746 = vunpack.c.l.b16 %v5644
        %v5747 = vunpack.c.h.b16 %v5644
        %v5748 = vunpack.c.l.b16 %v5645
        %v5749 = vunpack.c.h.b16 %v5645
        %v5750 = vunpack.c.l.b16 %v5646
        %v5751 = vunpack.c.h.b16 %v5646
        %v5752 = vunpack.c.l.b16 %v5647
        %v5753 = vunpack.c.h.b16 %v5647
        %v5754 = vunpack.c.l.b16 %v5648
        %v5755 = vunpack.c.h.b16 %v5648
        %v5756 = vunpack.c.l.b16 %v5649
        %v5757 = vunpack.c.h.b16 %v5649
        %v5758 = vunpack.c.l.b16 %v5650
        %v5759 = vunpack.c.h.b16 %v5650
        %v5760 = vunpack.c.l.b16 %v5651
        %v5761 = vunpack.c.h.b16 %v5651
        %v5762 = vunpack.c.l.b16 %v5652
        %v5763 = vunpack.c.h.b16 %v5652
        %v5764 = vunpack.c.l.b16 %v5653
        %v5765 = vunpack.c.h.b16 %v5653
        %v5766 = vunpack.c.l.b16 %v5654
        %v5767 = vunpack.c.h.b16 %v5654
        %v5768 = vunpack.c.l.b16 %v5655
        %v5769 = vunpack.c.h.b16 %v5655
        %v5770 = vunpack.c.l.b16 %v5656
        %v5771 = vunpack.c.h.b16 %v5656
        %v5772 = vunpack.c.l.b16 %v5657
        %v5773 = vunpack.c.h.b16 %v5657
        %v5774 = vunpack.c.l.b16 %v5658
        %v5775 = vunpack.c.h.b16 %v5658
        %v5776 = vunpack.c.l.b16 %v5659
        %v5777 = vunpack.c.h.b16 %v5659
        %v5778 = vunpack.c.l.b16 %v5660
        %v5779 = vunpack.c.h.b16 %v5660
        %v5780 = vunpack.c.l.b16 %v5661
        %v5781 = vunpack.c.h.b16 %v5661
        %v5782 = vunpack.c.l.b16 %v5662
        %v5783 = vunpack.c.h.b16 %v5662
        %v5784 = vunpack.c.l.b16 %v5663
        %v5785 = vunpack.c.h.b16 %v5663
        %v5786 = vunpack.c.l.b16 %v5664
        %v5787 = vunpack.c.h.b16 %v5664
        %v5788 = vunpack.c.l.b16 %v5665
        %v5789 = vunpack.c.h.b16 %v5665
        %v5790 = vunpack.c.l.b16 %v5666
        %v5791 = vunpack.c.h.b16 %v5666
        %v5792 = vunpack.c.l.b16 %v5667
        %v5793 = vunpack.c.h.b16 %v5667
        %v5794 = vunpack.c.l.b16 %v5668
        %v5795 = vunpack.c.h.b16 %v5668
        %v5796 = vunpack.c.l.b16 %v5669
        %v5797 = vunpack.c.h.b16 %v5669
        %v5798 = vunpack.c.l.b16 %v5670
        %v5799 = vunpack.c.h.b16 %v5670
        %v5800 = vunpack.c.l.b16 %v5671
        %v5801 = vunpack.c.h.b16 %v5671
        %v5802 = vunpack.c.l.b16 %v5672
        %v5803 = vunpack.c.h.b16 %v5672
        %v5804 = vunpack.c.l.b16 %v5673
        %v5805 = vunpack.c.h.b16 %v5673
        %v5806 = vunpack.c.l.b16 %v5674
        %v5807 = vunpack.c.h.b16 %v5674
        %v5808 = vunpack.c.l.b16 %v5675
        %v5809 = vunpack.c.h.b16 %v5675
        %v5810 = vunpack.c.l.b16 %v5676
        %v5811 = vunpack.c.h.b16 %v5676
        %v5812 = vunpack.c.l.b16 %v5677
        %v5813 = vunpack.c.h.b16 %v5677
        %v5814 = vunpack.c.l.b16 %v5678
        %v5815 = vunpack.c.h.b16 %v5678
        %v5816 = vunpack.c.l.b16 %v5679
        %v5817 = vunpack.c.h.b16 %v5679
        %v5818 = vunpack.c.l.b16 %v5680
        %v5819 = vunpack.c.h.b16 %v5680
        %v5820 = vunpack.c.l.b16 %v5681
        %v5821 = vunpack.c.h.b16 %v5681
        %v5822 = vunpack.c.l.b16 %v5682
        %v5823 = vunpack.c.h.b16 %v5682
        %v5824 = vunpack.c.l.b16 %v5683
        %v5825 = vunpack.c.h.b16 %v5683
        %v5826 = vunpack.c.l.b16 %v5684
        %v5827 = vunpack.c.h.b16 %v5684
        %v5828 = vunpack.c.l.b16 %v5685
        %v5829 = vunpack.c.h.b16 %v5685
        %v5830 = vpack.c.b16 %v5736, %v5734
        %v5831 = vpack.c.b16 %v5737, %v5735
        %v5832 = vpack.c.b16 %v5740, %v5738
        %v5833 = vpack.c.b16 %v5741, %v5739
        %v5834 = vpack.c.b16 %v5744, %v5742
        %v5835 = vpack.c.b16 %v5745, %v5743
        %v5836 = vpack.c.b16 %v5748, %v5746
        %v5837 = vpack.c.b16 %v5749, %v5747
        %v5838 = vpack.c.b16 %v5752, %v5750
        %v5839 = vpack.c.b16 %v5753, %v5751
        %v5840 = vpack.c.b16 %v5756, %v5754
        %v5841 = vpack.c.b16 %v5757, %v5755
        %v5842 = vpack.c.b16 %v5760, %v5758
        %v5843 = vpack.c.b16 %v5761, %v5759
        %v5844 = vpack.c.b16 %v5764, %v5762
        %v5845 = vpack.c.b16 %v5765, %v5763
        %v5846 = vpack.c.b16 %v5768, %v5766
        %v5847 = vpack.c.b16 %v5769, %v5767
        %v5848 = vpack.c.b16 %v5772, %v5770
        %v5849 = vpack.c.b16 %v5773, %v5771
        %v5850 = vpack.c.b16 %v5776, %v5774
        %v5851 = vpack.c.b16 %v5777, %v5775
        %v5852 = vpack.c.b16 %v5780, %v5778
        %v5853 = vpack.c.b16 %v5781, %v5779
        %v5854 = vpack.c.b16 %v5784, %v5782
        %v5855 = vpack.c.b16 %v5785, %v5783
        %v5856 = vpack.c.b16 %v5788, %v5786
        %v5857 = vpack.c.b16 %v5789, %v5787
        %v5858 = vpack.c.b16 %v5792, %v5790
        %v5859 = vpack.c.b16 %v5793, %v5791
        %v5860 = vpack.c.b16 %v5796, %v5794
        %v5861 = vpack.c.b16 %v5797, %v5795
        %v5862 = vpack.c.b16 %v5800, %v5798
        %v5863 = vpack.c.b16 %v5801, %v5799
        %v5864 = vpack.c.b16 %v5804, %v5802
        %v5865 = vpack.c.b16 %v5805, %v5803
        %v5866 = vpack.c.b16 %v5808, %v5806
        %v5867 = vpack.c.b16 %v5809, %v5807
        %v5868 = vpack.c.b16 %v5812, %v5810
        %v5869 = vpack.c.b16 %v5813, %v5811
        %v5870 = vpack.c.b16 %v5816, %v5814
        %v5871 = vpack.c.b16 %v5817, %v5815
        %v5872 = vpack.c.b16 %v5820, %v5818
        %v5873 = vpack.c.b16 %v5821, %v5819
        %v5874 = vpack.c.b16 %v5824, %v5822
        %v5875 = vpack.c.b16 %v5825, %v5823
        %v5876 = vpack.c.b16 %v5828, %v5826
        %v5877 = vpack.c.b16 %v5829, %v5827
        %5926 = vmatprep.subr.bf16.mxu0 %v5831
        %5927 = vmatpush1.bf16.msra.mxu0 %v5830
        %5928 = vmatprep.subr.bf16.mxu0 %v5833
        %5929 = vmatpush1.bf16.msra.mxu0 %v5832
        %5930 = vmatprep.subr.bf16.mxu0 %v5835
        %5931 = vmatpush1.bf16.msra.mxu0 %v5834
        %5932 = vmatprep.subr.bf16.mxu0 %v5837
        %5933 = vmatpush1.bf16.msra.mxu0 %v5836
        %5934 = vmatprep.subr.bf16.mxu0 %v5839
        %5935 = vmatpush1.bf16.msra.mxu0 %v5838
        %5936 = vmatprep.subr.bf16.mxu0 %v5841
        %5937 = vmatpush1.bf16.msra.mxu0 %v5840
        %5938 = vmatprep.subr.bf16.mxu0 %v5843
        %5939 = vmatpush1.bf16.msra.mxu0 %v5842
        %5940 = vmatprep.subr.bf16.mxu0 %v5845
        %5941 = vmatpush1.bf16.msra.mxu0 %v5844
        %5942 = vmatprep.subr.bf16.mxu0 %v5847
        %5943 = vmatpush1.bf16.msra.mxu0 %v5846
        %5944 = vmatprep.subr.bf16.mxu0 %v5849
        %5945 = vmatpush1.bf16.msra.mxu0 %v5848
        %5946 = vmatprep.subr.bf16.mxu0 %v5851
        %5947 = vmatpush1.bf16.msra.mxu0 %v5850
        %5948 = vmatprep.subr.bf16.mxu0 %v5853
        %5949 = vmatpush1.bf16.msra.mxu0 %v5852
        %5950 = vmatprep.subr.bf16.mxu0 %v5855
        %5951 = vmatpush1.bf16.msra.mxu0 %v5854
        %5952 = vmatprep.subr.bf16.mxu0 %v5857
        %5953 = vmatpush1.bf16.msra.mxu0 %v5856
        %5954 = vmatprep.subr.bf16.mxu0 %v5859
        %5955 = vmatpush1.bf16.msra.mxu0 %v5858
        %5956 = vmatprep.subr.bf16.mxu0 %v5861
        %5957 = vmatpush1.bf16.msra.mxu0 %v5860
        %5958 = vmatprep.mubr.bf16.mxu0 %v5636
        %5959 = vmatmul.mubr.bf16.gmra.mrb[0].mxu0 %v5635
        %v5960 = vpop.f32.mrb[0].mxu0
        %v5961 = vadd.f32 0.0, %v5960
        %v5962 = vpop.f32.mrb[0].mxu0
        %v5963 = vadd.f32 0.0, %v5962
        %v5964 = vpop.f32.mrb[0].mxu0
        %v5965 = vadd.f32 0.0, %v5964
        %v5966 = vpop.f32.mrb[0].mxu0
        %v5967 = vadd.f32 0.0, %v5966
        %5968 = vdwg.mxu0
        %5969 = vmatprep.subr.bf16.mxu0 %v5863
        %5970 = vmatpush1.bf16.msra.mxu0 %v5862
        %5971 = vmatprep.subr.bf16.mxu0 %v5865
        %5972 = vmatpush1.bf16.msra.mxu0 %v5864
        %5973 = vmatprep.subr.bf16.mxu0 %v5867
        %5974 = vmatpush1.bf16.msra.mxu0 %v5866
        %5975 = vmatprep.subr.bf16.mxu0 %v5869
        %5976 = vmatpush1.bf16.msra.mxu0 %v5868
        %5977 = vmatprep.subr.bf16.mxu0 %v5871
        %5978 = vmatpush1.bf16.msra.mxu0 %v5870
        %5979 = vmatprep.subr.bf16.mxu0 %v5873
        %5980 = vmatpush1.bf16.msra.mxu0 %v5872
        %5981 = vmatprep.subr.bf16.mxu0 %v5875
        %5982 = vmatpush1.bf16.msra.mxu0 %v5874
        %5983 = vmatprep.subr.bf16.mxu0 %v5877
        %5984 = vmatpush1.bf16.msra.mxu0 %v5876
        %5985 = vmatprep.subr.bf16.mxu0 0
        %5986 = vmatpush1.bf16.msra.mxu0 0
        %5987 = vmatprep.subr.bf16.mxu0 0
        %5988 = vmatpush1.bf16.msra.mxu0 0
        %5989 = vmatprep.subr.bf16.mxu0 0
        %5990 = vmatpush1.bf16.msra.mxu0 0
        %5991 = vmatprep.subr.bf16.mxu0 0
        %5992 = vmatpush1.bf16.msra.mxu0 0
        %5993 = vmatprep.subr.bf16.mxu0 0
        %5994 = vmatpush1.bf16.msra.mxu0 0
        %5995 = vmatprep.subr.bf16.mxu0 0
        %5996 = vmatpush1.bf16.msra.mxu0 0
        %5997 = vmatprep.subr.bf16.mxu0 0
        %5998 = vmatpush1.bf16.msra.mxu0 0
        %5999 = vmatprep.subr.bf16.mxu0 0
        %6000 = vmatpush1.bf16.msra.mxu0 0
        %6001 = vmatprep.mubr.bf16.mxu0 0
        %6002 = vmatmul.mubr.bf16.gmra.mrb[0].mxu0 %v5637
        %v6003 = vpop.f32.mrb[0].mxu0
        %v6004 = vadd.f32 %v5961, %v6003
        %v6005 = vpop.f32.mrb[0].mxu0
        %v6006 = vadd.f32 %v5963, %v6005
        %v6007 = vpop.f32.mrb[0].mxu0
        %v6008 = vadd.f32 %v5965, %v6007
        %v6009 = vpop.f32.mrb[0].mxu0
        %v6010 = vadd.f32 %v5967, %v6009
        %6011 = vdwg.mxu0
        %v6060 = vunpack.c.l.b16 %v5587
        %v6061 = vunpack.c.h.b16 %v5587
        %v6062 = vunpack.c.l.b16 %v5588
        %v6063 = vunpack.c.h.b16 %v5588
        %v6064 = vunpack.c.l.b16 %v5589
        %v6065 = vunpack.c.h.b16 %v5589
        %v6066 = vunpack.c.l.b16 %v5590
        %v6067 = vunpack.c.h.b16 %v5590
        %v6068 = vunpack.c.l.b16 %v5591
        %v6069 = vunpack.c.h.b16 %v5591
        %v6070 = vunpack.c.l.b16 %v5592
        %v6071 = vunpack.c.h.b16 %v5592
        %v6072 = vunpack.c.l.b16 %v5593
        %v6073 = vunpack.c.h.b16 %v5593
        %v6074 = vunpack.c.l.b16 %v5594
        %v6075 = vunpack.c.h.b16 %v5594
        %v6076 = vunpack.c.l.b16 %v5595
        %v6077 = vunpack.c.h.b16 %v5595
        %v6078 = vunpack.c.l.b16 %v5596
        %v6079 = vunpack.c.h.b16 %v5596
        %v6080 = vunpack.c.l.b16 %v5597
        %v6081 = vunpack.c.h.b16 %v5597
        %v6082 = vunpack.c.l.b16 %v5598
        %v6083 = vunpack.c.h.b16 %v5598
        %v6084 = vunpack.c.l.b16 %v5599
        %v6085 = vunpack.c.h.b16 %v5599
        %v6086 = vunpack.c.l.b16 %v5600
        %v6087 = vunpack.c.h.b16 %v5600
        %v6088 = vunpack.c.l.b16 %v5601
        %v6089 = vunpack.c.h.b16 %v5601
        %v6090 = vunpack.c.l.b16 %v5602
        %v6091 = vunpack.c.h.b16 %v5602
        %v6092 = vunpack.c.l.b16 %v5603
        %v6093 = vunpack.c.h.b16 %v5603
        %v6094 = vunpack.c.l.b16 %v5604
        %v6095 = vunpack.c.h.b16 %v5604
        %v6096 = vunpack.c.l.b16 %v5605
        %v6097 = vunpack.c.h.b16 %v5605
        %v6098 = vunpack.c.l.b16 %v5606
        %v6099 = vunpack.c.h.b16 %v5606
        %v6100 = vunpack.c.l.b16 %v5607
        %v6101 = vunpack.c.h.b16 %v5607
        %v6102 = vunpack.c.l.b16 %v5608
        %v6103 = vunpack.c.h.b16 %v5608
        %v6104 = vunpack.c.l.b16 %v5609
        %v6105 = vunpack.c.h.b16 %v5609
        %v6106 = vunpack.c.l.b16 %v5610
        %v6107 = vunpack.c.h.b16 %v5610
        %v6108 = vunpack.c.l.b16 %v5611
        %v6109 = vunpack.c.h.b16 %v5611
        %v6110 = vunpack.c.l.b16 %v5612
        %v6111 = vunpack.c.h.b16 %v5612
        %v6112 = vunpack.c.l.b16 %v5613
        %v6113 = vunpack.c.h.b16 %v5613
        %v6114 = vunpack.c.l.b16 %v5614
        %v6115 = vunpack.c.h.b16 %v5614
        %v6116 = vunpack.c.l.b16 %v5615
        %v6117 = vunpack.c.h.b16 %v5615
        %v6118 = vunpack.c.l.b16 %v5616
        %v6119 = vunpack.c.h.b16 %v5616
        %v6120 = vunpack.c.l.b16 %v5617
        %v6121 = vunpack.c.h.b16 %v5617
        %v6122 = vunpack.c.l.b16 %v5618
        %v6123 = vunpack.c.h.b16 %v5618
        %v6124 = vunpack.c.l.b16 %v5619
        %v6125 = vunpack.c.h.b16 %v5619
        %v6126 = vunpack.c.l.b16 %v5620
        %v6127 = vunpack.c.h.b16 %v5620
        %v6128 = vunpack.c.l.b16 %v5621
        %v6129 = vunpack.c.h.b16 %v5621
        %v6130 = vunpack.c.l.b16 %v5622
        %v6131 = vunpack.c.h.b16 %v5622
        %v6132 = vunpack.c.l.b16 %v5623
        %v6133 = vunpack.c.h.b16 %v5623
        %v6134 = vunpack.c.l.b16 %v5624
        %v6135 = vunpack.c.h.b16 %v5624
        %v6136 = vunpack.c.l.b16 %v5625
        %v6137 = vunpack.c.h.b16 %v5625
        %v6138 = vunpack.c.l.b16 %v5626
        %v6139 = vunpack.c.h.b16 %v5626
        %v6140 = vunpack.c.l.b16 %v5627
        %v6141 = vunpack.c.h.b16 %v5627
        %v6142 = vunpack.c.l.b16 %v5628
        %v6143 = vunpack.c.h.b16 %v5628
        %v6144 = vunpack.c.l.b16 %v5629
        %v6145 = vunpack.c.h.b16 %v5629
        %v6146 = vunpack.c.l.b16 %v5630
        %v6147 = vunpack.c.h.b16 %v5630
        %v6148 = vunpack.c.l.b16 %v5631
        %v6149 = vunpack.c.h.b16 %v5631
        %v6150 = vunpack.c.l.b16 %v5632
        %v6151 = vunpack.c.h.b16 %v5632
        %v6152 = vunpack.c.l.b16 %v5633
        %v6153 = vunpack.c.h.b16 %v5633
        %v6154 = vunpack.c.l.b16 %v5634
        %v6155 = vunpack.c.h.b16 %v5634
        %v6156 = vpack.c.b16 %v6062, %v6060
        %v6157 = vpack.c.b16 %v6063, %v6061
        %v6158 = vpack.c.b16 %v6066, %v6064
        %v6159 = vpack.c.b16 %v6067, %v6065
        %v6160 = vpack.c.b16 %v6070, %v6068
        %v6161 = vpack.c.b16 %v6071, %v6069
        %v6162 = vpack.c.b16 %v6074, %v6072
        %v6163 = vpack.c.b16 %v6075, %v6073
        %v6164 = vpack.c.b16 %v6078, %v6076
        %v6165 = vpack.c.b16 %v6079, %v6077
        %v6166 = vpack.c.b16 %v6082, %v6080
        %v6167 = vpack.c.b16 %v6083, %v6081
        %v6168 = vpack.c.b16 %v6086, %v6084
        %v6169 = vpack.c.b16 %v6087, %v6085
        %v6170 = vpack.c.b16 %v6090, %v6088
        %v6171 = vpack.c.b16 %v6091, %v6089
        %v6172 = vpack.c.b16 %v6094, %v6092
        %v6173 = vpack.c.b16 %v6095, %v6093
        %v6174 = vpack.c.b16 %v6098, %v6096
        %v6175 = vpack.c.b16 %v6099, %v6097
        %v6176 = vpack.c.b16 %v6102, %v6100
        %v6177 = vpack.c.b16 %v6103, %v6101
        %v6178 = vpack.c.b16 %v6106, %v6104
        %v6179 = vpack.c.b16 %v6107, %v6105
        %v6180 = vpack.c.b16 %v6110, %v6108
        %v6181 = vpack.c.b16 %v6111, %v6109
        %v6182 = vpack.c.b16 %v6114, %v6112
        %v6183 = vpack.c.b16 %v6115, %v6113
        %v6184 = vpack.c.b16 %v6118, %v6116
        %v6185 = vpack.c.b16 %v6119, %v6117
        %v6186 = vpack.c.b16 %v6122, %v6120
        %v6187 = vpack.c.b16 %v6123, %v6121
        %v6188 = vpack.c.b16 %v6126, %v6124
        %v6189 = vpack.c.b16 %v6127, %v6125
        %v6190 = vpack.c.b16 %v6130, %v6128
        %v6191 = vpack.c.b16 %v6131, %v6129
        %v6192 = vpack.c.b16 %v6134, %v6132
        %v6193 = vpack.c.b16 %v6135, %v6133
        %v6194 = vpack.c.b16 %v6138, %v6136
        %v6195 = vpack.c.b16 %v6139, %v6137
        %v6196 = vpack.c.b16 %v6142, %v6140
        %v6197 = vpack.c.b16 %v6143, %v6141
        %v6198 = vpack.c.b16 %v6146, %v6144
        %v6199 = vpack.c.b16 %v6147, %v6145
        %v6200 = vpack.c.b16 %v6150, %v6148
        %v6201 = vpack.c.b16 %v6151, %v6149
        %v6202 = vpack.c.b16 %v6154, %v6152
        %v6203 = vpack.c.b16 %v6155, %v6153
        %6252 = vmatprep.subr.bf16.mxu0 %v6157
        %6253 = vmatpush1.bf16.msra.mxu0 %v6156
        %6254 = vmatprep.subr.bf16.mxu0 %v6159
        %6255 = vmatpush1.bf16.msra.mxu0 %v6158
        %6256 = vmatprep.subr.bf16.mxu0 %v6161
        %6257 = vmatpush1.bf16.msra.mxu0 %v6160
        %6258 = vmatprep.subr.bf16.mxu0 %v6163
        %6259 = vmatpush1.bf16.msra.mxu0 %v6162
        %6260 = vmatprep.subr.bf16.mxu0 %v6165
        %6261 = vmatpush1.bf16.msra.mxu0 %v6164
        %6262 = vmatprep.subr.bf16.mxu0 %v6167
        %6263 = vmatpush1.bf16.msra.mxu0 %v6166
        %6264 = vmatprep.subr.bf16.mxu0 %v6169
        %6265 = vmatpush1.bf16.msra.mxu0 %v6168
        %6266 = vmatprep.subr.bf16.mxu0 %v6171
        %6267 = vmatpush1.bf16.msra.mxu0 %v6170
        %6268 = vmatprep.subr.bf16.mxu0 %v6173
        %6269 = vmatpush1.bf16.msra.mxu0 %v6172
        %6270 = vmatprep.subr.bf16.mxu0 %v6175
        %6271 = vmatpush1.bf16.msra.mxu0 %v6174
        %6272 = vmatprep.subr.bf16.mxu0 %v6177
        %6273 = vmatpush1.bf16.msra.mxu0 %v6176
        %6274 = vmatprep.subr.bf16.mxu0 %v6179
        %6275 = vmatpush1.bf16.msra.mxu0 %v6178
        %6276 = vmatprep.subr.bf16.mxu0 %v6181
        %6277 = vmatpush1.bf16.msra.mxu0 %v6180
        %6278 = vmatprep.subr.bf16.mxu0 %v6183
        %6279 = vmatpush1.bf16.msra.mxu0 %v6182
        %6280 = vmatprep.subr.bf16.mxu0 %v6185
        %6281 = vmatpush1.bf16.msra.mxu0 %v6184
        %6282 = vmatprep.subr.bf16.mxu0 %v6187
        %6283 = vmatpush1.bf16.msra.mxu0 %v6186
        %6284 = vmatprep.mubr.bf16.mxu0 %v5585
        %6285 = vmatmul.mubr.bf16.gmra.mrb[0].mxu0 %v5584
        %v6286 = vpop.f32.mrb[0].mxu0
        %v6287 = vadd.f32 %v6004, %v6286
        %v6288 = vpop.f32.mrb[0].mxu0
        %v6289 = vadd.f32 %v6006, %v6288
        %v6290 = vpop.f32.mrb[0].mxu0
        %v6291 = vadd.f32 %v6008, %v6290
        %v6292 = vpop.f32.mrb[0].mxu0
        %v6293 = vadd.f32 %v6010, %v6292
        %6294 = vdwg.mxu0
        %6295 = vmatprep.subr.bf16.mxu0 %v6189
        %6296 = vmatpush1.bf16.msra.mxu0 %v6188
        %6297 = vmatprep.subr.bf16.mxu0 %v6191
        %6298 = vmatpush1.bf16.msra.mxu0 %v6190
        %6299 = vmatprep.subr.bf16.mxu0 %v6193
        %6300 = vmatpush1.bf16.msra.mxu0 %v6192
        %6301 = vmatprep.subr.bf16.mxu0 %v6195
        %6302 = vmatpush1.bf16.msra.mxu0 %v6194
        %6303 = vmatprep.subr.bf16.mxu0 %v6197
        %6304 = vmatpush1.bf16.msra.mxu0 %v6196
        %6305 = vmatprep.subr.bf16.mxu0 %v6199
        %6306 = vmatpush1.bf16.msra.mxu0 %v6198
        %6307 = vmatprep.subr.bf16.mxu0 %v6201
        %6308 = vmatpush1.bf16.msra.mxu0 %v6200
        %6309 = vmatprep.subr.bf16.mxu0 %v6203
        %6310 = vmatpush1.bf16.msra.mxu0 %v6202
        %6311 = vmatprep.subr.bf16.mxu0 0
        %6312 = vmatpush1.bf16.msra.mxu0 0
        %6313 = vmatprep.subr.bf16.mxu0 0
        %6314 = vmatpush1.bf16.msra.mxu0 0
        %6315 = vmatprep.subr.bf16.mxu0 0
        %6316 = vmatpush1.bf16.msra.mxu0 0
        %6317 = vmatprep.subr.bf16.mxu0 0
        %6318 = vmatpush1.bf16.msra.mxu0 0
        %6319 = vmatprep.subr.bf16.mxu0 0
        %6320 = vmatpush1.bf16.msra.mxu0 0
        %6321 = vmatprep.subr.bf16.mxu0 0
        %6322 = vmatpush1.bf16.msra.mxu0 0
        %6323 = vmatprep.subr.bf16.mxu0 0
        %6324 = vmatpush1.bf16.msra.mxu0 0
        %6325 = vmatprep.subr.bf16.mxu0 0
        %6326 = vmatpush1.bf16.msra.mxu0 0
        %6327 = vmatprep.mubr.bf16.mxu0 0
        %6328 = vmatmul.mubr.bf16.gmra.mrb[0].mxu0 %v5586
        %v6329 = vpop.f32.mrb[0].mxu0
        %v6330 = vadd.f32 %v6287, %v6329
        %v6331 = vpop.f32.mrb[0].mxu0
        %v6332 = vadd.f32 %v6289, %v6331
        %v6333 = vpop.f32.mrb[0].mxu0
        %v6334 = vadd.f32 %v6291, %v6333
        %v6335 = vpop.f32.mrb[0].mxu0
        %v6336 = vadd.f32 %v6293, %v6335
        %6337 = vdwg.mxu0
        %v6338 = vld [vmem:[#allocation16] sm:$0x3]
        %v6340 = vlaneseq
        %v6341 = vshrl.u32 %v6340, 7
        %v6342 = vsub.s32 0, %v6341
        %v6343 = vrot.slane %v6338, %v6342
        %v6344 = vlaneseq
        %v6345 = vshrl.u32 %v6344, 7
        %v6346 = vsub.s32 1, %v6345
        %v6347 = vrot.slane %v6338, %v6346
        %v6350 = vadd.f32 %v6330, %v6343
        %v6351 = vadd.f32 %v6332, %v6347
        %v6352 = vadd.f32 %v6334, %v6343
        %v6353 = vadd.f32 %v6336, %v6347
        %v6354 = vmax.f32 %v6350, 0.0
        %v6355 = vmax.f32 %v6351, 0.0
        %v6356 = vmax.f32 %v6352, 0.0
        %v6357 = vmax.f32 %v6353, 0.0
        %v6358 = vpack.c.bf16 %v6356, %v6354
        %v6359 = vpack.c.bf16 %v6357, %v6355
        %v6360 = vld [vmem:[#allocation17] sm:$0xf]
        %v6361 = vld [vmem:[#allocation17 + $0x4] sm:$0xf]
        %v6362 = vld [vmem:[#allocation17 + $0x8] sm:$0xf]
        %v6363 = vld [vmem:[#allocation17 + $0xc] sm:$0xf]
        %v6364 = vld [vmem:[#allocation17 + $0x10] sm:$0xf]
        %v6365 = vld [vmem:[#allocation17 + $0x14] sm:$0xf]
        %v6366 = vld [vmem:[#allocation17 + $0x18] sm:$0xf]
        %v6367 = vld [vmem:[#allocation17 + $0x1c] sm:$0xf]
        %v6368 = vld [vmem:[#allocation17 + $0x20] sm:$0xf]
        %v6369 = vld [vmem:[#allocation17 + $0x24] sm:$0xf]
        %v6370 = vld [vmem:[#allocation17 + $0x28] sm:$0xf]
        %v6371 = vld [vmem:[#allocation17 + $0x2c] sm:$0xf]
        %v6372 = vld [vmem:[#allocation17 + $0x30] sm:$0xf]
        %v6373 = vld [vmem:[#allocation17 + $0x34] sm:$0xf]
        %v6374 = vld [vmem:[#allocation17 + $0x38] sm:$0xf]
        %v6375 = vld [vmem:[#allocation17 + $0x3c] sm:$0xf]
        %v6376 = vld [vmem:[#allocation17 + $0x40] sm:$0xf]
        %v6377 = vld [vmem:[#allocation17 + $0x44] sm:$0xf]
        %v6378 = vld [vmem:[#allocation17 + $0x48] sm:$0xf]
        %v6379 = vld [vmem:[#allocation17 + $0x4c] sm:$0xf]
        %v6380 = vld [vmem:[#allocation17 + $0x50] sm:$0xf]
        %v6381 = vld [vmem:[#allocation17 + $0x54] sm:$0xf]
        %v6382 = vld [vmem:[#allocation17 + $0x58] sm:$0xf]
        %v6383 = vld [vmem:[#allocation17 + $0x5c] sm:$0xf]
        %v6384 = vld [vmem:[#allocation17 + $0x60] sm:$0xf]
        %v6385 = vld [vmem:[#allocation17 + $0x64] sm:$0xf]
        %v6386 = vld [vmem:[#allocation17 + $0x68] sm:$0xf]
        %v6387 = vld [vmem:[#allocation17 + $0x6c] sm:$0xf]
        %v6388 = vld [vmem:[#allocation17 + $0x70] sm:$0xf]
        %v6389 = vld [vmem:[#allocation17 + $0x74] sm:$0xf]
        %v6390 = vld [vmem:[#allocation17 + $0x78] sm:$0xf]
        %v6391 = vld [vmem:[#allocation17 + $0x7c] sm:$0xf]
        %v6392 = vld [vmem:[#allocation19] sm:$0x1]
        %v6394 = vlaneseq
        %v6395 = vshrl.u32 %v6394, 7
        %v6396 = vsub.s32 0, %v6395
        %v6397 = vrot.slane %v6392, %v6396
        %v6431 = vunpack.c.l.b16 %v6360
        %v6432 = vunpack.c.l.b16 %v6361
        %v6433 = vunpack.c.l.b16 %v6362
        %v6434 = vunpack.c.l.b16 %v6363
        %v6435 = vunpack.c.l.b16 %v6364
        %v6436 = vunpack.c.l.b16 %v6365
        %v6437 = vunpack.c.l.b16 %v6366
        %v6438 = vunpack.c.l.b16 %v6367
        %v6439 = vunpack.c.l.b16 %v6368
        %v6440 = vunpack.c.l.b16 %v6369
        %v6441 = vunpack.c.l.b16 %v6370
        %v6442 = vunpack.c.l.b16 %v6371
        %v6443 = vunpack.c.l.b16 %v6372
        %v6444 = vunpack.c.l.b16 %v6373
        %v6445 = vunpack.c.l.b16 %v6374
        %v6446 = vunpack.c.l.b16 %v6375
        %v6447 = vunpack.c.l.b16 %v6376
        %v6448 = vunpack.c.l.b16 %v6377
        %v6449 = vunpack.c.l.b16 %v6378
        %v6450 = vunpack.c.l.b16 %v6379
        %v6451 = vunpack.c.l.b16 %v6380
        %v6452 = vunpack.c.l.b16 %v6381
        %v6453 = vunpack.c.l.b16 %v6382
        %v6454 = vunpack.c.l.b16 %v6383
        %v6455 = vunpack.c.l.b16 %v6384
        %v6456 = vunpack.c.l.b16 %v6385
        %v6457 = vunpack.c.l.b16 %v6386
        %v6458 = vunpack.c.l.b16 %v6387
        %v6459 = vunpack.c.l.b16 %v6388
        %v6460 = vunpack.c.l.b16 %v6389
        %v6461 = vunpack.c.l.b16 %v6390
        %v6462 = vunpack.c.l.b16 %v6391
        %v6463 = vpack.c.b16 %v6432, %v6431
        %v6464 = vpack.c.b16 %v6434, %v6433
        %v6465 = vpack.c.b16 %v6436, %v6435
        %v6466 = vpack.c.b16 %v6438, %v6437
        %v6467 = vpack.c.b16 %v6440, %v6439
        %v6468 = vpack.c.b16 %v6442, %v6441
        %v6469 = vpack.c.b16 %v6444, %v6443
        %v6470 = vpack.c.b16 %v6446, %v6445
        %v6471 = vpack.c.b16 %v6448, %v6447
        %v6472 = vpack.c.b16 %v6450, %v6449
        %v6473 = vpack.c.b16 %v6452, %v6451
        %v6474 = vpack.c.b16 %v6454, %v6453
        %v6475 = vpack.c.b16 %v6456, %v6455
        %v6476 = vpack.c.b16 %v6458, %v6457
        %v6477 = vpack.c.b16 %v6460, %v6459
        %v6478 = vpack.c.b16 %v6462, %v6461
        %6495 = vmatprep.subr.bf16.mxu0 0
        %6496 = vmatpush1.bf16.msra.mxu0 %v6463
        %6497 = vmatprep.subr.bf16.mxu0 0
        %6498 = vmatpush1.bf16.msra.mxu0 %v6464
        %6499 = vmatprep.subr.bf16.mxu0 0
        %6500 = vmatpush1.bf16.msra.mxu0 %v6465
        %6501 = vmatprep.subr.bf16.mxu0 0
        %6502 = vmatpush1.bf16.msra.mxu0 %v6466
        %6503 = vmatprep.subr.bf16.mxu0 0
        %6504 = vmatpush1.bf16.msra.mxu0 %v6467
        %6505 = vmatprep.subr.bf16.mxu0 0
        %6506 = vmatpush1.bf16.msra.mxu0 %v6468
        %6507 = vmatprep.subr.bf16.mxu0 0
        %6508 = vmatpush1.bf16.msra.mxu0 %v6469
        %6509 = vmatprep.subr.bf16.mxu0 0
        %6510 = vmatpush1.bf16.msra.mxu0 %v6470
        %6511 = vmatprep.subr.bf16.mxu0 0
        %6512 = vmatpush1.bf16.msra.mxu0 %v6471
        %6513 = vmatprep.subr.bf16.mxu0 0
        %6514 = vmatpush1.bf16.msra.mxu0 %v6472
        %6515 = vmatprep.subr.bf16.mxu0 0
        %6516 = vmatpush1.bf16.msra.mxu0 %v6473
        %6517 = vmatprep.subr.bf16.mxu0 0
        %6518 = vmatpush1.bf16.msra.mxu0 %v6474
        %6519 = vmatprep.subr.bf16.mxu0 0
        %6520 = vmatpush1.bf16.msra.mxu0 %v6475
        %6521 = vmatprep.subr.bf16.mxu0 0
        %6522 = vmatpush1.bf16.msra.mxu0 %v6476
        %6523 = vmatprep.subr.bf16.mxu0 0
        %6524 = vmatpush1.bf16.msra.mxu0 %v6477
        %6525 = vmatprep.subr.bf16.mxu0 0
        %6526 = vmatpush1.bf16.msra.mxu0 %v6478
        %6527 = vmatprep.mubr.bf16.mxu0 %v6359
        %6528 = vmatmul.mubr.bf16.gmra.mrb[0].mxu0 %v6358
        %v6529 = vpop.f32.mrb[0].mxu0
        %v6530 = vadd.f32 %v6397, %v6529
        %v6531 = vpop.f32.mrb[0].mxu0
        %v6532 = vpop.f32.mrb[0].mxu0
        %v6533 = vadd.f32 %v6397, %v6532
        %v6534 = vpop.f32.mrb[0].mxu0
        %6535 = vdwg.mxu0
        %v6536 = vmax.f32 %v6530, 0.0
        %v6537 = vmax.f32 %v6533, 0.0
        %v6538 = vpack.c.bf16 %v6537, %v6536
        %v6539 = vld [vmem:[#allocation20] sm:$0xf]
        %v6540 = vld [vmem:[#allocation20 + $0x4] sm:$0xf]
        %v6541 = vld [vmem:[#allocation20 + $0x8] sm:$0xf]
        %v6542 = vld [vmem:[#allocation20 + $0xc] sm:$0xf]
        %v6543 = vld [vmem:[#allocation20 + $0x10] sm:$0xf]
        %v6544 = vld [vmem:[#allocation20 + $0x14] sm:$0xf]
        %v6545 = vld [vmem:[#allocation20 + $0x18] sm:$0xf]
        %v6546 = vld [vmem:[#allocation20 + $0x1c] sm:$0xf]
        %v6547 = vld [vmem:[#allocation20 + $0x20] sm:$0xf]
        %v6548 = vld [vmem:[#allocation20 + $0x24] sm:$0xf]
        %v6549 = vld [vmem:[#allocation20 + $0x28] sm:$0xf]
        %v6550 = vld [vmem:[#allocation20 + $0x2c] sm:$0xf]
        %v6551 = vld [vmem:[#allocation20 + $0x30] sm:$0xf]
        %v6552 = vld [vmem:[#allocation20 + $0x34] sm:$0xf]
        %v6553 = vld [vmem:[#allocation20 + $0x38] sm:$0xf]
        %v6554 = vld [vmem:[#allocation20 + $0x3c] sm:$0xf]
        %v6555 = vld [vmem:[#allocation22] sm:$0x1]
        %v6557 = vlaneseq
        %v6558 = vshrl.u32 %v6557, 7
        %v6559 = vsub.s32 0, %v6558
        %v6560 = vrot.slane %v6555, %v6559
        %v6578 = vunpack.c.l.b16 %v6539
        %v6579 = vunpack.c.l.b16 %v6540
        %v6580 = vunpack.c.l.b16 %v6541
        %v6581 = vunpack.c.l.b16 %v6542
        %v6582 = vunpack.c.l.b16 %v6543
        %v6583 = vunpack.c.l.b16 %v6544
        %v6584 = vunpack.c.l.b16 %v6545
        %v6585 = vunpack.c.l.b16 %v6546
        %v6586 = vunpack.c.l.b16 %v6547
        %v6587 = vunpack.c.l.b16 %v6548
        %v6588 = vunpack.c.l.b16 %v6549
        %v6589 = vunpack.c.l.b16 %v6550
        %v6590 = vunpack.c.l.b16 %v6551
        %v6591 = vunpack.c.l.b16 %v6552
        %v6592 = vunpack.c.l.b16 %v6553
        %v6593 = vunpack.c.l.b16 %v6554
        %v6594 = vpack.c.b16 %v6579, %v6578
        %v6595 = vpack.c.b16 %v6581, %v6580
        %v6596 = vpack.c.b16 %v6583, %v6582
        %v6597 = vpack.c.b16 %v6585, %v6584
        %v6598 = vpack.c.b16 %v6587, %v6586
        %v6599 = vpack.c.b16 %v6589, %v6588
        %v6600 = vpack.c.b16 %v6591, %v6590
        %v6601 = vpack.c.b16 %v6593, %v6592
        %6610 = vmatprep.subr.bf16.mxu0 0
        %6611 = vmatpush1.bf16.msra.mxu0 %v6594
        %6612 = vmatprep.subr.bf16.mxu0 0
        %6613 = vmatpush1.bf16.msra.mxu0 %v6595
        %6614 = vmatprep.subr.bf16.mxu0 0
        %6615 = vmatpush1.bf16.msra.mxu0 %v6596
        %6616 = vmatprep.subr.bf16.mxu0 0
        %6617 = vmatpush1.bf16.msra.mxu0 %v6597
        %6618 = vmatprep.subr.bf16.mxu0 0
        %6619 = vmatpush1.bf16.msra.mxu0 %v6598
        %6620 = vmatprep.subr.bf16.mxu0 0
        %6621 = vmatpush1.bf16.msra.mxu0 %v6599
        %6622 = vmatprep.subr.bf16.mxu0 0
        %6623 = vmatpush1.bf16.msra.mxu0 %v6600
        %6624 = vmatprep.subr.bf16.mxu0 0
        %6625 = vmatpush1.bf16.msra.mxu0 %v6601
        %6626 = vmatprep.subr.bf16.mxu0 0
        %6627 = vmatpush1.bf16.msra.mxu0 0
        %6628 = vmatprep.subr.bf16.mxu0 0
        %6629 = vmatpush1.bf16.msra.mxu0 0
        %6630 = vmatprep.subr.bf16.mxu0 0
        %6631 = vmatpush1.bf16.msra.mxu0 0
        %6632 = vmatprep.subr.bf16.mxu0 0
        %6633 = vmatpush1.bf16.msra.mxu0 0
        %6634 = vmatprep.subr.bf16.mxu0 0
        %6635 = vmatpush1.bf16.msra.mxu0 0
        %6636 = vmatprep.subr.bf16.mxu0 0
        %6637 = vmatpush1.bf16.msra.mxu0 0
        %6638 = vmatprep.subr.bf16.mxu0 0
        %6639 = vmatpush1.bf16.msra.mxu0 0
        %6640 = vmatprep.subr.bf16.mxu0 0
        %6641 = vmatpush1.bf16.msra.mxu0 0
        %6642 = vmatprep.mubr.bf16.mxu0 0
        %6643 = vmatmul.mubr.bf16.gmra.mrb[0].mxu0 %v6538
        %v6644 = vpop.f32.mrb[0].mxu0
        %v6645 = vadd.f32 %v6560, %v6644
        %v6646 = vpop.f32.mrb[0].mxu0
        %v6647 = vpop.f32.mrb[0].mxu0
        %v6648 = vadd.f32 %v6560, %v6647
        %v6649 = vpop.f32.mrb[0].mxu0
        %6650 = vdwg.mxu0
        %6651 = vst [vmem:[%s649] sm:$0xff] %v6645
        %6652 = vst [vmem:[%s649 + $0x8] sm:$0xff] %v6648
        %s6653 = sand.u32 %s329, 1
        %s6654 = scalar_lea.sflag [#allocation4], %s6653
        %s6655 = sand.u32 %s329, 1
        %s6656 = smul.addr %s6655, 16
        %s6657 = scalar_lea.vmem [#allocation23], %s6656
        // Predicated region
        $region125: #{tpu_custom_call.1} parent=71 // pred_check
          %p6658 = pneg %p339
        $region126: #{tpu_custom_call.1} parent=71 // pred_check_branch
          %6660 = sbr.rel (%p6658) target = $region128
        $region127: #{tpu_custom_call.1} parent=71 // pred_region
          %s6661 = smul.u32 2, %s38
          %s6663 = ssub.s32 256, 256
          %6664 = vsyncadd %s6654, %s6663
          %s6665 = smul.addr %s6661, 128
          %s6666 = scalar_lea.hbm %s13, %s6665
          %s6667 = sshll.u32 %s6657, 4
          %s6668 = int_to_ptr.vmem [resolvable:$true] %s6667
          %6673 = dma.vmem_to_hbm [thread:$0]  %s6668, 256, %s6666, %s6654, 128, 128, 8
        $region128: #{tpu_custom_call.1} parent=71 // pred_fallthru
          _
      $region72: #{tpu_custom_call.1} parent=5 // pred_fallthru
        _
      %p6674 = scmp.le.s32.totalorder 2, %s33
      // Predicated region
      $region129: #{tpu_custom_call.1} parent=5 // pred_check
        %p6675 = pneg %p6674
      $region130: #{tpu_custom_call.1} parent=5 // pred_check_branch
        %6677 = sbr.rel (%p6675) target = $region132
      $region131: #{tpu_custom_call.1} parent=5 // pred_region
        %s6678 = ssub.s32 %s33, 2
        // Predicated region
        $region133: #{tpu_custom_call.1} parent=131 // pred_check
          %p6679 = pneg %p345
        $region134: #{tpu_custom_call.1} parent=131 // pred_check_branch
          %6681 = sbr.rel (%p6679) target = $region136
        $region135: #{tpu_custom_call.1} parent=131 // pred_region
          %s6682 = sand.u32 %s330, 1
          %s6683 = scalar_lea.sflag [#allocation4], %s6682
          %s6684 = sand.u32 %s330, 1
          %s6685 = smul.addr %s6684, 16
          %s6686 = scalar_lea.vmem [#allocation23], %s6685
          %6687 = dma.done %s6683, 256
        $region136: #{tpu_custom_call.1} parent=131 // pred_fallthru
          _
      $region132: #{tpu_custom_call.1} parent=5 // pred_fallthru
        _
    $region6: #{tpu_custom_call.1} parent=1 // loop_footer
      %s37 = sadd.s32 1, %s33
    $region7: #{tpu_custom_call.1} parent=1 // loop_footer_branch
      %32 = sbr.rel target = $region3
    $region8: #{tpu_custom_call.1} parent=1 // loop_exit
      _
    %6688 = vsyncpa [#allocation3], 1
    %s6689 = scalar_lea.sflag [#allocation3], 1
    %6690 = vsyncpa %s6689, 1
    %6691 = vsyncpa [#allocation6], 1
    %s6692 = scalar_lea.sflag [#allocation6], 1
    %6693 = vsyncpa %s6692, 1
    %6694 = vsyncpa [#allocation9], 1
    %6695 = vsyncpa [#allocation12], 1
    %6696 = vsyncpa [#allocation15], 1
    %6697 = vsyncpa [#allocation18], 1
    %6698 = vsyncpa [#allocation21], 1
    %6699 = vsyncpa [#allocation4], 1
    %s6700 = scalar_lea.sflag [#allocation4], 1
    %6701 = vsyncpa %s6700, 1

</llo_original>
